<compile_context>
chip_gen: v6e
topology: v6e:2x2x1
jax: 0.10.0
libtpu: 0.0.40
codegen_flags: <defaults>
</compile_context>

<pallas_src>
import jax
import jax.numpy as jnp
from jax.experimental import pallas as pl
from jax.experimental.pallas import tpu as pltpu

PATCH = 14
D_MODEL = 768                  # dino ViT-B/14 feature width
PD = 3 * PATCH * PATCH         # 588 raw patch-pixel features
PD_PAD = 640                   # padded to a multiple of 128 (lane-dense MXU K dim)
H1 = 512
H2 = 128
C_REAL = 2                     # real class count
C_PAD = 128                    # padded class dim for a lane-dense final store
B_TILE = 256                   # max batch rows per grid step


def _round_up(x, m):
    return ((x + m - 1) // m) * m


# ----------------------------------------------------------------------------
# Fused kernel: patch-embed(mod1+mod2, one matmul) + concat-folded cls_head
# ----------------------------------------------------------------------------
def _fused_kernel(ps_ref, wp_ref, w1a_ref, w1b_ref, b1_ref,
                  w2_ref, b2_ref, w3_ref, b3_ref, o_ref):
    tb = o_ref.shape[0]
    ps = ps_ref[0]                     # [2*tb, PD_PAD] bf16 (mod1 rows, then mod2 rows)

    # Stand-in embedding for BOTH modalities in one MXU push; bias folded in via
    # the 1.0 lane at column PD (row PD of wp holds b_patch).
    f = jnp.dot(ps, wp_ref[...], preferred_element_type=jnp.float32)   # [2*tb, 768] f32
    f1 = f[:tb].astype(jnp.bfloat16)
    f2 = f[tb:].astype(jnp.bfloat16)

    # cls_head layer 1: concat([f1, f2], 1) @ W1 == f1 @ W1_top + f2 @ W1_bot
    h1 = (jnp.dot(f1, w1a_ref[...], preferred_element_type=jnp.float32)
          + jnp.dot(f2, w1b_ref[...], preferred_element_type=jnp.float32)
          + b1_ref[...])
    h1 = jnp.maximum(h1, 0.0).astype(jnp.bfloat16)

    # cls_head layer 2
    h2 = jnp.dot(h1, w2_ref[...], preferred_element_type=jnp.float32) + b2_ref[...]
    h2 = jnp.maximum(h2, 0.0).astype(jnp.bfloat16)

    # cls_head layer 3 (columns padded to 128 lanes; wrapper slices the 2 classes)
    o_ref[...] = jnp.dot(h2, w3_ref[...], preferred_element_type=jnp.float32) + b3_ref[...]


def _const_spec(shape):
    n = len(shape)
    return pl.BlockSpec(shape, lambda i, _n=n: (0,) * _n)


def fused_forward(p_tiles, params, tb):
    g = p_tiles.shape[0]
    m = g * tb
    flops = 2 * m * (2 * PD_PAD * D_MODEL + 2 * D_MODEL * H1 + H1 * H2 + H2 * C_PAD)
    bytes_accessed = (
        p_tiles.size * 2
        + (PD_PAD * D_MODEL + 2 * D_MODEL * H1 + H1 * H2 + H2 * C_PAD) * 2  # bf16 weights
        + (H1 + H2 + C_PAD) * 4                                             # f32 biases
        + m * C_PAD * 4)                                                     # f32 output
    return pl.pallas_call(
        _fused_kernel,
        out_shape=jax.ShapeDtypeStruct((m, C_PAD), jnp.float32),
        grid=(g,),
        in_specs=[
            pl.BlockSpec((1, 2 * tb, PD_PAD), lambda i: (i, 0, 0)),
            _const_spec((PD_PAD, D_MODEL)),
            _const_spec((D_MODEL, H1)),
            _const_spec((D_MODEL, H1)),
            _const_spec((1, H1)),
            _const_spec((H1, H2)),
            _const_spec((1, H2)),
            _const_spec((H2, C_PAD)),
            _const_spec((1, C_PAD)),
        ],
        out_specs=pl.BlockSpec((tb, C_PAD), lambda i: (i, 0)),
        compiler_params=pltpu.CompilerParams(
            dimension_semantics=("parallel",),
            vmem_limit_bytes=32 << 20),
        cost_estimate=pl.CostEstimate(flops=flops, transcendentals=0,
                                      bytes_accessed=bytes_accessed),
    )(p_tiles,
      params["w_patch"],
      params["w1_top"], params["w1_bot"], params["b1"],
      params["w2"], params["b2"],
      params["w3"], params["b3"])


# ----------------------------------------------------------------------------
# Glue: mean-pool the 14x14 patches (reshape + reduction only), channel-major
# feature order, zero-padded to PD_PAD lanes, bias lane set to 1.0, cast to bf16.
# ----------------------------------------------------------------------------
def mean_patch_pool(x):
    B, C, H, W = x.shape
    Hp, Wp = H // PATCH, W // PATCH
    x = x.astype(jnp.float32).reshape(B, C, Hp, PATCH, Wp, PATCH)
    pooled = jnp.mean(x, axis=(2, 4))                     # [B, C, 14, 14]
    pooled = pooled.reshape(B, PD)                        # [B, 588]
    pooled = jnp.pad(pooled, ((0, 0), (0, PD_PAD - PD)))  # [B, 640]
    pooled = pooled.at[:, PD].set(1.0)                    # bias lane (b_patch folded in)
    return pooled.astype(jnp.bfloat16)


# ----------------------------------------------------------------------------
# Full forward (mode='t1t2')
# ----------------------------------------------------------------------------
def single_image_classifier_forward(params, modality_1, modality_2):
    assert modality_1.shape[1] == modality_2.shape[1], \
        "modality_1 channels must equal modality_2 channels"
    B = modality_1.shape[0]
    p1 = mean_patch_pool(modality_1)          # [B, PD_PAD] bf16
    p2 = mean_patch_pool(modality_2)

    m = _round_up(B, 8)                       # pad batch to full sublane tiles
    tb = min(m, B_TILE)
    m = _round_up(m, tb)
    pad = ((0, m - B), (0, 0))
    p1 = jnp.pad(p1, pad)
    p2 = jnp.pad(p2, pad)
    g = m // tb
    # Per grid tile: stack mod1 rows then mod2 rows along the sublane axis.
    p_tiles = jnp.concatenate(
        [p1.reshape(g, tb, PD_PAD), p2.reshape(g, tb, PD_PAD)], axis=1)  # [g, 2*tb, 640]

    out = fused_forward(p_tiles, params, tb)
    return out[:B, :C_REAL]


def reference_forward(params, modality_1, modality_2):
    # Pure-JAX f32 reference of the same math (same bf16 weight values).
    p1 = mean_patch_pool(modality_1).astype(jnp.float32)
    p2 = mean_patch_pool(modality_2).astype(jnp.float32)
    wp = params["w_patch"].astype(jnp.float32)
    f1 = p1 @ wp
    f2 = p2 @ wp
    h1 = jnp.maximum(f1 @ params["w1_top"].astype(jnp.float32)
                     + f2 @ params["w1_bot"].astype(jnp.float32) + params["b1"], 0.0)
    h2 = jnp.maximum(h1 @ params["w2"].astype(jnp.float32) + params["b2"], 0.0)
    return (h2 @ params["w3"].astype(jnp.float32) + params["b3"])[:, :C_REAL]


def init_params(key):
    ks = jax.random.split(key, 8)
    scale = lambda fan_in: 1.0 / jnp.sqrt(jnp.float32(fan_in))

    # Stand-in dino patch embedding; row PD holds b_patch, rows > PD are zero padding.
    w_patch = jax.random.normal(ks[0], (PD, D_MODEL), jnp.float32) * scale(PD)
    b_patch = jax.random.normal(ks[1], (1, D_MODEL), jnp.float32) * 0.01
    w_patch = jnp.concatenate(
        [w_patch, b_patch, jnp.zeros((PD_PAD - PD - 1, D_MODEL), jnp.float32)], axis=0)

    # cls_head: Linear(1536,512) split into two 768-row halves (concat folded in).
    w1 = jax.random.normal(ks[2], (2 * D_MODEL, H1), jnp.float32) * scale(2 * D_MODEL)
    b1 = jax.random.normal(ks[3], (1, H1), jnp.float32) * 0.01
    w2 = jax.random.normal(ks[4], (H1, H2), jnp.float32) * scale(H1)
    b2 = jax.random.normal(ks[5], (1, H2), jnp.float32) * 0.01
    # Final Linear(128, 2) padded to 128 output lanes (extra columns are zero).
    w3 = jax.random.normal(ks[6], (H2, C_REAL), jnp.float32) * scale(H2)
    b3 = jax.random.normal(ks[7], (1, C_REAL), jnp.float32) * 0.01

    return {
        "w_patch": w_patch.astype(jnp.bfloat16),
        "w1_top": w1[:D_MODEL].astype(jnp.bfloat16),
        "w1_bot": w1[D_MODEL:].astype(jnp.bfloat16),
        "b1": b1,
        "w2": w2.astype(jnp.bfloat16),
        "b2": b2,
        "w3": jnp.pad(w3, ((0, 0), (0, C_PAD - C_REAL))).astype(jnp.bfloat16),
        "b3": jnp.pad(b3, ((0, 0), (0, C_PAD - C_REAL))),
    }


if __name__ == "__main__":
    key = jax.random.PRNGKey(0)
    k_p, k_x1, k_x2 = jax.random.split(key, 3)

    params = init_params(k_p)

    B, C, H, W = 2, 3, 28, 28  # H, W divisible by the dino patch size (14)
    modality_1 = jax.random.normal(k_x1, (B, C, H, W), jnp.float32)
    modality_2 = jax.random.normal(k_x2, (B, C, H, W), jnp.float32)

    cls_pred = single_image_classifier_forward(params, modality_1, modality_2)
    cls_pred = jax.block_until_ready(cls_pred)

    assert cls_pred.shape == (B, C_REAL), cls_pred.shape

    ref = reference_forward(params, modality_1, modality_2)
    assert jnp.allclose(cls_pred, ref, rtol=3e-2, atol=3e-2), \
        (cls_pred, ref)

    print("KERNEL_OK")
</pallas_src>

<mosaic_0001>
module attributes {stable_mosaic.version = 11 : i64} {
  func.func @_fused_kernel(%arg0: i32, %arg1: memref<1x16x640xbf16, #tpu.memory_space<vmem>>, %arg2: memref<640x768xbf16, #tpu.memory_space<vmem>>, %arg3: memref<768x512xbf16, #tpu.memory_space<vmem>>, %arg4: memref<768x512xbf16, #tpu.memory_space<vmem>>, %arg5: memref<1x512xf32, #tpu.memory_space<vmem>>, %arg6: memref<512x128xbf16, #tpu.memory_space<vmem>>, %arg7: memref<1x128xf32, #tpu.memory_space<vmem>>, %arg8: memref<128x128xbf16, #tpu.memory_space<vmem>>, %arg9: memref<1x128xf32, #tpu.memory_space<vmem>>, %arg10: memref<8x128xf32, #tpu.memory_space<vmem>>) attributes {dimension_semantics = [#tpu.dimension_semantics<parallel>], iteration_bounds = array<i64: 1>, scalar_prefetch = 0 : i64, scratch_operands = 0 : i64, tpu.core_type = #tpu.core_type<tc>, window_params = [{transform_indices = @transform_0, window_bounds = array<i64: 1, 16, 640>}, {pipeline_mode = #tpu.pipeline_mode<synchronous>, transform_indices = @transform_1, window_bounds = array<i64: 640, 768>}, {pipeline_mode = #tpu.pipeline_mode<synchronous>, transform_indices = @transform_2, window_bounds = array<i64: 768, 512>}, {pipeline_mode = #tpu.pipeline_mode<synchronous>, transform_indices = @transform_3, window_bounds = array<i64: 768, 512>}, {pipeline_mode = #tpu.pipeline_mode<synchronous>, transform_indices = @transform_4, window_bounds = array<i64: 1, 512>}, {pipeline_mode = #tpu.pipeline_mode<synchronous>, transform_indices = @transform_5, window_bounds = array<i64: 512, 128>}, {pipeline_mode = #tpu.pipeline_mode<synchronous>, transform_indices = @transform_6, window_bounds = array<i64: 1, 128>}, {pipeline_mode = #tpu.pipeline_mode<synchronous>, transform_indices = @transform_7, window_bounds = array<i64: 128, 128>}, {pipeline_mode = #tpu.pipeline_mode<synchronous>, transform_indices = @transform_8, window_bounds = array<i64: 1, 128>}, {transform_indices = @transform_9, window_bounds = array<i64: 8, 128>}]} {
    %c0 = arith.constant 0 : index
    %c0_0 = arith.constant 0 : index
    %c0_1 = arith.constant 0 : index
    %0 = vector.load %arg1[%c0, %c0_0, %c0_1] : memref<1x16x640xbf16, #tpu.memory_space<vmem>>, vector<1x16x640xbf16>
    %1 = vector.shape_cast %0 : vector<1x16x640xbf16> to vector<16x640xbf16>
    %c0_2 = arith.constant 0 : index
    %c0_3 = arith.constant 0 : index
    %2 = vector.load %arg2[%c0_2, %c0_3] : memref<640x768xbf16, #tpu.memory_space<vmem>>, vector<640x768xbf16>
    %cst = arith.constant dense<0.000000e+00> : vector<16x768xf32>
    %3 = tpu.matmul %1, %2, %cst {dimension_numbers = #tpu.dot_dimension_numbers<[1], [0], [0], [1], [0, 0, 1, 1], [], []>} : vector<16x640xbf16>, vector<640x768xbf16>, vector<16x768xf32> -> vector<16x768xf32>
    %4 = vector.extract_strided_slice %3 {offsets = [0, 0], sizes = [8, 768], strides = [1, 1]} : vector<16x768xf32> to vector<8x768xf32>
    %5 = arith.truncf %4 : vector<8x768xf32> to vector<8x768xbf16>
    %6 = vector.extract_strided_slice %3 {offsets = [8, 0], sizes = [8, 768], strides = [1, 1]} : vector<16x768xf32> to vector<8x768xf32>
    %7 = arith.truncf %6 : vector<8x768xf32> to vector<8x768xbf16>
    %c0_4 = arith.constant 0 : index
    %c0_5 = arith.constant 0 : index
    %8 = vector.load %arg3[%c0_4, %c0_5] : memref<768x512xbf16, #tpu.memory_space<vmem>>, vector<768x512xbf16>
    %cst_6 = arith.constant dense<0.000000e+00> : vector<8x512xf32>
    %9 = tpu.matmul %5, %8, %cst_6 {dimension_numbers = #tpu.dot_dimension_numbers<[1], [0], [0], [1], [0, 0, 1, 1], [], []>} : vector<8x768xbf16>, vector<768x512xbf16>, vector<8x512xf32> -> vector<8x512xf32>
    %c0_7 = arith.constant 0 : index
    %c0_8 = arith.constant 0 : index
    %10 = vector.load %arg4[%c0_7, %c0_8] : memref<768x512xbf16, #tpu.memory_space<vmem>>, vector<768x512xbf16>
    %cst_9 = arith.constant dense<0.000000e+00> : vector<8x512xf32>
    %11 = tpu.matmul %7, %10, %cst_9 {dimension_numbers = #tpu.dot_dimension_numbers<[1], [0], [0], [1], [0, 0, 1, 1], [], []>} : vector<8x768xbf16>, vector<768x512xbf16>, vector<8x512xf32> -> vector<8x512xf32>
    %12 = arith.addf %9, %11 : vector<8x512xf32>
    %c0_10 = arith.constant 0 : index
    %c0_11 = arith.constant 0 : index
    %13 = vector.load %arg5[%c0_10, %c0_11] : memref<1x512xf32, #tpu.memory_space<vmem>>, vector<1x512xf32>
    %14 = vector.broadcast %13 : vector<1x512xf32> to vector<8x512xf32>
    %15 = arith.addf %12, %14 : vector<8x512xf32>
    %cst_12 = arith.constant 0.000000e+00 : f32
    %16 = vector.broadcast %cst_12 : f32 to vector<8x512xf32>
    %17 = arith.maximumf %15, %16 : vector<8x512xf32>
    %18 = arith.truncf %17 : vector<8x512xf32> to vector<8x512xbf16>
    %c0_13 = arith.constant 0 : index
    %c0_14 = arith.constant 0 : index
    %19 = vector.load %arg6[%c0_13, %c0_14] : memref<512x128xbf16, #tpu.memory_space<vmem>>, vector<512x128xbf16>
    %cst_15 = arith.constant dense<0.000000e+00> : vector<8x128xf32>
    %20 = tpu.matmul %18, %19, %cst_15 {dimension_numbers = #tpu.dot_dimension_numbers<[1], [0], [0], [1], [0, 0, 1, 1], [], []>} : vector<8x512xbf16>, vector<512x128xbf16>, vector<8x128xf32> -> vector<8x128xf32>
    %c0_16 = arith.constant 0 : index
    %c0_17 = arith.constant 0 : index
    %21 = vector.load %arg7[%c0_16, %c0_17] : memref<1x128xf32, #tpu.memory_space<vmem>>, vector<1x128xf32>
    %22 = vector.broadcast %21 : vector<1x128xf32> to vector<8x128xf32>
    %23 = arith.addf %20, %22 : vector<8x128xf32>
    %cst_18 = arith.constant 0.000000e+00 : f32
    %24 = vector.broadcast %cst_18 : f32 to vector<8x128xf32>
    %25 = arith.maximumf %23, %24 : vector<8x128xf32>
    %26 = arith.truncf %25 : vector<8x128xf32> to vector<8x128xbf16>
    %c0_19 = arith.constant 0 : index
    %c0_20 = arith.constant 0 : index
    %27 = vector.load %arg8[%c0_19, %c0_20] : memref<128x128xbf16, #tpu.memory_space<vmem>>, vector<128x128xbf16>
    %cst_21 = arith.constant dense<0.000000e+00> : vector<8x128xf32>
    %28 = tpu.matmul %26, %27, %cst_21 {dimension_numbers = #tpu.dot_dimension_numbers<[1], [0], [0], [1], [0, 0, 1, 1], [], []>} : vector<8x128xbf16>, vector<128x128xbf16>, vector<8x128xf32> -> vector<8x128xf32>
    %c0_22 = arith.constant 0 : index
    %c0_23 = arith.constant 0 : index
    %29 = vector.load %arg9[%c0_22, %c0_23] : memref<1x128xf32, #tpu.memory_space<vmem>>, vector<1x128xf32>
    %30 = vector.broadcast %29 : vector<1x128xf32> to vector<8x128xf32>
    %31 = arith.addf %28, %30 : vector<8x128xf32>
    %c0_24 = arith.constant 0 : index
    %c0_25 = arith.constant 0 : index
    %32 = vector.load %arg10[%c0_24, %c0_25] : memref<8x128xf32, #tpu.memory_space<vmem>>, vector<8x128xf32>
    tpu.vector_store %arg10[%c0_24, %c0_25], %31 {strides = array<i32>} : memref<8x128xf32, #tpu.memory_space<vmem>>, vector<8x128xf32>,
    return
  }
  func.func @transform_0(%arg0: i32) -> (i32, i32, i32) {
    %c0_i32 = arith.constant 0 : i32
    %c0_i32_0 = arith.constant 0 : i32
    %c0_i32_1 = arith.constant 0 : i32
    return %arg0, %c0_i32, %c0_i32_0 : i32, i32, i32
  }
  func.func @transform_1(%arg0: i32) -> (i32, i32) {
    %c0_i32 = arith.constant 0 : i32
    %c0_i32_0 = arith.constant 0 : i32
    %c0_i32_1 = arith.constant 0 : i32
    return %c0_i32, %c0_i32_0 : i32, i32
  }
  func.func @transform_2(%arg0: i32) -> (i32, i32) {
    %c0_i32 = arith.constant 0 : i32
    %c0_i32_0 = arith.constant 0 : i32
    %c0_i32_1 = arith.constant 0 : i32
    return %c0_i32, %c0_i32_0 : i32, i32
  }
  func.func @transform_3(%arg0: i32) -> (i32, i32) {
    %c0_i32 = arith.constant 0 : i32
    %c0_i32_0 = arith.constant 0 : i32
    %c0_i32_1 = arith.constant 0 : i32
    return %c0_i32, %c0_i32_0 : i32, i32
  }
  func.func @transform_4(%arg0: i32) -> (i32, i32) {
    %c0_i32 = arith.constant 0 : i32
    %c0_i32_0 = arith.constant 0 : i32
    %c0_i32_1 = arith.constant 0 : i32
    return %c0_i32, %c0_i32_0 : i32, i32
  }
  func.func @transform_5(%arg0: i32) -> (i32, i32) {
    %c0_i32 = arith.constant 0 : i32
    %c0_i32_0 = arith.constant 0 : i32
    %c0_i32_1 = arith.constant 0 : i32
    return %c0_i32, %c0_i32_0 : i32, i32
  }
  func.func @transform_6(%arg0: i32) -> (i32, i32) {
    %c0_i32 = arith.constant 0 : i32
    %c0_i32_0 = arith.constant 0 : i32
    %c0_i32_1 = arith.constant 0 : i32
    return %c0_i32, %c0_i32_0 : i32, i32
  }
  func.func @transform_7(%arg0: i32) -> (i32, i32) {
    %c0_i32 = arith.constant 0 : i32
    %c0_i32_0 = arith.constant 0 : i32
    %c0_i32_1 = arith.constant 0 : i32
    return %c0_i32, %c0_i32_0 : i32, i32
  }
  func.func @transform_8(%arg0: i32) -> (i32, i32) {
    %c0_i32 = arith.constant 0 : i32
    %c0_i32_0 = arith.constant 0 : i32
    %c0_i32_1 = arith.constant 0 : i32
    return %c0_i32, %c0_i32_0 : i32, i32
  }
  func.func @transform_9(%arg0: i32) -> (i32, i32) {
    %c0_i32 = arith.constant 0 : i32
    %c0_i32_0 = arith.constant 0 : i32
    return %arg0, %c0_i32 : i32, i32
  }
}

</mosaic_0001>

<llo_original>
// kernel: tpu_custom_call.1
$region0: #{tpu_custom_call.1}
  #allocation0 [shape = 'u32[]', space=smem, size = 0x4, offset = 0x4, fixed_abs, tag = 'smem constant byte address 0x4 - core index']
  #allocation1 [shape = 'u32[144,128]{1,0:T(1,128)}', space=vmem, size = 0x12000, scoped, tag = 'internal scratch']
  %s0 = inlined_call_operand.hbm [shape: bf16[1,16,640], index: 0, kind: input, shape index: {}]
  %s1 = inlined_call_operand.hbm [shape: bf16[640,768], index: 1, kind: input, shape index: {}]
  %s2 = inlined_call_operand.hbm [shape: bf16[768,512], index: 2, kind: input, shape index: {}]
  %s3 = inlined_call_operand.hbm [shape: bf16[768,512], index: 3, kind: input, shape index: {}]
  %s4 = inlined_call_operand.vmem [shape: f32[1,512], index: 4, kind: input, shape index: {}]
  %s5 = inlined_call_operand.hbm [shape: bf16[512,128], index: 5, kind: input, shape index: {}]
  %s6 = inlined_call_operand.vmem [shape: f32[1,128], index: 6, kind: input, shape index: {}]
  %s7 = inlined_call_operand.hbm [shape: bf16[128,128], index: 7, kind: input, shape index: {}]
  %s8 = inlined_call_operand.vmem [shape: f32[1,128], index: 8, kind: input, shape index: {}]
  %s9 = inlined_call_operand.hbm [shape: f32[8,128], index: 9, kind: output, shape index: {}]
  %s10 = sld [smem:[#allocation0]]
  $region70: #{tpu_custom_call.1} parent=0
    _
  %s12 = ssub.s32 1, %s10
  %s13 = scalar_select 0, %s12, %s10
  $region1: #{tpu_custom_call.1} parent=0
    #allocation2 [shape = 'u8[20480]{0}', space=vmem, size = 0x5000, scoped, tag = 'input window, operand 0, single buffered']
    #allocation3 [shape = 's32[1]{0}', space=sflag, size = 0x4, scoped, tag = 'scoped memory for tpu_custom_call.1']
    #allocation4 [shape = 's32[1]{0}', space=sflag, size = 0x4, scoped, tag = 'scoped memory for tpu_custom_call.1']
    #allocation5 [shape = 'u8[983040]{0}', space=vmem, size = 0xf0000, scoped, tag = 'input window, operand 1, single buffered']
    #allocation6 [shape = 's32[1]{0}', space=sflag, size = 0x4, scoped, tag = 'scoped memory for tpu_custom_call.1']
    #allocation7 [shape = 'u8[786432]{0}', space=vmem, size = 0xc0000, scoped, tag = 'input window, operand 2, single buffered']
    #allocation8 [shape = 'u8[786432]{0}', space=vmem, size = 0xc0000, scoped, tag = 'input window, operand 3, single buffered']
    #allocation9 [shape = 's32[1]{0}', space=sflag, size = 0x4, scoped, tag = 'scoped memory for tpu_custom_call.1']
    #allocation10 [shape = 'u8[131072]{0}', space=vmem, size = 0x20000, scoped, tag = 'input window, operand 5, single buffered']
    #allocation11 [shape = 'u8[32768]{0}', space=vmem, size = 0x8000, scoped, tag = 'input window, operand 7, single buffered']
    #allocation12 [shape = 's32[1]{0}', space=sflag, size = 0x4, scoped, tag = 'scoped memory for tpu_custom_call.1']
    #allocation13 [shape = 'u8[4096]{0}', space=vmem, size = 0x1000, scoped, tag = 'output window, operand 0, single buffered']
    %14 = vsyncpa [#allocation3], 0
    %15 = vsyncpa [#allocation6], 0
    %16 = vsyncpa [#allocation9], 0
    %17 = vsyncpa [#allocation12], 0
    %18 = vsyncpa [#allocation4], 0
    // Predicated region
    $region2: #{tpu_custom_call.1} parent=1 // pred_check
      _
    $region3: #{tpu_custom_call.1} parent=1 // pred_check_branch
      %20 = sbr.rel (0) target = $region5
    $region4: #{tpu_custom_call.1} parent=1 // pred_region
      %s22 = ssub.s32 640, 640
      %23 = vsyncadd [#allocation3], %s22
      %s24 = sshll.u32 [#allocation2], 4
      %s25 = int_to_ptr.vmem [resolvable:$true] %s24
      %30 = dma.hbm_to_vmem [thread:$0]  %s0, 640, %s25, [#allocation3], 320, 320, 20
    $region5: #{tpu_custom_call.1} parent=1 // pred_fallthru
      _
    // Predicated region
    $region6: #{tpu_custom_call.1} parent=1 // pred_check
      _
    $region7: #{tpu_custom_call.1} parent=1 // pred_check_branch
      %32 = sbr.rel (0) target = $region9
    $region8: #{tpu_custom_call.1} parent=1 // pred_region
      %s34 = ssub.s32 30720, 30720
      %35 = vsyncadd [#allocation6], %s34
      %s36 = sshll.u32 [#allocation5], 4
      %s37 = int_to_ptr.vmem [resolvable:$true] %s36
      %42 = dma.hbm_to_vmem [thread:$0]  %s1, 30720, %s37, [#allocation6], 384, 384, 24
    $region9: #{tpu_custom_call.1} parent=1 // pred_fallthru
      _
    // Predicated region
    $region10: #{tpu_custom_call.1} parent=1 // pred_check
      _
    $region11: #{tpu_custom_call.1} parent=1 // pred_check_branch
      %44 = sbr.rel (0) target = $region13
    $region12: #{tpu_custom_call.1} parent=1 // pred_region
      %s46 = ssub.s32 24576, 24576
      %47 = vsyncadd [#allocation6], %s46
      %s48 = sshll.u32 [#allocation7], 4
      %s49 = int_to_ptr.vmem [resolvable:$true] %s48
      %54 = dma.hbm_to_vmem [thread:$0]  %s2, 24576, %s49, [#allocation6], 256, 256, 16
    $region13: #{tpu_custom_call.1} parent=1 // pred_fallthru
      _
    // Predicated region
    $region14: #{tpu_custom_call.1} parent=1 // pred_check
      _
    $region15: #{tpu_custom_call.1} parent=1 // pred_check_branch
      %56 = sbr.rel (0) target = $region17
    $region16: #{tpu_custom_call.1} parent=1 // pred_region
      %s58 = ssub.s32 24576, 24576
      %59 = vsyncadd [#allocation9], %s58
      %s60 = sshll.u32 [#allocation8], 4
      %s61 = int_to_ptr.vmem [resolvable:$true] %s60
      %66 = dma.hbm_to_vmem [thread:$0]  %s3, 24576, %s61, [#allocation9], 256, 256, 16
    $region17: #{tpu_custom_call.1} parent=1 // pred_fallthru
      _
    // Predicated region
    $region18: #{tpu_custom_call.1} parent=1 // pred_check
      _
    $region19: #{tpu_custom_call.1} parent=1 // pred_check_branch
      %68 = sbr.rel (0) target = $region21
    $region20: #{tpu_custom_call.1} parent=1 // pred_region
      _
    $region21: #{tpu_custom_call.1} parent=1 // pred_fallthru
      _
    // Predicated region
    $region22: #{tpu_custom_call.1} parent=1 // pred_check
      _
    $region23: #{tpu_custom_call.1} parent=1 // pred_check_branch
      %70 = sbr.rel (0) target = $region25
    $region24: #{tpu_custom_call.1} parent=1 // pred_region
      %s72 = ssub.s32 4096, 4096
      %73 = vsyncadd [#allocation9], %s72
      %s74 = sshll.u32 [#allocation10], 4
      %s75 = int_to_ptr.vmem [resolvable:$true] %s74
      %80 = dma.hbm_to_vmem [thread:$0]  %s5, 4096, %s75, [#allocation9], 64, 64, 4
    $region25: #{tpu_custom_call.1} parent=1 // pred_fallthru
      _
    // Predicated region
    $region26: #{tpu_custom_call.1} parent=1 // pred_check
      _
    $region27: #{tpu_custom_call.1} parent=1 // pred_check_branch
      %82 = sbr.rel (0) target = $region29
    $region28: #{tpu_custom_call.1} parent=1 // pred_region
      _
    $region29: #{tpu_custom_call.1} parent=1 // pred_fallthru
      _
    // Predicated region
    $region30: #{tpu_custom_call.1} parent=1 // pred_check
      _
    $region31: #{tpu_custom_call.1} parent=1 // pred_check_branch
      %84 = sbr.rel (0) target = $region33
    $region32: #{tpu_custom_call.1} parent=1 // pred_region
      %s86 = ssub.s32 1024, 1024
      %87 = vsyncadd [#allocation12], %s86
      %s88 = sshll.u32 [#allocation11], 4
      %s89 = int_to_ptr.vmem [resolvable:$true] %s88
      %94 = dma.hbm_to_vmem [thread:$0]  %s7, 1024, %s89, [#allocation12], 64, 64, 4
    $region33: #{tpu_custom_call.1} parent=1 // pred_fallthru
      _
    // Predicated region
    $region34: #{tpu_custom_call.1} parent=1 // pred_check
      _
    $region35: #{tpu_custom_call.1} parent=1 // pred_check_branch
      %96 = sbr.rel (0) target = $region37
    $region36: #{tpu_custom_call.1} parent=1 // pred_region
      _
    $region37: #{tpu_custom_call.1} parent=1 // pred_fallthru
      _
    // Predicated region
    $region38: #{tpu_custom_call.1} parent=1 // pred_check
      _
    $region39: #{tpu_custom_call.1} parent=1 // pred_check_branch
      %98 = sbr.rel (0) target = $region41
    $region40: #{tpu_custom_call.1} parent=1 // pred_region
      %99 = dma.done [#allocation3], 640
    $region41: #{tpu_custom_call.1} parent=1 // pred_fallthru
      _
    // Predicated region
    $region42: #{tpu_custom_call.1} parent=1 // pred_check
      _
    $region43: #{tpu_custom_call.1} parent=1 // pred_check_branch
      %101 = sbr.rel (0) target = $region45
    $region44: #{tpu_custom_call.1} parent=1 // pred_region
      %102 = dma.done [#allocation6], 30720
    $region45: #{tpu_custom_call.1} parent=1 // pred_fallthru
      _
    // Predicated region
    $region46: #{tpu_custom_call.1} parent=1 // pred_check
      _
    $region47: #{tpu_custom_call.1} parent=1 // pred_check_branch
      %104 = sbr.rel (0) target = $region49
    $region48: #{tpu_custom_call.1} parent=1 // pred_region
      %105 = dma.done [#allocation6], 24576
    $region49: #{tpu_custom_call.1} parent=1 // pred_fallthru
      _
    // Predicated region
    $region50: #{tpu_custom_call.1} parent=1 // pred_check
      _
    $region51: #{tpu_custom_call.1} parent=1 // pred_check_branch
      %107 = sbr.rel (0) target = $region53
    $region52: #{tpu_custom_call.1} parent=1 // pred_region
      %108 = dma.done [#allocation9], 24576
    $region53: #{tpu_custom_call.1} parent=1 // pred_fallthru
      _
    // Predicated region
    $region54: #{tpu_custom_call.1} parent=1 // pred_check
      _
    $region55: #{tpu_custom_call.1} parent=1 // pred_check_branch
      %110 = sbr.rel (0) target = $region57
    $region56: #{tpu_custom_call.1} parent=1 // pred_region
      %111 = dma.done [#allocation9], 4096
    $region57: #{tpu_custom_call.1} parent=1 // pred_fallthru
      _
    // Predicated region
    $region58: #{tpu_custom_call.1} parent=1 // pred_check
      _
    $region59: #{tpu_custom_call.1} parent=1 // pred_check_branch
      %113 = sbr.rel (0) target = $region61
    $region60: #{tpu_custom_call.1} parent=1 // pred_region
      %114 = dma.done [#allocation12], 1024
    $region61: #{tpu_custom_call.1} parent=1 // pred_fallthru
      _
    %v116 = vld [vmem:[#allocation2] sm:$0xff]
    %v117 = vld [vmem:[#allocation2 + $0x8] sm:$0xff]
    %v118 = vld [vmem:[#allocation2 + $0x10] sm:$0xf]
    %v119 = vld [vmem:[#allocation2 + $0x14] sm:$0xff]
    %v120 = vld [vmem:[#allocation2 + $0x1c] sm:$0xff]
    %v121 = vld [vmem:[#allocation2 + $0x24] sm:$0xf]
    %v122 = vld [vmem:[#allocation5] sm:$0xff]
    %v123 = vld [vmem:[#allocation5 + $0x8] sm:$0xff]
    %v124 = vld [vmem:[#allocation5 + $0x10] sm:$0xff]
    %v125 = vld [vmem:[#allocation5 + $0x18] sm:$0xff]
    %v126 = vld [vmem:[#allocation5 + $0x20] sm:$0xff]
    %v127 = vld [vmem:[#allocation5 + $0x28] sm:$0xff]
    %v128 = vld [vmem:[#allocation5 + $0x30] sm:$0xff]
    %v129 = vld [vmem:[#allocation5 + $0x38] sm:$0xff]
    %v130 = vld [vmem:[#allocation5 + $0x40] sm:$0xff]
    %v131 = vld [vmem:[#allocation5 + $0x48] sm:$0xff]
    %v132 = vld [vmem:[#allocation5 + $0x50] sm:$0xff]
    %v133 = vld [vmem:[#allocation5 + $0x58] sm:$0xff]
    %v134 = vld [vmem:[#allocation5 + $0x60] sm:$0xff]
    %v135 = vld [vmem:[#allocation5 + $0x68] sm:$0xff]
    %v136 = vld [vmem:[#allocation5 + $0x70] sm:$0xff]
    %v137 = vld [vmem:[#allocation5 + $0x78] sm:$0xff]
    %v138 = vld [vmem:[#allocation5 + $0x80] sm:$0xff]
    %v139 = vld [vmem:[#allocation5 + $0x88] sm:$0xff]
    %v140 = vld [vmem:[#allocation5 + $0x90] sm:$0xff]
    %v141 = vld [vmem:[#allocation5 + $0x98] sm:$0xff]
    %v142 = vld [vmem:[#allocation5 + $0xa0] sm:$0xff]
    %v143 = vld [vmem:[#allocation5 + $0xa8] sm:$0xff]
    %v144 = vld [vmem:[#allocation5 + $0xb0] sm:$0xff]
    %v145 = vld [vmem:[#allocation5 + $0xb8] sm:$0xff]
    %v146 = vld [vmem:[#allocation5 + $0xc0] sm:$0xff]
    %v147 = vld [vmem:[#allocation5 + $0xc8] sm:$0xff]
    %v148 = vld [vmem:[#allocation5 + $0xd0] sm:$0xff]
    %v149 = vld [vmem:[#allocation5 + $0xd8] sm:$0xff]
    %v150 = vld [vmem:[#allocation5 + $0xe0] sm:$0xff]
    %v151 = vld [vmem:[#allocation5 + $0xe8] sm:$0xff]
    %v152 = vld [vmem:[#allocation5 + $0xf0] sm:$0xff]
    %v153 = vld [vmem:[#allocation5 + $0xf8] sm:$0xff]
    %v154 = vld [vmem:[#allocation5 + $0x100] sm:$0xff]
    %v155 = vld [vmem:[#allocation5 + $0x108] sm:$0xff]
    %v156 = vld [vmem:[#allocation5 + $0x110] sm:$0xff]
    %v157 = vld [vmem:[#allocation5 + $0x118] sm:$0xff]
    %v158 = vld [vmem:[#allocation5 + $0x120] sm:$0xff]
    %v159 = vld [vmem:[#allocation5 + $0x128] sm:$0xff]
    %v160 = vld [vmem:[#allocation5 + $0x130] sm:$0xff]
    %v161 = vld [vmem:[#allocation5 + $0x138] sm:$0xff]
    %v162 = vld [vmem:[#allocation5 + $0x140] sm:$0xff]
    %v163 = vld [vmem:[#allocation5 + $0x148] sm:$0xff]
    %v164 = vld [vmem:[#allocation5 + $0x150] sm:$0xff]
    %v165 = vld [vmem:[#allocation5 + $0x158] sm:$0xff]
    %v166 = vld [vmem:[#allocation5 + $0x160] sm:$0xff]
    %v167 = vld [vmem:[#allocation5 + $0x168] sm:$0xff]
    %v168 = vld [vmem:[#allocation5 + $0x170] sm:$0xff]
    %v169 = vld [vmem:[#allocation5 + $0x178] sm:$0xff]
    %v170 = vld [vmem:[#allocation5 + $0x180] sm:$0xff]
    %v171 = vld [vmem:[#allocation5 + $0x188] sm:$0xff]
    %v172 = vld [vmem:[#allocation5 + $0x190] sm:$0xff]
    %v173 = vld [vmem:[#allocation5 + $0x198] sm:$0xff]
    %v174 = vld [vmem:[#allocation5 + $0x1a0] sm:$0xff]
    %v175 = vld [vmem:[#allocation5 + $0x1a8] sm:$0xff]
    %v176 = vld [vmem:[#allocation5 + $0x1b0] sm:$0xff]
    %v177 = vld [vmem:[#allocation5 + $0x1b8] sm:$0xff]
    %v178 = vld [vmem:[#allocation5 + $0x1c0] sm:$0xff]
    %v179 = vld [vmem:[#allocation5 + $0x1c8] sm:$0xff]
    %v180 = vld [vmem:[#allocation5 + $0x1d0] sm:$0xff]
    %v181 = vld [vmem:[#allocation5 + $0x1d8] sm:$0xff]
    %v182 = vld [vmem:[#allocation5 + $0x1e0] sm:$0xff]
    %v183 = vld [vmem:[#allocation5 + $0x1e8] sm:$0xff]
    %v184 = vld [vmem:[#allocation5 + $0x1f0] sm:$0xff]
    %v185 = vld [vmem:[#allocation5 + $0x1f8] sm:$0xff]
    %v186 = vld [vmem:[#allocation5 + $0x200] sm:$0xff]
    %v187 = vld [vmem:[#allocation5 + $0x208] sm:$0xff]
    %v188 = vld [vmem:[#allocation5 + $0x210] sm:$0xff]
    %v189 = vld [vmem:[#allocation5 + $0x218] sm:$0xff]
    %v190 = vld [vmem:[#allocation5 + $0x220] sm:$0xff]
    %v191 = vld [vmem:[#allocation5 + $0x228] sm:$0xff]
    %v192 = vld [vmem:[#allocation5 + $0x230] sm:$0xff]
    %v193 = vld [vmem:[#allocation5 + $0x238] sm:$0xff]
    %v194 = vld [vmem:[#allocation5 + $0x240] sm:$0xff]
    %v195 = vld [vmem:[#allocation5 + $0x248] sm:$0xff]
    %v196 = vld [vmem:[#allocation5 + $0x250] sm:$0xff]
    %v197 = vld [vmem:[#allocation5 + $0x258] sm:$0xff]
    %v198 = vld [vmem:[#allocation5 + $0x260] sm:$0xff]
    %v199 = vld [vmem:[#allocation5 + $0x268] sm:$0xff]
    %v200 = vld [vmem:[#allocation5 + $0x270] sm:$0xff]
    %v201 = vld [vmem:[#allocation5 + $0x278] sm:$0xff]
    %v202 = vld [vmem:[#allocation5 + $0x280] sm:$0xff]
    %v203 = vld [vmem:[#allocation5 + $0x288] sm:$0xff]
    %v204 = vld [vmem:[#allocation5 + $0x290] sm:$0xff]
    %v205 = vld [vmem:[#allocation5 + $0x298] sm:$0xff]
    %v206 = vld [vmem:[#allocation5 + $0x2a0] sm:$0xff]
    %v207 = vld [vmem:[#allocation5 + $0x2a8] sm:$0xff]
    %v208 = vld [vmem:[#allocation5 + $0x2b0] sm:$0xff]
    %v209 = vld [vmem:[#allocation5 + $0x2b8] sm:$0xff]
    %v210 = vld [vmem:[#allocation5 + $0x2c0] sm:$0xff]
    %v211 = vld [vmem:[#allocation5 + $0x2c8] sm:$0xff]
    %v212 = vld [vmem:[#allocation5 + $0x2d0] sm:$0xff]
    %v213 = vld [vmem:[#allocation5 + $0x2d8] sm:$0xff]
    %v214 = vld [vmem:[#allocation5 + $0x2e0] sm:$0xff]
    %v215 = vld [vmem:[#allocation5 + $0x2e8] sm:$0xff]
    %v216 = vld [vmem:[#allocation5 + $0x2f0] sm:$0xff]
    %v217 = vld [vmem:[#allocation5 + $0x2f8] sm:$0xff]
    %v218 = vld [vmem:[#allocation5 + $0x300] sm:$0xff]
    %v219 = vld [vmem:[#allocation5 + $0x308] sm:$0xff]
    %v220 = vld [vmem:[#allocation5 + $0x310] sm:$0xff]
    %v221 = vld [vmem:[#allocation5 + $0x318] sm:$0xff]
    %v222 = vld [vmem:[#allocation5 + $0x320] sm:$0xff]
    %v223 = vld [vmem:[#allocation5 + $0x328] sm:$0xff]
    %v224 = vld [vmem:[#allocation5 + $0x330] sm:$0xff]
    %v225 = vld [vmem:[#allocation5 + $0x338] sm:$0xff]
    %v226 = vld [vmem:[#allocation5 + $0x340] sm:$0xff]
    %v227 = vld [vmem:[#allocation5 + $0x348] sm:$0xff]
    %v228 = vld [vmem:[#allocation5 + $0x350] sm:$0xff]
    %v229 = vld [vmem:[#allocation5 + $0x358] sm:$0xff]
    %v230 = vld [vmem:[#allocation5 + $0x360] sm:$0xff]
    %v231 = vld [vmem:[#allocation5 + $0x368] sm:$0xff]
    %v232 = vld [vmem:[#allocation5 + $0x370] sm:$0xff]
    %v233 = vld [vmem:[#allocation5 + $0x378] sm:$0xff]
    %v234 = vld [vmem:[#allocation5 + $0x380] sm:$0xff]
    %v235 = vld [vmem:[#allocation5 + $0x388] sm:$0xff]
    %v236 = vld [vmem:[#allocation5 + $0x390] sm:$0xff]
    %v237 = vld [vmem:[#allocation5 + $0x398] sm:$0xff]
    %v238 = vld [vmem:[#allocation5 + $0x3a0] sm:$0xff]
    %v239 = vld [vmem:[#allocation5 + $0x3a8] sm:$0xff]
    %v240 = vld [vmem:[#allocation5 + $0x3b0] sm:$0xff]
    %v241 = vld [vmem:[#allocation5 + $0x3b8] sm:$0xff]
    %v242 = vld [vmem:[#allocation5 + $0x3c0] sm:$0xff]
    %v243 = vld [vmem:[#allocation5 + $0x3c8] sm:$0xff]
    %v244 = vld [vmem:[#allocation5 + $0x3d0] sm:$0xff]
    %v245 = vld [vmem:[#allocation5 + $0x3d8] sm:$0xff]
    %v246 = vld [vmem:[#allocation5 + $0x3e0] sm:$0xff]
    %v247 = vld [vmem:[#allocation5 + $0x3e8] sm:$0xff]
    %v248 = vld [vmem:[#allocation5 + $0x3f0] sm:$0xff]
    %v249 = vld [vmem:[#allocation5 + $0x3f8] sm:$0xff]
    %v250 = vld [vmem:[#allocation5 + $0x400] sm:$0xff]
    %v251 = vld [vmem:[#allocation5 + $0x408] sm:$0xff]
    %v252 = vld [vmem:[#allocation5 + $0x410] sm:$0xff]
    %v253 = vld [vmem:[#allocation5 + $0x418] sm:$0xff]
    %v254 = vld [vmem:[#allocation5 + $0x420] sm:$0xff]
    %v255 = vld [vmem:[#allocation5 + $0x428] sm:$0xff]
    %v256 = vld [vmem:[#allocation5 + $0x430] sm:$0xff]
    %v257 = vld [vmem:[#allocation5 + $0x438] sm:$0xff]
    %v258 = vld [vmem:[#allocation5 + $0x440] sm:$0xff]
    %v259 = vld [vmem:[#allocation5 + $0x448] sm:$0xff]
    %v260 = vld [vmem:[#allocation5 + $0x450] sm:$0xff]
    %v261 = vld [vmem:[#allocation5 + $0x458] sm:$0xff]
    %v262 = vld [vmem:[#allocation5 + $0x460] sm:$0xff]
    %v263 = vld [vmem:[#allocation5 + $0x468] sm:$0xff]
    %v264 = vld [vmem:[#allocation5 + $0x470] sm:$0xff]
    %v265 = vld [vmem:[#allocation5 + $0x478] sm:$0xff]
    %v266 = vld [vmem:[#allocation5 + $0x480] sm:$0xff]
    %v267 = vld [vmem:[#allocation5 + $0x488] sm:$0xff]
    %v268 = vld [vmem:[#allocation5 + $0x490] sm:$0xff]
    %v269 = vld [vmem:[#allocation5 + $0x498] sm:$0xff]
    %v270 = vld [vmem:[#allocation5 + $0x4a0] sm:$0xff]
    %v271 = vld [vmem:[#allocation5 + $0x4a8] sm:$0xff]
    %v272 = vld [vmem:[#allocation5 + $0x4b0] sm:$0xff]
    %v273 = vld [vmem:[#allocation5 + $0x4b8] sm:$0xff]
    %v274 = vld [vmem:[#allocation5 + $0x4c0] sm:$0xff]
    %v275 = vld [vmem:[#allocation5 + $0x4c8] sm:$0xff]
    %v276 = vld [vmem:[#allocation5 + $0x4d0] sm:$0xff]
    %v277 = vld [vmem:[#allocation5 + $0x4d8] sm:$0xff]
    %v278 = vld [vmem:[#allocation5 + $0x4e0] sm:$0xff]
    %v279 = vld [vmem:[#allocation5 + $0x4e8] sm:$0xff]
    %v280 = vld [vmem:[#allocation5 + $0x4f0] sm:$0xff]
    %v281 = vld [vmem:[#allocation5 + $0x4f8] sm:$0xff]
    %v282 = vld [vmem:[#allocation5 + $0x500] sm:$0xff]
    %v283 = vld [vmem:[#allocation5 + $0x508] sm:$0xff]
    %v284 = vld [vmem:[#allocation5 + $0x510] sm:$0xff]
    %v285 = vld [vmem:[#allocation5 + $0x518] sm:$0xff]
    %v286 = vld [vmem:[#allocation5 + $0x520] sm:$0xff]
    %v287 = vld [vmem:[#allocation5 + $0x528] sm:$0xff]
    %v288 = vld [vmem:[#allocation5 + $0x530] sm:$0xff]
    %v289 = vld [vmem:[#allocation5 + $0x538] sm:$0xff]
    %v290 = vld [vmem:[#allocation5 + $0x540] sm:$0xff]
    %v291 = vld [vmem:[#allocation5 + $0x548] sm:$0xff]
    %v292 = vld [vmem:[#allocation5 + $0x550] sm:$0xff]
    %v293 = vld [vmem:[#allocation5 + $0x558] sm:$0xff]
    %v294 = vld [vmem:[#allocation5 + $0x560] sm:$0xff]
    %v295 = vld [vmem:[#allocation5 + $0x568] sm:$0xff]
    %v296 = vld [vmem:[#allocation5 + $0x570] sm:$0xff]
    %v297 = vld [vmem:[#allocation5 + $0x578] sm:$0xff]
    %v298 = vld [vmem:[#allocation5 + $0x580] sm:$0xff]
    %v299 = vld [vmem:[#allocation5 + $0x588] sm:$0xff]
    %v300 = vld [vmem:[#allocation5 + $0x590] sm:$0xff]
    %v301 = vld [vmem:[#allocation5 + $0x598] sm:$0xff]
    %v302 = vld [vmem:[#allocation5 + $0x5a0] sm:$0xff]
    %v303 = vld [vmem:[#allocation5 + $0x5a8] sm:$0xff]
    %v304 = vld [vmem:[#allocation5 + $0x5b0] sm:$0xff]
    %v305 = vld [vmem:[#allocation5 + $0x5b8] sm:$0xff]
    %v306 = vld [vmem:[#allocation5 + $0x5c0] sm:$0xff]
    %v307 = vld [vmem:[#allocation5 + $0x5c8] sm:$0xff]
    %v308 = vld [vmem:[#allocation5 + $0x5d0] sm:$0xff]
    %v309 = vld [vmem:[#allocation5 + $0x5d8] sm:$0xff]
    %v310 = vld [vmem:[#allocation5 + $0x5e0] sm:$0xff]
    %v311 = vld [vmem:[#allocation5 + $0x5e8] sm:$0xff]
    %v312 = vld [vmem:[#allocation5 + $0x5f0] sm:$0xff]
    %v313 = vld [vmem:[#allocation5 + $0x5f8] sm:$0xff]
    %v314 = vld [vmem:[#allocation5 + $0x600] sm:$0xff]
    %v315 = vld [vmem:[#allocation5 + $0x608] sm:$0xff]
    %v316 = vld [vmem:[#allocation5 + $0x610] sm:$0xff]
    %v317 = vld [vmem:[#allocation5 + $0x618] sm:$0xff]
    %v318 = vld [vmem:[#allocation5 + $0x620] sm:$0xff]
    %v319 = vld [vmem:[#allocation5 + $0x628] sm:$0xff]
    %v320 = vld [vmem:[#allocation5 + $0x630] sm:$0xff]
    %v321 = vld [vmem:[#allocation5 + $0x638] sm:$0xff]
    %v322 = vld [vmem:[#allocation5 + $0x640] sm:$0xff]
    %v323 = vld [vmem:[#allocation5 + $0x648] sm:$0xff]
    %v324 = vld [vmem:[#allocation5 + $0x650] sm:$0xff]
    %v325 = vld [vmem:[#allocation5 + $0x658] sm:$0xff]
    %v326 = vld [vmem:[#allocation5 + $0x660] sm:$0xff]
    %v327 = vld [vmem:[#allocation5 + $0x668] sm:$0xff]
    %v328 = vld [vmem:[#allocation5 + $0x670] sm:$0xff]
    %v329 = vld [vmem:[#allocation5 + $0x678] sm:$0xff]
    %v330 = vld [vmem:[#allocation5 + $0x680] sm:$0xff]
    %v331 = vld [vmem:[#allocation5 + $0x688] sm:$0xff]
    %v332 = vld [vmem:[#allocation5 + $0x690] sm:$0xff]
    %v333 = vld [vmem:[#allocation5 + $0x698] sm:$0xff]
    %v334 = vld [vmem:[#allocation5 + $0x6a0] sm:$0xff]
    %v335 = vld [vmem:[#allocation5 + $0x6a8] sm:$0xff]
    %v336 = vld [vmem:[#allocation5 + $0x6b0] sm:$0xff]
    %v337 = vld [vmem:[#allocation5 + $0x6b8] sm:$0xff]
    %v338 = vld [vmem:[#allocation5 + $0x6c0] sm:$0xff]
    %v339 = vld [vmem:[#allocation5 + $0x6c8] sm:$0xff]
    %v340 = vld [vmem:[#allocation5 + $0x6d0] sm:$0xff]
    %v341 = vld [vmem:[#allocation5 + $0x6d8] sm:$0xff]
    %v342 = vld [vmem:[#allocation5 + $0x6e0] sm:$0xff]
    %v343 = vld [vmem:[#allocation5 + $0x6e8] sm:$0xff]
    %v344 = vld [vmem:[#allocation5 + $0x6f0] sm:$0xff]
    %v345 = vld [vmem:[#allocation5 + $0x6f8] sm:$0xff]
    %v346 = vld [vmem:[#allocation5 + $0x700] sm:$0xff]
    %v347 = vld [vmem:[#allocation5 + $0x708] sm:$0xff]
    %v348 = vld [vmem:[#allocation5 + $0x710] sm:$0xff]
    %v349 = vld [vmem:[#allocation5 + $0x718] sm:$0xff]
    %v350 = vld [vmem:[#allocation5 + $0x720] sm:$0xff]
    %v351 = vld [vmem:[#allocation5 + $0x728] sm:$0xff]
    %v352 = vld [vmem:[#allocation5 + $0x730] sm:$0xff]
    %v353 = vld [vmem:[#allocation5 + $0x738] sm:$0xff]
    %v354 = vld [vmem:[#allocation5 + $0x740] sm:$0xff]
    %v355 = vld [vmem:[#allocation5 + $0x748] sm:$0xff]
    %v356 = vld [vmem:[#allocation5 + $0x750] sm:$0xff]
    %v357 = vld [vmem:[#allocation5 + $0x758] sm:$0xff]
    %v358 = vld [vmem:[#allocation5 + $0x760] sm:$0xff]
    %v359 = vld [vmem:[#allocation5 + $0x768] sm:$0xff]
    %v360 = vld [vmem:[#allocation5 + $0x770] sm:$0xff]
    %v361 = vld [vmem:[#allocation5 + $0x778] sm:$0xff]
    %v368 = vunpack.c.l.b16 %v116
    %v369 = vunpack.c.h.b16 %v116
    %v370 = vunpack.c.l.b16 %v117
    %v371 = vunpack.c.h.b16 %v117
    %v372 = vunpack.c.l.b16 %v118
    %v373 = vunpack.c.l.b16 %v119
    %v374 = vunpack.c.h.b16 %v119
    %v375 = vunpack.c.l.b16 %v120
    %v376 = vunpack.c.h.b16 %v120
    %v377 = vunpack.c.l.b16 %v121
    %v378 = vpack.c.b16 %v373, %v368
    %v379 = vpack.c.b16 %v374, %v369
    %v380 = vpack.c.b16 %v375, %v370
    %v381 = vpack.c.b16 %v376, %v371
    %v382 = vpack.c.b16 %v377, %v372
    %v628 = vunpack.c.l.b16 %v122
    %v629 = vunpack.c.h.b16 %v122
    %v630 = vunpack.c.l.b16 %v123
    %v631 = vunpack.c.h.b16 %v123
    %v632 = vunpack.c.l.b16 %v124
    %v633 = vunpack.c.h.b16 %v124
    %v634 = vunpack.c.l.b16 %v125
    %v635 = vunpack.c.h.b16 %v125
    %v636 = vunpack.c.l.b16 %v126
    %v637 = vunpack.c.h.b16 %v126
    %v638 = vunpack.c.l.b16 %v127
    %v639 = vunpack.c.h.b16 %v127
    %v640 = vunpack.c.l.b16 %v128
    %v641 = vunpack.c.h.b16 %v128
    %v642 = vunpack.c.l.b16 %v129
    %v643 = vunpack.c.h.b16 %v129
    %v644 = vunpack.c.l.b16 %v130
    %v645 = vunpack.c.h.b16 %v130
    %v646 = vunpack.c.l.b16 %v131
    %v647 = vunpack.c.h.b16 %v131
    %v648 = vunpack.c.l.b16 %v132
    %v649 = vunpack.c.h.b16 %v132
    %v650 = vunpack.c.l.b16 %v133
    %v651 = vunpack.c.h.b16 %v133
    %v652 = vunpack.c.l.b16 %v134
    %v653 = vunpack.c.h.b16 %v134
    %v654 = vunpack.c.l.b16 %v135
    %v655 = vunpack.c.h.b16 %v135
    %v656 = vunpack.c.l.b16 %v136
    %v657 = vunpack.c.h.b16 %v136
    %v658 = vunpack.c.l.b16 %v137
    %v659 = vunpack.c.h.b16 %v137
    %v660 = vunpack.c.l.b16 %v138
    %v661 = vunpack.c.h.b16 %v138
    %v662 = vunpack.c.l.b16 %v139
    %v663 = vunpack.c.h.b16 %v139
    %v664 = vunpack.c.l.b16 %v140
    %v665 = vunpack.c.h.b16 %v140
    %v666 = vunpack.c.l.b16 %v141
    %v667 = vunpack.c.h.b16 %v141
    %v668 = vunpack.c.l.b16 %v142
    %v669 = vunpack.c.h.b16 %v142
    %v670 = vunpack.c.l.b16 %v143
    %v671 = vunpack.c.h.b16 %v143
    %v672 = vunpack.c.l.b16 %v144
    %v673 = vunpack.c.h.b16 %v144
    %v674 = vunpack.c.l.b16 %v145
    %v675 = vunpack.c.h.b16 %v145
    %v676 = vunpack.c.l.b16 %v146
    %v677 = vunpack.c.h.b16 %v146
    %v678 = vunpack.c.l.b16 %v147
    %v679 = vunpack.c.h.b16 %v147
    %v680 = vunpack.c.l.b16 %v148
    %v681 = vunpack.c.h.b16 %v148
    %v682 = vunpack.c.l.b16 %v149
    %v683 = vunpack.c.h.b16 %v149
    %v684 = vunpack.c.l.b16 %v150
    %v685 = vunpack.c.h.b16 %v150
    %v686 = vunpack.c.l.b16 %v151
    %v687 = vunpack.c.h.b16 %v151
    %v688 = vunpack.c.l.b16 %v152
    %v689 = vunpack.c.h.b16 %v152
    %v690 = vunpack.c.l.b16 %v153
    %v691 = vunpack.c.h.b16 %v153
    %v692 = vunpack.c.l.b16 %v154
    %v693 = vunpack.c.h.b16 %v154
    %v694 = vunpack.c.l.b16 %v155
    %v695 = vunpack.c.h.b16 %v155
    %v696 = vunpack.c.l.b16 %v156
    %v697 = vunpack.c.h.b16 %v156
    %v698 = vunpack.c.l.b16 %v157
    %v699 = vunpack.c.h.b16 %v157
    %v700 = vunpack.c.l.b16 %v158
    %v701 = vunpack.c.h.b16 %v158
    %v702 = vunpack.c.l.b16 %v159
    %v703 = vunpack.c.h.b16 %v159
    %v704 = vunpack.c.l.b16 %v160
    %v705 = vunpack.c.h.b16 %v160
    %v706 = vunpack.c.l.b16 %v161
    %v707 = vunpack.c.h.b16 %v161
    %v708 = vunpack.c.l.b16 %v162
    %v709 = vunpack.c.h.b16 %v162
    %v710 = vunpack.c.l.b16 %v163
    %v711 = vunpack.c.h.b16 %v163
    %v712 = vunpack.c.l.b16 %v164
    %v713 = vunpack.c.h.b16 %v164
    %v714 = vunpack.c.l.b16 %v165
    %v715 = vunpack.c.h.b16 %v165
    %v716 = vunpack.c.l.b16 %v166
    %v717 = vunpack.c.h.b16 %v166
    %v718 = vunpack.c.l.b16 %v167
    %v719 = vunpack.c.h.b16 %v167
    %v720 = vunpack.c.l.b16 %v168
    %v721 = vunpack.c.h.b16 %v168
    %v722 = vunpack.c.l.b16 %v169
    %v723 = vunpack.c.h.b16 %v169
    %v724 = vunpack.c.l.b16 %v170
    %v725 = vunpack.c.h.b16 %v170
    %v726 = vunpack.c.l.b16 %v171
    %v727 = vunpack.c.h.b16 %v171
    %v728 = vunpack.c.l.b16 %v172
    %v729 = vunpack.c.h.b16 %v172
    %v730 = vunpack.c.l.b16 %v173
    %v731 = vunpack.c.h.b16 %v173
    %v732 = vunpack.c.l.b16 %v174
    %v733 = vunpack.c.h.b16 %v174
    %v734 = vunpack.c.l.b16 %v175
    %v735 = vunpack.c.h.b16 %v175
    %v736 = vunpack.c.l.b16 %v176
    %v737 = vunpack.c.h.b16 %v176
    %v738 = vunpack.c.l.b16 %v177
    %v739 = vunpack.c.h.b16 %v177
    %v740 = vunpack.c.l.b16 %v178
    %v741 = vunpack.c.h.b16 %v178
    %v742 = vunpack.c.l.b16 %v179
    %v743 = vunpack.c.h.b16 %v179
    %v744 = vunpack.c.l.b16 %v180
    %v745 = vunpack.c.h.b16 %v180
    %v746 = vunpack.c.l.b16 %v181
    %v747 = vunpack.c.h.b16 %v181
    %v748 = vunpack.c.l.b16 %v182
    %v749 = vunpack.c.h.b16 %v182
    %v750 = vunpack.c.l.b16 %v183
    %v751 = vunpack.c.h.b16 %v183
    %v752 = vunpack.c.l.b16 %v184
    %v753 = vunpack.c.h.b16 %v184
    %v754 = vunpack.c.l.b16 %v185
    %v755 = vunpack.c.h.b16 %v185
    %v756 = vunpack.c.l.b16 %v186
    %v757 = vunpack.c.h.b16 %v186
    %v758 = vunpack.c.l.b16 %v187
    %v759 = vunpack.c.h.b16 %v187
    %v760 = vunpack.c.l.b16 %v188
    %v761 = vunpack.c.h.b16 %v188
    %v762 = vunpack.c.l.b16 %v189
    %v763 = vunpack.c.h.b16 %v189
    %v764 = vunpack.c.l.b16 %v190
    %v765 = vunpack.c.h.b16 %v190
    %v766 = vunpack.c.l.b16 %v191
    %v767 = vunpack.c.h.b16 %v191
    %v768 = vunpack.c.l.b16 %v192
    %v769 = vunpack.c.h.b16 %v192
    %v770 = vunpack.c.l.b16 %v193
    %v771 = vunpack.c.h.b16 %v193
    %v772 = vunpack.c.l.b16 %v194
    %v773 = vunpack.c.h.b16 %v194
    %v774 = vunpack.c.l.b16 %v195
    %v775 = vunpack.c.h.b16 %v195
    %v776 = vunpack.c.l.b16 %v196
    %v777 = vunpack.c.h.b16 %v196
    %v778 = vunpack.c.l.b16 %v197
    %v779 = vunpack.c.h.b16 %v197
    %v780 = vunpack.c.l.b16 %v198
    %v781 = vunpack.c.h.b16 %v198
    %v782 = vunpack.c.l.b16 %v199
    %v783 = vunpack.c.h.b16 %v199
    %v784 = vunpack.c.l.b16 %v200
    %v785 = vunpack.c.h.b16 %v200
    %v786 = vunpack.c.l.b16 %v201
    %v787 = vunpack.c.h.b16 %v201
    %v788 = vunpack.c.l.b16 %v202
    %v789 = vunpack.c.h.b16 %v202
    %v790 = vunpack.c.l.b16 %v203
    %v791 = vunpack.c.h.b16 %v203
    %v792 = vunpack.c.l.b16 %v204
    %v793 = vunpack.c.h.b16 %v204
    %v794 = vunpack.c.l.b16 %v205
    %v795 = vunpack.c.h.b16 %v205
    %v796 = vunpack.c.l.b16 %v206
    %v797 = vunpack.c.h.b16 %v206
    %v798 = vunpack.c.l.b16 %v207
    %v799 = vunpack.c.h.b16 %v207
    %v800 = vunpack.c.l.b16 %v208
    %v801 = vunpack.c.h.b16 %v208
    %v802 = vunpack.c.l.b16 %v209
    %v803 = vunpack.c.h.b16 %v209
    %v804 = vunpack.c.l.b16 %v210
    %v805 = vunpack.c.h.b16 %v210
    %v806 = vunpack.c.l.b16 %v211
    %v807 = vunpack.c.h.b16 %v211
    %v808 = vunpack.c.l.b16 %v212
    %v809 = vunpack.c.h.b16 %v212
    %v810 = vunpack.c.l.b16 %v213
    %v811 = vunpack.c.h.b16 %v213
    %v812 = vunpack.c.l.b16 %v214
    %v813 = vunpack.c.h.b16 %v214
    %v814 = vunpack.c.l.b16 %v215
    %v815 = vunpack.c.h.b16 %v215
    %v816 = vunpack.c.l.b16 %v216
    %v817 = vunpack.c.h.b16 %v216
    %v818 = vunpack.c.l.b16 %v217
    %v819 = vunpack.c.h.b16 %v217
    %v820 = vunpack.c.l.b16 %v218
    %v821 = vunpack.c.h.b16 %v218
    %v822 = vunpack.c.l.b16 %v219
    %v823 = vunpack.c.h.b16 %v219
    %v824 = vunpack.c.l.b16 %v220
    %v825 = vunpack.c.h.b16 %v220
    %v826 = vunpack.c.l.b16 %v221
    %v827 = vunpack.c.h.b16 %v221
    %v828 = vunpack.c.l.b16 %v222
    %v829 = vunpack.c.h.b16 %v222
    %v830 = vunpack.c.l.b16 %v223
    %v831 = vunpack.c.h.b16 %v223
    %v832 = vunpack.c.l.b16 %v224
    %v833 = vunpack.c.h.b16 %v224
    %v834 = vunpack.c.l.b16 %v225
    %v835 = vunpack.c.h.b16 %v225
    %v836 = vunpack.c.l.b16 %v226
    %v837 = vunpack.c.h.b16 %v226
    %v838 = vunpack.c.l.b16 %v227
    %v839 = vunpack.c.h.b16 %v227
    %v840 = vunpack.c.l.b16 %v228
    %v841 = vunpack.c.h.b16 %v228
    %v842 = vunpack.c.l.b16 %v229
    %v843 = vunpack.c.h.b16 %v229
    %v844 = vunpack.c.l.b16 %v230
    %v845 = vunpack.c.h.b16 %v230
    %v846 = vunpack.c.l.b16 %v231
    %v847 = vunpack.c.h.b16 %v231
    %v848 = vunpack.c.l.b16 %v232
    %v849 = vunpack.c.h.b16 %v232
    %v850 = vunpack.c.l.b16 %v233
    %v851 = vunpack.c.h.b16 %v233
    %v852 = vunpack.c.l.b16 %v234
    %v853 = vunpack.c.h.b16 %v234
    %v854 = vunpack.c.l.b16 %v235
    %v855 = vunpack.c.h.b16 %v235
    %v856 = vunpack.c.l.b16 %v236
    %v857 = vunpack.c.h.b16 %v236
    %v858 = vunpack.c.l.b16 %v237
    %v859 = vunpack.c.h.b16 %v237
    %v860 = vunpack.c.l.b16 %v238
    %v861 = vunpack.c.h.b16 %v238
    %v862 = vunpack.c.l.b16 %v239
    %v863 = vunpack.c.h.b16 %v239
    %v864 = vunpack.c.l.b16 %v240
    %v865 = vunpack.c.h.b16 %v240
    %v866 = vunpack.c.l.b16 %v241
    %v867 = vunpack.c.h.b16 %v241
    %v868 = vunpack.c.l.b16 %v242
    %v869 = vunpack.c.h.b16 %v242
    %v870 = vunpack.c.l.b16 %v243
    %v871 = vunpack.c.h.b16 %v243
    %v872 = vunpack.c.l.b16 %v244
    %v873 = vunpack.c.h.b16 %v244
    %v874 = vunpack.c.l.b16 %v245
    %v875 = vunpack.c.h.b16 %v245
    %v876 = vunpack.c.l.b16 %v246
    %v877 = vunpack.c.h.b16 %v246
    %v878 = vunpack.c.l.b16 %v247
    %v879 = vunpack.c.h.b16 %v247
    %v880 = vunpack.c.l.b16 %v248
    %v881 = vunpack.c.h.b16 %v248
    %v882 = vunpack.c.l.b16 %v249
    %v883 = vunpack.c.h.b16 %v249
    %v884 = vunpack.c.l.b16 %v250
    %v885 = vunpack.c.h.b16 %v250
    %v886 = vunpack.c.l.b16 %v251
    %v887 = vunpack.c.h.b16 %v251
    %v888 = vunpack.c.l.b16 %v252
    %v889 = vunpack.c.h.b16 %v252
    %v890 = vunpack.c.l.b16 %v253
    %v891 = vunpack.c.h.b16 %v253
    %v892 = vunpack.c.l.b16 %v254
    %v893 = vunpack.c.h.b16 %v254
    %v894 = vunpack.c.l.b16 %v255
    %v895 = vunpack.c.h.b16 %v255
    %v896 = vunpack.c.l.b16 %v256
    %v897 = vunpack.c.h.b16 %v256
    %v898 = vunpack.c.l.b16 %v257
    %v899 = vunpack.c.h.b16 %v257
    %v900 = vunpack.c.l.b16 %v258
    %v901 = vunpack.c.h.b16 %v258
    %v902 = vunpack.c.l.b16 %v259
    %v903 = vunpack.c.h.b16 %v259
    %v904 = vunpack.c.l.b16 %v260
    %v905 = vunpack.c.h.b16 %v260
    %v906 = vunpack.c.l.b16 %v261
    %v907 = vunpack.c.h.b16 %v261
    %v908 = vunpack.c.l.b16 %v262
    %v909 = vunpack.c.h.b16 %v262
    %v910 = vunpack.c.l.b16 %v263
    %v911 = vunpack.c.h.b16 %v263
    %v912 = vunpack.c.l.b16 %v264
    %v913 = vunpack.c.h.b16 %v264
    %v914 = vunpack.c.l.b16 %v265
    %v915 = vunpack.c.h.b16 %v265
    %v916 = vunpack.c.l.b16 %v266
    %v917 = vunpack.c.h.b16 %v266
    %v918 = vunpack.c.l.b16 %v267
    %v919 = vunpack.c.h.b16 %v267
    %v920 = vunpack.c.l.b16 %v268
    %v921 = vunpack.c.h.b16 %v268
    %v922 = vunpack.c.l.b16 %v269
    %v923 = vunpack.c.h.b16 %v269
    %v924 = vunpack.c.l.b16 %v270
    %v925 = vunpack.c.h.b16 %v270
    %v926 = vunpack.c.l.b16 %v271
    %v927 = vunpack.c.h.b16 %v271
    %v928 = vunpack.c.l.b16 %v272
    %v929 = vunpack.c.h.b16 %v272
    %v930 = vunpack.c.l.b16 %v273
    %v931 = vunpack.c.h.b16 %v273
    %v932 = vunpack.c.l.b16 %v274
    %v933 = vunpack.c.h.b16 %v274
    %v934 = vunpack.c.l.b16 %v275
    %v935 = vunpack.c.h.b16 %v275
    %v936 = vunpack.c.l.b16 %v276
    %v937 = vunpack.c.h.b16 %v276
    %v938 = vunpack.c.l.b16 %v277
    %v939 = vunpack.c.h.b16 %v277
    %v940 = vunpack.c.l.b16 %v278
    %v941 = vunpack.c.h.b16 %v278
    %v942 = vunpack.c.l.b16 %v279
    %v943 = vunpack.c.h.b16 %v279
    %v944 = vunpack.c.l.b16 %v280
    %v945 = vunpack.c.h.b16 %v280
    %v946 = vunpack.c.l.b16 %v281
    %v947 = vunpack.c.h.b16 %v281
    %v948 = vunpack.c.l.b16 %v282
    %v949 = vunpack.c.h.b16 %v282
    %v950 = vunpack.c.l.b16 %v283
    %v951 = vunpack.c.h.b16 %v283
    %v952 = vunpack.c.l.b16 %v284
    %v953 = vunpack.c.h.b16 %v284
    %v954 = vunpack.c.l.b16 %v285
    %v955 = vunpack.c.h.b16 %v285
    %v956 = vunpack.c.l.b16 %v286
    %v957 = vunpack.c.h.b16 %v286
    %v958 = vunpack.c.l.b16 %v287
    %v959 = vunpack.c.h.b16 %v287
    %v960 = vunpack.c.l.b16 %v288
    %v961 = vunpack.c.h.b16 %v288
    %v962 = vunpack.c.l.b16 %v289
    %v963 = vunpack.c.h.b16 %v289
    %v964 = vunpack.c.l.b16 %v290
    %v965 = vunpack.c.h.b16 %v290
    %v966 = vunpack.c.l.b16 %v291
    %v967 = vunpack.c.h.b16 %v291
    %v968 = vunpack.c.l.b16 %v292
    %v969 = vunpack.c.h.b16 %v292
    %v970 = vunpack.c.l.b16 %v293
    %v971 = vunpack.c.h.b16 %v293
    %v972 = vunpack.c.l.b16 %v294
    %v973 = vunpack.c.h.b16 %v294
    %v974 = vunpack.c.l.b16 %v295
    %v975 = vunpack.c.h.b16 %v295
    %v976 = vunpack.c.l.b16 %v296
    %v977 = vunpack.c.h.b16 %v296
    %v978 = vunpack.c.l.b16 %v297
    %v979 = vunpack.c.h.b16 %v297
    %v980 = vunpack.c.l.b16 %v298
    %v981 = vunpack.c.h.b16 %v298
    %v982 = vunpack.c.l.b16 %v299
    %v983 = vunpack.c.h.b16 %v299
    %v984 = vunpack.c.l.b16 %v300
    %v985 = vunpack.c.h.b16 %v300
    %v986 = vunpack.c.l.b16 %v301
    %v987 = vunpack.c.h.b16 %v301
    %v988 = vunpack.c.l.b16 %v302
    %v989 = vunpack.c.h.b16 %v302
    %v990 = vunpack.c.l.b16 %v303
    %v991 = vunpack.c.h.b16 %v303
    %v992 = vunpack.c.l.b16 %v304
    %v993 = vunpack.c.h.b16 %v304
    %v994 = vunpack.c.l.b16 %v305
    %v995 = vunpack.c.h.b16 %v305
    %v996 = vunpack.c.l.b16 %v306
    %v997 = vunpack.c.h.b16 %v306
    %v998 = vunpack.c.l.b16 %v307
    %v999 = vunpack.c.h.b16 %v307
    %v1000 = vunpack.c.l.b16 %v308
    %v1001 = vunpack.c.h.b16 %v308
    %v1002 = vunpack.c.l.b16 %v309
    %v1003 = vunpack.c.h.b16 %v309
    %v1004 = vunpack.c.l.b16 %v310
    %v1005 = vunpack.c.h.b16 %v310
    %v1006 = vunpack.c.l.b16 %v311
    %v1007 = vunpack.c.h.b16 %v311
    %v1008 = vunpack.c.l.b16 %v312
    %v1009 = vunpack.c.h.b16 %v312
    %v1010 = vunpack.c.l.b16 %v313
    %v1011 = vunpack.c.h.b16 %v313
    %v1012 = vunpack.c.l.b16 %v314
    %v1013 = vunpack.c.h.b16 %v314
    %v1014 = vunpack.c.l.b16 %v315
    %v1015 = vunpack.c.h.b16 %v315
    %v1016 = vunpack.c.l.b16 %v316
    %v1017 = vunpack.c.h.b16 %v316
    %v1018 = vunpack.c.l.b16 %v317
    %v1019 = vunpack.c.h.b16 %v317
    %v1020 = vunpack.c.l.b16 %v318
    %v1021 = vunpack.c.h.b16 %v318
    %v1022 = vunpack.c.l.b16 %v319
    %v1023 = vunpack.c.h.b16 %v319
    %v1024 = vunpack.c.l.b16 %v320
    %v1025 = vunpack.c.h.b16 %v320
    %v1026 = vunpack.c.l.b16 %v321
    %v1027 = vunpack.c.h.b16 %v321
    %v1028 = vunpack.c.l.b16 %v322
    %v1029 = vunpack.c.h.b16 %v322
    %v1030 = vunpack.c.l.b16 %v323
    %v1031 = vunpack.c.h.b16 %v323
    %v1032 = vunpack.c.l.b16 %v324
    %v1033 = vunpack.c.h.b16 %v324
    %v1034 = vunpack.c.l.b16 %v325
    %v1035 = vunpack.c.h.b16 %v325
    %v1036 = vunpack.c.l.b16 %v326
    %v1037 = vunpack.c.h.b16 %v326
    %v1038 = vunpack.c.l.b16 %v327
    %v1039 = vunpack.c.h.b16 %v327
    %v1040 = vunpack.c.l.b16 %v328
    %v1041 = vunpack.c.h.b16 %v328
    %v1042 = vunpack.c.l.b16 %v329
    %v1043 = vunpack.c.h.b16 %v329
    %v1044 = vunpack.c.l.b16 %v330
    %v1045 = vunpack.c.h.b16 %v330
    %v1046 = vunpack.c.l.b16 %v331
    %v1047 = vunpack.c.h.b16 %v331
    %v1048 = vunpack.c.l.b16 %v332
    %v1049 = vunpack.c.h.b16 %v332
    %v1050 = vunpack.c.l.b16 %v333
    %v1051 = vunpack.c.h.b16 %v333
    %v1052 = vunpack.c.l.b16 %v334
    %v1053 = vunpack.c.h.b16 %v334
    %v1054 = vunpack.c.l.b16 %v335
    %v1055 = vunpack.c.h.b16 %v335
    %v1056 = vunpack.c.l.b16 %v336
    %v1057 = vunpack.c.h.b16 %v336
    %v1058 = vunpack.c.l.b16 %v337
    %v1059 = vunpack.c.h.b16 %v337
    %v1060 = vunpack.c.l.b16 %v338
    %v1061 = vunpack.c.h.b16 %v338
    %v1062 = vunpack.c.l.b16 %v339
    %v1063 = vunpack.c.h.b16 %v339
    %v1064 = vunpack.c.l.b16 %v340
    %v1065 = vunpack.c.h.b16 %v340
    %v1066 = vunpack.c.l.b16 %v341
    %v1067 = vunpack.c.h.b16 %v341
    %v1068 = vunpack.c.l.b16 %v342
    %v1069 = vunpack.c.h.b16 %v342
    %v1070 = vunpack.c.l.b16 %v343
    %v1071 = vunpack.c.h.b16 %v343
    %v1072 = vunpack.c.l.b16 %v344
    %v1073 = vunpack.c.h.b16 %v344
    %v1074 = vunpack.c.l.b16 %v345
    %v1075 = vunpack.c.h.b16 %v345
    %v1076 = vunpack.c.l.b16 %v346
    %v1077 = vunpack.c.h.b16 %v346
    %v1078 = vunpack.c.l.b16 %v347
    %v1079 = vunpack.c.h.b16 %v347
    %v1080 = vunpack.c.l.b16 %v348
    %v1081 = vunpack.c.h.b16 %v348
    %v1082 = vunpack.c.l.b16 %v349
    %v1083 = vunpack.c.h.b16 %v349
    %v1084 = vunpack.c.l.b16 %v350
    %v1085 = vunpack.c.h.b16 %v350
    %v1086 = vunpack.c.l.b16 %v351
    %v1087 = vunpack.c.h.b16 %v351
    %v1088 = vunpack.c.l.b16 %v352
    %v1089 = vunpack.c.h.b16 %v352
    %v1090 = vunpack.c.l.b16 %v353
    %v1091 = vunpack.c.h.b16 %v353
    %v1092 = vunpack.c.l.b16 %v354
    %v1093 = vunpack.c.h.b16 %v354
    %v1094 = vunpack.c.l.b16 %v355
    %v1095 = vunpack.c.h.b16 %v355
    %v1096 = vunpack.c.l.b16 %v356
    %v1097 = vunpack.c.h.b16 %v356
    %v1098 = vunpack.c.l.b16 %v357
    %v1099 = vunpack.c.h.b16 %v357
    %v1100 = vunpack.c.l.b16 %v358
    %v1101 = vunpack.c.h.b16 %v358
    %v1102 = vunpack.c.l.b16 %v359
    %v1103 = vunpack.c.h.b16 %v359
    %v1104 = vunpack.c.l.b16 %v360
    %v1105 = vunpack.c.h.b16 %v360
    %v1106 = vunpack.c.l.b16 %v361
    %v1107 = vunpack.c.h.b16 %v361
    %v1108 = vpack.c.b16 %v634, %v628
    %v1109 = vpack.c.b16 %v635, %v629
    %v1110 = vpack.c.b16 %v636, %v630
    %v1111 = vpack.c.b16 %v637, %v631
    %v1112 = vpack.c.b16 %v638, %v632
    %v1113 = vpack.c.b16 %v639, %v633
    %v1114 = vpack.c.b16 %v646, %v640
    %v1115 = vpack.c.b16 %v647, %v641
    %v1116 = vpack.c.b16 %v648, %v642
    %v1117 = vpack.c.b16 %v649, %v643
    %v1118 = vpack.c.b16 %v650, %v644
    %v1119 = vpack.c.b16 %v651, %v645
    %v1120 = vpack.c.b16 %v658, %v652
    %v1121 = vpack.c.b16 %v659, %v653
    %v1122 = vpack.c.b16 %v660, %v654
    %v1123 = vpack.c.b16 %v661, %v655
    %v1124 = vpack.c.b16 %v662, %v656
    %v1125 = vpack.c.b16 %v663, %v657
    %v1126 = vpack.c.b16 %v670, %v664
    %v1127 = vpack.c.b16 %v671, %v665
    %v1128 = vpack.c.b16 %v672, %v666
    %v1129 = vpack.c.b16 %v673, %v667
    %v1130 = vpack.c.b16 %v674, %v668
    %v1131 = vpack.c.b16 %v675, %v669
    %v1132 = vpack.c.b16 %v682, %v676
    %v1133 = vpack.c.b16 %v683, %v677
    %v1134 = vpack.c.b16 %v684, %v678
    %v1135 = vpack.c.b16 %v685, %v679
    %v1136 = vpack.c.b16 %v686, %v680
    %v1137 = vpack.c.b16 %v687, %v681
    %v1138 = vpack.c.b16 %v694, %v688
    %v1139 = vpack.c.b16 %v695, %v689
    %v1140 = vpack.c.b16 %v696, %v690
    %v1141 = vpack.c.b16 %v697, %v691
    %v1142 = vpack.c.b16 %v698, %v692
    %v1143 = vpack.c.b16 %v699, %v693
    %v1144 = vpack.c.b16 %v706, %v700
    %v1145 = vpack.c.b16 %v707, %v701
    %v1146 = vpack.c.b16 %v708, %v702
    %v1147 = vpack.c.b16 %v709, %v703
    %v1148 = vpack.c.b16 %v710, %v704
    %v1149 = vpack.c.b16 %v711, %v705
    %v1150 = vpack.c.b16 %v718, %v712
    %v1151 = vpack.c.b16 %v719, %v713
    %v1152 = vpack.c.b16 %v720, %v714
    %v1153 = vpack.c.b16 %v721, %v715
    %v1154 = vpack.c.b16 %v722, %v716
    %v1155 = vpack.c.b16 %v723, %v717
    %v1156 = vpack.c.b16 %v730, %v724
    %v1157 = vpack.c.b16 %v731, %v725
    %v1158 = vpack.c.b16 %v732, %v726
    %v1159 = vpack.c.b16 %v733, %v727
    %v1160 = vpack.c.b16 %v734, %v728
    %v1161 = vpack.c.b16 %v735, %v729
    %v1162 = vpack.c.b16 %v742, %v736
    %v1163 = vpack.c.b16 %v743, %v737
    %v1164 = vpack.c.b16 %v744, %v738
    %v1165 = vpack.c.b16 %v745, %v739
    %v1166 = vpack.c.b16 %v746, %v740
    %v1167 = vpack.c.b16 %v747, %v741
    %v1168 = vpack.c.b16 %v754, %v748
    %v1169 = vpack.c.b16 %v755, %v749
    %v1170 = vpack.c.b16 %v756, %v750
    %v1171 = vpack.c.b16 %v757, %v751
    %v1172 = vpack.c.b16 %v758, %v752
    %v1173 = vpack.c.b16 %v759, %v753
    %v1174 = vpack.c.b16 %v766, %v760
    %v1175 = vpack.c.b16 %v767, %v761
    %v1176 = vpack.c.b16 %v768, %v762
    %v1177 = vpack.c.b16 %v769, %v763
    %v1178 = vpack.c.b16 %v770, %v764
    %v1179 = vpack.c.b16 %v771, %v765
    %v1180 = vpack.c.b16 %v778, %v772
    %v1181 = vpack.c.b16 %v779, %v773
    %v1182 = vpack.c.b16 %v780, %v774
    %v1183 = vpack.c.b16 %v781, %v775
    %v1184 = vpack.c.b16 %v782, %v776
    %v1185 = vpack.c.b16 %v783, %v777
    %v1186 = vpack.c.b16 %v790, %v784
    %v1187 = vpack.c.b16 %v791, %v785
    %v1188 = vpack.c.b16 %v792, %v786
    %v1189 = vpack.c.b16 %v793, %v787
    %v1190 = vpack.c.b16 %v794, %v788
    %v1191 = vpack.c.b16 %v795, %v789
    %v1192 = vpack.c.b16 %v802, %v796
    %v1193 = vpack.c.b16 %v803, %v797
    %v1194 = vpack.c.b16 %v804, %v798
    %v1195 = vpack.c.b16 %v805, %v799
    %v1196 = vpack.c.b16 %v806, %v800
    %v1197 = vpack.c.b16 %v807, %v801
    %v1198 = vpack.c.b16 %v814, %v808
    %v1199 = vpack.c.b16 %v815, %v809
    %v1200 = vpack.c.b16 %v816, %v810
    %v1201 = vpack.c.b16 %v817, %v811
    %v1202 = vpack.c.b16 %v818, %v812
    %v1203 = vpack.c.b16 %v819, %v813
    %v1204 = vpack.c.b16 %v826, %v820
    %v1205 = vpack.c.b16 %v827, %v821
    %v1206 = vpack.c.b16 %v828, %v822
    %v1207 = vpack.c.b16 %v829, %v823
    %v1208 = vpack.c.b16 %v830, %v824
    %v1209 = vpack.c.b16 %v831, %v825
    %v1210 = vpack.c.b16 %v838, %v832
    %v1211 = vpack.c.b16 %v839, %v833
    %v1212 = vpack.c.b16 %v840, %v834
    %v1213 = vpack.c.b16 %v841, %v835
    %v1214 = vpack.c.b16 %v842, %v836
    %v1215 = vpack.c.b16 %v843, %v837
    %v1216 = vpack.c.b16 %v850, %v844
    %v1217 = vpack.c.b16 %v851, %v845
    %v1218 = vpack.c.b16 %v852, %v846
    %v1219 = vpack.c.b16 %v853, %v847
    %v1220 = vpack.c.b16 %v854, %v848
    %v1221 = vpack.c.b16 %v855, %v849
    %v1222 = vpack.c.b16 %v862, %v856
    %v1223 = vpack.c.b16 %v863, %v857
    %v1224 = vpack.c.b16 %v864, %v858
    %v1225 = vpack.c.b16 %v865, %v859
    %v1226 = vpack.c.b16 %v866, %v860
    %v1227 = vpack.c.b16 %v867, %v861
    %v1228 = vpack.c.b16 %v874, %v868
    %v1229 = vpack.c.b16 %v875, %v869
    %v1230 = vpack.c.b16 %v876, %v870
    %v1231 = vpack.c.b16 %v877, %v871
    %v1232 = vpack.c.b16 %v878, %v872
    %v1233 = vpack.c.b16 %v879, %v873
    %v1234 = vpack.c.b16 %v886, %v880
    %v1235 = vpack.c.b16 %v887, %v881
    %v1236 = vpack.c.b16 %v888, %v882
    %v1237 = vpack.c.b16 %v889, %v883
    %v1238 = vpack.c.b16 %v890, %v884
    %v1239 = vpack.c.b16 %v891, %v885
    %v1240 = vpack.c.b16 %v898, %v892
    %v1241 = vpack.c.b16 %v899, %v893
    %v1242 = vpack.c.b16 %v900, %v894
    %v1243 = vpack.c.b16 %v901, %v895
    %v1244 = vpack.c.b16 %v902, %v896
    %v1245 = vpack.c.b16 %v903, %v897
    %v1246 = vpack.c.b16 %v910, %v904
    %v1247 = vpack.c.b16 %v911, %v905
    %v1248 = vpack.c.b16 %v912, %v906
    %v1249 = vpack.c.b16 %v913, %v907
    %v1250 = vpack.c.b16 %v914, %v908
    %v1251 = vpack.c.b16 %v915, %v909
    %v1252 = vpack.c.b16 %v922, %v916
    %v1253 = vpack.c.b16 %v923, %v917
    %v1254 = vpack.c.b16 %v924, %v918
    %v1255 = vpack.c.b16 %v925, %v919
    %v1256 = vpack.c.b16 %v926, %v920
    %v1257 = vpack.c.b16 %v927, %v921
    %v1258 = vpack.c.b16 %v934, %v928
    %v1259 = vpack.c.b16 %v935, %v929
    %v1260 = vpack.c.b16 %v936, %v930
    %v1261 = vpack.c.b16 %v937, %v931
    %v1262 = vpack.c.b16 %v938, %v932
    %v1263 = vpack.c.b16 %v939, %v933
    %v1264 = vpack.c.b16 %v946, %v940
    %v1265 = vpack.c.b16 %v947, %v941
    %v1266 = vpack.c.b16 %v948, %v942
    %v1267 = vpack.c.b16 %v949, %v943
    %v1268 = vpack.c.b16 %v950, %v944
    %v1269 = vpack.c.b16 %v951, %v945
    %v1270 = vpack.c.b16 %v958, %v952
    %v1271 = vpack.c.b16 %v959, %v953
    %v1272 = vpack.c.b16 %v960, %v954
    %v1273 = vpack.c.b16 %v961, %v955
    %v1274 = vpack.c.b16 %v962, %v956
    %v1275 = vpack.c.b16 %v963, %v957
    %v1276 = vpack.c.b16 %v970, %v964
    %v1277 = vpack.c.b16 %v971, %v965
    %v1278 = vpack.c.b16 %v972, %v966
    %v1279 = vpack.c.b16 %v973, %v967
    %v1280 = vpack.c.b16 %v974, %v968
    %v1281 = vpack.c.b16 %v975, %v969
    %v1282 = vpack.c.b16 %v982, %v976
    %v1283 = vpack.c.b16 %v983, %v977
    %v1284 = vpack.c.b16 %v984, %v978
    %v1285 = vpack.c.b16 %v985, %v979
    %v1286 = vpack.c.b16 %v986, %v980
    %v1287 = vpack.c.b16 %v987, %v981
    %v1288 = vpack.c.b16 %v994, %v988
    %v1289 = vpack.c.b16 %v995, %v989
    %v1290 = vpack.c.b16 %v996, %v990
    %v1291 = vpack.c.b16 %v997, %v991
    %v1292 = vpack.c.b16 %v998, %v992
    %v1293 = vpack.c.b16 %v999, %v993
    %v1294 = vpack.c.b16 %v1006, %v1000
    %v1295 = vpack.c.b16 %v1007, %v1001
    %v1296 = vpack.c.b16 %v1008, %v1002
    %v1297 = vpack.c.b16 %v1009, %v1003
    %v1298 = vpack.c.b16 %v1010, %v1004
    %v1299 = vpack.c.b16 %v1011, %v1005
    %v1300 = vpack.c.b16 %v1018, %v1012
    %v1301 = vpack.c.b16 %v1019, %v1013
    %v1302 = vpack.c.b16 %v1020, %v1014
    %v1303 = vpack.c.b16 %v1021, %v1015
    %v1304 = vpack.c.b16 %v1022, %v1016
    %v1305 = vpack.c.b16 %v1023, %v1017
    %v1306 = vpack.c.b16 %v1030, %v1024
    %v1307 = vpack.c.b16 %v1031, %v1025
    %v1308 = vpack.c.b16 %v1032, %v1026
    %v1309 = vpack.c.b16 %v1033, %v1027
    %v1310 = vpack.c.b16 %v1034, %v1028
    %v1311 = vpack.c.b16 %v1035, %v1029
    %v1312 = vpack.c.b16 %v1042, %v1036
    %v1313 = vpack.c.b16 %v1043, %v1037
    %v1314 = vpack.c.b16 %v1044, %v1038
    %v1315 = vpack.c.b16 %v1045, %v1039
    %v1316 = vpack.c.b16 %v1046, %v1040
    %v1317 = vpack.c.b16 %v1047, %v1041
    %v1318 = vpack.c.b16 %v1054, %v1048
    %v1319 = vpack.c.b16 %v1055, %v1049
    %v1320 = vpack.c.b16 %v1056, %v1050
    %v1321 = vpack.c.b16 %v1057, %v1051
    %v1322 = vpack.c.b16 %v1058, %v1052
    %v1323 = vpack.c.b16 %v1059, %v1053
    %v1324 = vpack.c.b16 %v1066, %v1060
    %v1325 = vpack.c.b16 %v1067, %v1061
    %v1326 = vpack.c.b16 %v1068, %v1062
    %v1327 = vpack.c.b16 %v1069, %v1063
    %v1328 = vpack.c.b16 %v1070, %v1064
    %v1329 = vpack.c.b16 %v1071, %v1065
    %v1330 = vpack.c.b16 %v1078, %v1072
    %v1331 = vpack.c.b16 %v1079, %v1073
    %v1332 = vpack.c.b16 %v1080, %v1074
    %v1333 = vpack.c.b16 %v1081, %v1075
    %v1334 = vpack.c.b16 %v1082, %v1076
    %v1335 = vpack.c.b16 %v1083, %v1077
    %v1336 = vpack.c.b16 %v1090, %v1084
    %v1337 = vpack.c.b16 %v1091, %v1085
    %v1338 = vpack.c.b16 %v1092, %v1086
    %v1339 = vpack.c.b16 %v1093, %v1087
    %v1340 = vpack.c.b16 %v1094, %v1088
    %v1341 = vpack.c.b16 %v1095, %v1089
    %v1342 = vpack.c.b16 %v1102, %v1096
    %v1343 = vpack.c.b16 %v1103, %v1097
    %v1344 = vpack.c.b16 %v1104, %v1098
    %v1345 = vpack.c.b16 %v1105, %v1099
    %v1346 = vpack.c.b16 %v1106, %v1100
    %v1347 = vpack.c.b16 %v1107, %v1101
    %1588 = vmatprep.subr.bf16.mxu0 %v1151
    %1589 = vmatpush1.bf16.msra.mxu0 %v1150
    %1590 = vmatprep.subr.bf16.mxu0 %v1145
    %1591 = vmatpush1.bf16.msra.mxu0 %v1144
    %1592 = vmatprep.subr.bf16.mxu0 %v1139
    %1593 = vmatpush1.bf16.msra.mxu0 %v1138
    %1594 = vmatprep.subr.bf16.mxu0 %v1133
    %1595 = vmatpush1.bf16.msra.mxu0 %v1132
    %1596 = vmatprep.subr.bf16.mxu0 %v1127
    %1597 = vmatpush1.bf16.msra.mxu0 %v1126
    %1598 = vmatprep.subr.bf16.mxu0 %v1121
    %1599 = vmatpush1.bf16.msra.mxu0 %v1120
    %1600 = vmatprep.subr.bf16.mxu0 %v1115
    %1601 = vmatpush1.bf16.msra.mxu0 %v1114
    %1602 = vmatprep.subr.bf16.mxu0 %v1109
    %1603 = vmatpush1.bf16.msra.mxu0 %v1108
    %1604 = vmatprep.subr.bf16.mxu0 %v1199
    %1605 = vmatpush2.bf16.msra.mxu0 %v1198
    %1606 = vmatprep.subr.bf16.mxu0 %v1193
    %1607 = vmatpush2.bf16.msra.mxu0 %v1192
    %1608 = vmatprep.subr.bf16.mxu0 %v1187
    %1609 = vmatpush2.bf16.msra.mxu0 %v1186
    %1610 = vmatprep.subr.bf16.mxu0 %v1181
    %1611 = vmatpush2.bf16.msra.mxu0 %v1180
    %1612 = vmatprep.subr.bf16.mxu0 %v1175
    %1613 = vmatpush2.bf16.msra.mxu0 %v1174
    %1614 = vmatprep.subr.bf16.mxu0 %v1169
    %1615 = vmatpush2.bf16.msra.mxu0 %v1168
    %1616 = vmatprep.subr.bf16.mxu0 %v1163
    %1617 = vmatpush2.bf16.msra.mxu0 %v1162
    %1618 = vmatprep.subr.bf16.mxu0 %v1157
    %1619 = vmatpush2.bf16.msra.mxu0 %v1156
    %1620 = vmatprep.mubr.bf16.mxu0 %v379
    %1621 = vmatmul.mubr.bf16.gmra.mxu0 %v378
    %v1622 = vpop.f32.mrf.mxu0
    %v1623 = vadd.f32 0.0, %v1622
    %v1624 = vpop.f32.mrf.mxu0
    %v1625 = vadd.f32 0.0, %v1624
    %v1626 = vpop.f32.mrf.mxu0
    %v1627 = vadd.f32 0.0, %v1626
    %v1628 = vpop.f32.mrf.mxu0
    %v1629 = vadd.f32 0.0, %v1628
    %1630 = vdwg.mxu0
    %1631 = vmatprep.subr.bf16.mxu0 %v1247
    %1632 = vmatpush1.bf16.msra.mxu0 %v1246
    %1633 = vmatprep.subr.bf16.mxu0 %v1241
    %1634 = vmatpush1.bf16.msra.mxu0 %v1240
    %1635 = vmatprep.subr.bf16.mxu0 %v1235
    %1636 = vmatpush1.bf16.msra.mxu0 %v1234
    %1637 = vmatprep.subr.bf16.mxu0 %v1229
    %1638 = vmatpush1.bf16.msra.mxu0 %v1228
    %1639 = vmatprep.subr.bf16.mxu0 %v1223
    %1640 = vmatpush1.bf16.msra.mxu0 %v1222
    %1641 = vmatprep.subr.bf16.mxu0 %v1217
    %1642 = vmatpush1.bf16.msra.mxu0 %v1216
    %1643 = vmatprep.subr.bf16.mxu0 %v1211
    %1644 = vmatpush1.bf16.msra.mxu0 %v1210
    %1645 = vmatprep.subr.bf16.mxu0 %v1205
    %1646 = vmatpush1.bf16.msra.mxu0 %v1204
    %1647 = vmatprep.subr.bf16.mxu0 %v1295
    %1648 = vmatpush2.bf16.msra.mxu0 %v1294
    %1649 = vmatprep.subr.bf16.mxu0 %v1289
    %1650 = vmatpush2.bf16.msra.mxu0 %v1288
    %1651 = vmatprep.subr.bf16.mxu0 %v1283
    %1652 = vmatpush2.bf16.msra.mxu0 %v1282
    %1653 = vmatprep.subr.bf16.mxu0 %v1277
    %1654 = vmatpush2.bf16.msra.mxu0 %v1276
    %1655 = vmatprep.subr.bf16.mxu0 %v1271
    %1656 = vmatpush2.bf16.msra.mxu0 %v1270
    %1657 = vmatprep.subr.bf16.mxu0 %v1265
    %1658 = vmatpush2.bf16.msra.mxu0 %v1264
    %1659 = vmatprep.subr.bf16.mxu0 %v1259
    %1660 = vmatpush2.bf16.msra.mxu0 %v1258
    %1661 = vmatprep.subr.bf16.mxu0 %v1253
    %1662 = vmatpush2.bf16.msra.mxu0 %v1252
    %1663 = vmatprep.mubr.bf16.mxu0 %v381
    %1664 = vmatmul.mubr.bf16.gmra.mxu0 %v380
    %v1665 = vpop.f32.mrf.mxu0
    %v1666 = vadd.f32 %v1623, %v1665
    %v1667 = vpop.f32.mrf.mxu0
    %v1668 = vadd.f32 %v1625, %v1667
    %v1669 = vpop.f32.mrf.mxu0
    %v1670 = vadd.f32 %v1627, %v1669
    %v1671 = vpop.f32.mrf.mxu0
    %v1672 = vadd.f32 %v1629, %v1671
    %1673 = vdwg.mxu0
    %1674 = vmatprep.subr.bf16.mxu0 %v1343
    %1675 = vmatpush1.bf16.msra.mxu0 %v1342
    %1676 = vmatprep.subr.bf16.mxu0 %v1337
    %1677 = vmatpush1.bf16.msra.mxu0 %v1336
    %1678 = vmatprep.subr.bf16.mxu0 %v1331
    %1679 = vmatpush1.bf16.msra.mxu0 %v1330
    %1680 = vmatprep.subr.bf16.mxu0 %v1325
    %1681 = vmatpush1.bf16.msra.mxu0 %v1324
    %1682 = vmatprep.subr.bf16.mxu0 %v1319
    %1683 = vmatpush1.bf16.msra.mxu0 %v1318
    %1684 = vmatprep.subr.bf16.mxu0 %v1313
    %1685 = vmatpush1.bf16.msra.mxu0 %v1312
    %1686 = vmatprep.subr.bf16.mxu0 %v1307
    %1687 = vmatpush1.bf16.msra.mxu0 %v1306
    %1688 = vmatprep.subr.bf16.mxu0 %v1301
    %1689 = vmatpush1.bf16.msra.mxu0 %v1300
    %1690 = vmatprep.subr.bf16.mxu0 0
    %1691 = vmatpush2.bf16.msra.mxu0 0
    %1692 = vmatprep.subr.bf16.mxu0 0
    %1693 = vmatpush2.bf16.msra.mxu0 0
    %1694 = vmatprep.subr.bf16.mxu0 0
    %1695 = vmatpush2.bf16.msra.mxu0 0
    %1696 = vmatprep.subr.bf16.mxu0 0
    %1697 = vmatpush2.bf16.msra.mxu0 0
    %1698 = vmatprep.subr.bf16.mxu0 0
    %1699 = vmatpush2.bf16.msra.mxu0 0
    %1700 = vmatprep.subr.bf16.mxu0 0
    %1701 = vmatpush2.bf16.msra.mxu0 0
    %1702 = vmatprep.subr.bf16.mxu0 0
    %1703 = vmatpush2.bf16.msra.mxu0 0
    %1704 = vmatprep.subr.bf16.mxu0 0
    %1705 = vmatpush2.bf16.msra.mxu0 0
    %1706 = vmatprep.mubr.bf16.mxu0 0
    %1707 = vmatmul.mubr.bf16.gmra.mxu0 %v382
    %v1708 = vpop.f32.mrf.mxu0
    %v1709 = vadd.f32 %v1666, %v1708
    %v1710 = vpop.f32.mrf.mxu0
    %v1711 = vadd.f32 %v1668, %v1710
    %v1712 = vpop.f32.mrf.mxu0
    %v1713 = vadd.f32 %v1670, %v1712
    %v1714 = vpop.f32.mrf.mxu0
    %v1715 = vadd.f32 %v1672, %v1714
    %1716 = vdwg.mxu0
    %1717 = vmatprep.subr.bf16.mxu0 %v1153
    %1718 = vmatpush1.bf16.msra.mxu0 %v1152
    %1719 = vmatprep.subr.bf16.mxu0 %v1147
    %1720 = vmatpush1.bf16.msra.mxu0 %v1146
    %1721 = vmatprep.subr.bf16.mxu0 %v1141
    %1722 = vmatpush1.bf16.msra.mxu0 %v1140
    %1723 = vmatprep.subr.bf16.mxu0 %v1135
    %1724 = vmatpush1.bf16.msra.mxu0 %v1134
    %1725 = vmatprep.subr.bf16.mxu0 %v1129
    %1726 = vmatpush1.bf16.msra.mxu0 %v1128
    %1727 = vmatprep.subr.bf16.mxu0 %v1123
    %1728 = vmatpush1.bf16.msra.mxu0 %v1122
    %1729 = vmatprep.subr.bf16.mxu0 %v1117
    %1730 = vmatpush1.bf16.msra.mxu0 %v1116
    %1731 = vmatprep.subr.bf16.mxu0 %v1111
    %1732 = vmatpush1.bf16.msra.mxu0 %v1110
    %1733 = vmatprep.subr.bf16.mxu0 %v1201
    %1734 = vmatpush2.bf16.msra.mxu0 %v1200
    %1735 = vmatprep.subr.bf16.mxu0 %v1195
    %1736 = vmatpush2.bf16.msra.mxu0 %v1194
    %1737 = vmatprep.subr.bf16.mxu0 %v1189
    %1738 = vmatpush2.bf16.msra.mxu0 %v1188
    %1739 = vmatprep.subr.bf16.mxu0 %v1183
    %1740 = vmatpush2.bf16.msra.mxu0 %v1182
    %1741 = vmatprep.subr.bf16.mxu0 %v1177
    %1742 = vmatpush2.bf16.msra.mxu0 %v1176
    %1743 = vmatprep.subr.bf16.mxu0 %v1171
    %1744 = vmatpush2.bf16.msra.mxu0 %v1170
    %1745 = vmatprep.subr.bf16.mxu0 %v1165
    %1746 = vmatpush2.bf16.msra.mxu0 %v1164
    %1747 = vmatprep.subr.bf16.mxu0 %v1159
    %1748 = vmatpush2.bf16.msra.mxu0 %v1158
    %1749 = vmatprep.mubr.bf16.mxu0 %v379
    %1750 = vmatmul.mubr.bf16.gmra.mxu0 %v378
    %v1751 = vpop.f32.mrf.mxu0
    %v1752 = vadd.f32 0.0, %v1751
    %v1753 = vpop.f32.mrf.mxu0
    %v1754 = vadd.f32 0.0, %v1753
    %v1755 = vpop.f32.mrf.mxu0
    %v1756 = vadd.f32 0.0, %v1755
    %v1757 = vpop.f32.mrf.mxu0
    %v1758 = vadd.f32 0.0, %v1757
    %1759 = vdwg.mxu0
    %1760 = vmatprep.subr.bf16.mxu0 %v1249
    %1761 = vmatpush1.bf16.msra.mxu0 %v1248
    %1762 = vmatprep.subr.bf16.mxu0 %v1243
    %1763 = vmatpush1.bf16.msra.mxu0 %v1242
    %1764 = vmatprep.subr.bf16.mxu0 %v1237
    %1765 = vmatpush1.bf16.msra.mxu0 %v1236
    %1766 = vmatprep.subr.bf16.mxu0 %v1231
    %1767 = vmatpush1.bf16.msra.mxu0 %v1230
    %1768 = vmatprep.subr.bf16.mxu0 %v1225
    %1769 = vmatpush1.bf16.msra.mxu0 %v1224
    %1770 = vmatprep.subr.bf16.mxu0 %v1219
    %1771 = vmatpush1.bf16.msra.mxu0 %v1218
    %1772 = vmatprep.subr.bf16.mxu0 %v1213
    %1773 = vmatpush1.bf16.msra.mxu0 %v1212
    %1774 = vmatprep.subr.bf16.mxu0 %v1207
    %1775 = vmatpush1.bf16.msra.mxu0 %v1206
    %1776 = vmatprep.subr.bf16.mxu0 %v1297
    %1777 = vmatpush2.bf16.msra.mxu0 %v1296
    %1778 = vmatprep.subr.bf16.mxu0 %v1291
    %1779 = vmatpush2.bf16.msra.mxu0 %v1290
    %1780 = vmatprep.subr.bf16.mxu0 %v1285
    %1781 = vmatpush2.bf16.msra.mxu0 %v1284
    %1782 = vmatprep.subr.bf16.mxu0 %v1279
    %1783 = vmatpush2.bf16.msra.mxu0 %v1278
    %1784 = vmatprep.subr.bf16.mxu0 %v1273
    %1785 = vmatpush2.bf16.msra.mxu0 %v1272
    %1786 = vmatprep.subr.bf16.mxu0 %v1267
    %1787 = vmatpush2.bf16.msra.mxu0 %v1266
    %1788 = vmatprep.subr.bf16.mxu0 %v1261
    %1789 = vmatpush2.bf16.msra.mxu0 %v1260
    %1790 = vmatprep.subr.bf16.mxu0 %v1255
    %1791 = vmatpush2.bf16.msra.mxu0 %v1254
    %1792 = vmatprep.mubr.bf16.mxu0 %v381
    %1793 = vmatmul.mubr.bf16.gmra.mxu0 %v380
    %v1794 = vpop.f32.mrf.mxu0
    %v1795 = vadd.f32 %v1752, %v1794
    %v1796 = vpop.f32.mrf.mxu0
    %v1797 = vadd.f32 %v1754, %v1796
    %v1798 = vpop.f32.mrf.mxu0
    %v1799 = vadd.f32 %v1756, %v1798
    %v1800 = vpop.f32.mrf.mxu0
    %v1801 = vadd.f32 %v1758, %v1800
    %1802 = vdwg.mxu0
    %1803 = vmatprep.subr.bf16.mxu0 %v1345
    %1804 = vmatpush1.bf16.msra.mxu0 %v1344
    %1805 = vmatprep.subr.bf16.mxu0 %v1339
    %1806 = vmatpush1.bf16.msra.mxu0 %v1338
    %1807 = vmatprep.subr.bf16.mxu0 %v1333
    %1808 = vmatpush1.bf16.msra.mxu0 %v1332
    %1809 = vmatprep.subr.bf16.mxu0 %v1327
    %1810 = vmatpush1.bf16.msra.mxu0 %v1326
    %1811 = vmatprep.subr.bf16.mxu0 %v1321
    %1812 = vmatpush1.bf16.msra.mxu0 %v1320
    %1813 = vmatprep.subr.bf16.mxu0 %v1315
    %1814 = vmatpush1.bf16.msra.mxu0 %v1314
    %1815 = vmatprep.subr.bf16.mxu0 %v1309
    %1816 = vmatpush1.bf16.msra.mxu0 %v1308
    %1817 = vmatprep.subr.bf16.mxu0 %v1303
    %1818 = vmatpush1.bf16.msra.mxu0 %v1302
    %1819 = vmatprep.subr.bf16.mxu0 0
    %1820 = vmatpush2.bf16.msra.mxu0 0
    %1821 = vmatprep.subr.bf16.mxu0 0
    %1822 = vmatpush2.bf16.msra.mxu0 0
    %1823 = vmatprep.subr.bf16.mxu0 0
    %1824 = vmatpush2.bf16.msra.mxu0 0
    %1825 = vmatprep.subr.bf16.mxu0 0
    %1826 = vmatpush2.bf16.msra.mxu0 0
    %1827 = vmatprep.subr.bf16.mxu0 0
    %1828 = vmatpush2.bf16.msra.mxu0 0
    %1829 = vmatprep.subr.bf16.mxu0 0
    %1830 = vmatpush2.bf16.msra.mxu0 0
    %1831 = vmatprep.subr.bf16.mxu0 0
    %1832 = vmatpush2.bf16.msra.mxu0 0
    %1833 = vmatprep.subr.bf16.mxu0 0
    %1834 = vmatpush2.bf16.msra.mxu0 0
    %1835 = vmatprep.mubr.bf16.mxu0 0
    %1836 = vmatmul.mubr.bf16.gmra.mxu0 %v382
    %v1837 = vpop.f32.mrf.mxu0
    %v1838 = vadd.f32 %v1795, %v1837
    %v1839 = vpop.f32.mrf.mxu0
    %v1840 = vadd.f32 %v1797, %v1839
    %v1841 = vpop.f32.mrf.mxu0
    %v1842 = vadd.f32 %v1799, %v1841
    %v1843 = vpop.f32.mrf.mxu0
    %v1844 = vadd.f32 %v1801, %v1843
    %1845 = vdwg.mxu0
    %1846 = vmatprep.subr.bf16.mxu0 %v1155
    %1847 = vmatpush1.bf16.msra.mxu0 %v1154
    %1848 = vmatprep.subr.bf16.mxu0 %v1149
    %1849 = vmatpush1.bf16.msra.mxu0 %v1148
    %1850 = vmatprep.subr.bf16.mxu0 %v1143
    %1851 = vmatpush1.bf16.msra.mxu0 %v1142
    %1852 = vmatprep.subr.bf16.mxu0 %v1137
    %1853 = vmatpush1.bf16.msra.mxu0 %v1136
    %1854 = vmatprep.subr.bf16.mxu0 %v1131
    %1855 = vmatpush1.bf16.msra.mxu0 %v1130
    %1856 = vmatprep.subr.bf16.mxu0 %v1125
    %1857 = vmatpush1.bf16.msra.mxu0 %v1124
    %1858 = vmatprep.subr.bf16.mxu0 %v1119
    %1859 = vmatpush1.bf16.msra.mxu0 %v1118
    %1860 = vmatprep.subr.bf16.mxu0 %v1113
    %1861 = vmatpush1.bf16.msra.mxu0 %v1112
    %1862 = vmatprep.subr.bf16.mxu0 %v1203
    %1863 = vmatpush2.bf16.msra.mxu0 %v1202
    %1864 = vmatprep.subr.bf16.mxu0 %v1197
    %1865 = vmatpush2.bf16.msra.mxu0 %v1196
    %1866 = vmatprep.subr.bf16.mxu0 %v1191
    %1867 = vmatpush2.bf16.msra.mxu0 %v1190
    %1868 = vmatprep.subr.bf16.mxu0 %v1185
    %1869 = vmatpush2.bf16.msra.mxu0 %v1184
    %1870 = vmatprep.subr.bf16.mxu0 %v1179
    %1871 = vmatpush2.bf16.msra.mxu0 %v1178
    %1872 = vmatprep.subr.bf16.mxu0 %v1173
    %1873 = vmatpush2.bf16.msra.mxu0 %v1172
    %1874 = vmatprep.subr.bf16.mxu0 %v1167
    %1875 = vmatpush2.bf16.msra.mxu0 %v1166
    %1876 = vmatprep.subr.bf16.mxu0 %v1161
    %1877 = vmatpush2.bf16.msra.mxu0 %v1160
    %1878 = vmatprep.mubr.bf16.mxu0 %v379
    %1879 = vmatmul.mubr.bf16.gmra.mxu0 %v378
    %v1880 = vpop.f32.mrf.mxu0
    %v1881 = vadd.f32 0.0, %v1880
    %v1882 = vpop.f32.mrf.mxu0
    %v1883 = vadd.f32 0.0, %v1882
    %v1884 = vpop.f32.mrf.mxu0
    %v1885 = vadd.f32 0.0, %v1884
    %v1886 = vpop.f32.mrf.mxu0
    %v1887 = vadd.f32 0.0, %v1886
    %1888 = vdwg.mxu0
    %1889 = vmatprep.subr.bf16.mxu0 %v1251
    %1890 = vmatpush1.bf16.msra.mxu0 %v1250
    %1891 = vmatprep.subr.bf16.mxu0 %v1245
    %1892 = vmatpush1.bf16.msra.mxu0 %v1244
    %1893 = vmatprep.subr.bf16.mxu0 %v1239
    %1894 = vmatpush1.bf16.msra.mxu0 %v1238
    %1895 = vmatprep.subr.bf16.mxu0 %v1233
    %1896 = vmatpush1.bf16.msra.mxu0 %v1232
    %1897 = vmatprep.subr.bf16.mxu0 %v1227
    %1898 = vmatpush1.bf16.msra.mxu0 %v1226
    %1899 = vmatprep.subr.bf16.mxu0 %v1221
    %1900 = vmatpush1.bf16.msra.mxu0 %v1220
    %1901 = vmatprep.subr.bf16.mxu0 %v1215
    %1902 = vmatpush1.bf16.msra.mxu0 %v1214
    %1903 = vmatprep.subr.bf16.mxu0 %v1209
    %1904 = vmatpush1.bf16.msra.mxu0 %v1208
    %1905 = vmatprep.subr.bf16.mxu0 %v1299
    %1906 = vmatpush2.bf16.msra.mxu0 %v1298
    %1907 = vmatprep.subr.bf16.mxu0 %v1293
    %1908 = vmatpush2.bf16.msra.mxu0 %v1292
    %1909 = vmatprep.subr.bf16.mxu0 %v1287
    %1910 = vmatpush2.bf16.msra.mxu0 %v1286
    %1911 = vmatprep.subr.bf16.mxu0 %v1281
    %1912 = vmatpush2.bf16.msra.mxu0 %v1280
    %1913 = vmatprep.subr.bf16.mxu0 %v1275
    %1914 = vmatpush2.bf16.msra.mxu0 %v1274
    %1915 = vmatprep.subr.bf16.mxu0 %v1269
    %1916 = vmatpush2.bf16.msra.mxu0 %v1268
    %1917 = vmatprep.subr.bf16.mxu0 %v1263
    %1918 = vmatpush2.bf16.msra.mxu0 %v1262
    %1919 = vmatprep.subr.bf16.mxu0 %v1257
    %1920 = vmatpush2.bf16.msra.mxu0 %v1256
    %1921 = vmatprep.mubr.bf16.mxu0 %v381
    %1922 = vmatmul.mubr.bf16.gmra.mxu0 %v380
    %v1923 = vpop.f32.mrf.mxu0
    %v1924 = vadd.f32 %v1881, %v1923
    %v1925 = vpop.f32.mrf.mxu0
    %v1926 = vadd.f32 %v1883, %v1925
    %v1927 = vpop.f32.mrf.mxu0
    %v1928 = vadd.f32 %v1885, %v1927
    %v1929 = vpop.f32.mrf.mxu0
    %v1930 = vadd.f32 %v1887, %v1929
    %1931 = vdwg.mxu0
    %1932 = vmatprep.subr.bf16.mxu0 %v1347
    %1933 = vmatpush1.bf16.msra.mxu0 %v1346
    %1934 = vmatprep.subr.bf16.mxu0 %v1341
    %1935 = vmatpush1.bf16.msra.mxu0 %v1340
    %1936 = vmatprep.subr.bf16.mxu0 %v1335
    %1937 = vmatpush1.bf16.msra.mxu0 %v1334
    %1938 = vmatprep.subr.bf16.mxu0 %v1329
    %1939 = vmatpush1.bf16.msra.mxu0 %v1328
    %1940 = vmatprep.subr.bf16.mxu0 %v1323
    %1941 = vmatpush1.bf16.msra.mxu0 %v1322
    %1942 = vmatprep.subr.bf16.mxu0 %v1317
    %1943 = vmatpush1.bf16.msra.mxu0 %v1316
    %1944 = vmatprep.subr.bf16.mxu0 %v1311
    %1945 = vmatpush1.bf16.msra.mxu0 %v1310
    %1946 = vmatprep.subr.bf16.mxu0 %v1305
    %1947 = vmatpush1.bf16.msra.mxu0 %v1304
    %1948 = vmatprep.subr.bf16.mxu0 0
    %1949 = vmatpush2.bf16.msra.mxu0 0
    %1950 = vmatprep.subr.bf16.mxu0 0
    %1951 = vmatpush2.bf16.msra.mxu0 0
    %1952 = vmatprep.subr.bf16.mxu0 0
    %1953 = vmatpush2.bf16.msra.mxu0 0
    %1954 = vmatprep.subr.bf16.mxu0 0
    %1955 = vmatpush2.bf16.msra.mxu0 0
    %1956 = vmatprep.subr.bf16.mxu0 0
    %1957 = vmatpush2.bf16.msra.mxu0 0
    %1958 = vmatprep.subr.bf16.mxu0 0
    %1959 = vmatpush2.bf16.msra.mxu0 0
    %1960 = vmatprep.subr.bf16.mxu0 0
    %1961 = vmatpush2.bf16.msra.mxu0 0
    %1962 = vmatprep.subr.bf16.mxu0 0
    %1963 = vmatpush2.bf16.msra.mxu0 0
    %1964 = vmatprep.mubr.bf16.mxu0 0
    %1965 = vmatmul.mubr.bf16.gmra.mxu0 %v382
    %v1966 = vpop.f32.mrf.mxu0
    %v1967 = vadd.f32 %v1924, %v1966
    %v1968 = vpop.f32.mrf.mxu0
    %v1969 = vadd.f32 %v1926, %v1968
    %v1970 = vpop.f32.mrf.mxu0
    %v1971 = vadd.f32 %v1928, %v1970
    %v1972 = vpop.f32.mrf.mxu0
    %v1973 = vadd.f32 %v1930, %v1972
    %1974 = vdwg.mxu0
    %v1975 = vpack.c.bf16 %v1709, %v1709
    %v1976 = vpack.c.bf16 %v1711, %v1711
    %v1977 = vpack.c.bf16 %v1838, %v1838
    %v1978 = vpack.c.bf16 %v1840, %v1840
    %v1979 = vpack.c.bf16 %v1967, %v1967
    %v1980 = vpack.c.bf16 %v1969, %v1969
    %v1981 = vpack.c.bf16 %v1713, %v1713
    %v1982 = vpack.c.bf16 %v1715, %v1715
    %v1983 = vpack.c.bf16 %v1842, %v1842
    %v1984 = vpack.c.bf16 %v1844, %v1844
    %v1985 = vpack.c.bf16 %v1971, %v1971
    %v1986 = vpack.c.bf16 %v1973, %v1973
    %v1987 = vld [vmem:[#allocation7] sm:$0xff]
    %v1988 = vld [vmem:[#allocation7 + $0x8] sm:$0xff]
    %v1989 = vld [vmem:[#allocation7 + $0x10] sm:$0xff]
    %v1990 = vld [vmem:[#allocation7 + $0x18] sm:$0xff]
    %v1991 = vld [vmem:[#allocation7 + $0x20] sm:$0xff]
    %v1992 = vld [vmem:[#allocation7 + $0x28] sm:$0xff]
    %v1993 = vld [vmem:[#allocation7 + $0x30] sm:$0xff]
    %v1994 = vld [vmem:[#allocation7 + $0x38] sm:$0xff]
    %v1995 = vld [vmem:[#allocation7 + $0x40] sm:$0xff]
    %v1996 = vld [vmem:[#allocation7 + $0x48] sm:$0xff]
    %v1997 = vld [vmem:[#allocation7 + $0x50] sm:$0xff]
    %v1998 = vld [vmem:[#allocation7 + $0x58] sm:$0xff]
    %v1999 = vld [vmem:[#allocation7 + $0x60] sm:$0xff]
    %v2000 = vld [vmem:[#allocation7 + $0x68] sm:$0xff]
    %v2001 = vld [vmem:[#allocation7 + $0x70] sm:$0xff]
    %v2002 = vld [vmem:[#allocation7 + $0x78] sm:$0xff]
    %v2003 = vld [vmem:[#allocation7 + $0x80] sm:$0xff]
    %v2004 = vld [vmem:[#allocation7 + $0x88] sm:$0xff]
    %v2005 = vld [vmem:[#allocation7 + $0x90] sm:$0xff]
    %v2006 = vld [vmem:[#allocation7 + $0x98] sm:$0xff]
    %v2007 = vld [vmem:[#allocation7 + $0xa0] sm:$0xff]
    %v2008 = vld [vmem:[#allocation7 + $0xa8] sm:$0xff]
    %v2009 = vld [vmem:[#allocation7 + $0xb0] sm:$0xff]
    %v2010 = vld [vmem:[#allocation7 + $0xb8] sm:$0xff]
    %v2011 = vld [vmem:[#allocation7 + $0xc0] sm:$0xff]
    %v2012 = vld [vmem:[#allocation7 + $0xc8] sm:$0xff]
    %v2013 = vld [vmem:[#allocation7 + $0xd0] sm:$0xff]
    %v2014 = vld [vmem:[#allocation7 + $0xd8] sm:$0xff]
    %v2015 = vld [vmem:[#allocation7 + $0xe0] sm:$0xff]
    %v2016 = vld [vmem:[#allocation7 + $0xe8] sm:$0xff]
    %v2017 = vld [vmem:[#allocation7 + $0xf0] sm:$0xff]
    %v2018 = vld [vmem:[#allocation7 + $0xf8] sm:$0xff]
    %v2019 = vld [vmem:[#allocation7 + $0x100] sm:$0xff]
    %v2020 = vld [vmem:[#allocation7 + $0x108] sm:$0xff]
    %v2021 = vld [vmem:[#allocation7 + $0x110] sm:$0xff]
    %v2022 = vld [vmem:[#allocation7 + $0x118] sm:$0xff]
    %v2023 = vld [vmem:[#allocation7 + $0x120] sm:$0xff]
    %v2024 = vld [vmem:[#allocation7 + $0x128] sm:$0xff]
    %v2025 = vld [vmem:[#allocation7 + $0x130] sm:$0xff]
    %v2026 = vld [vmem:[#allocation7 + $0x138] sm:$0xff]
    %v2027 = vld [vmem:[#allocation7 + $0x140] sm:$0xff]
    %v2028 = vld [vmem:[#allocation7 + $0x148] sm:$0xff]
    %v2029 = vld [vmem:[#allocation7 + $0x150] sm:$0xff]
    %v2030 = vld [vmem:[#allocation7 + $0x158] sm:$0xff]
    %v2031 = vld [vmem:[#allocation7 + $0x160] sm:$0xff]
    %v2032 = vld [vmem:[#allocation7 + $0x168] sm:$0xff]
    %v2033 = vld [vmem:[#allocation7 + $0x170] sm:$0xff]
    %v2034 = vld [vmem:[#allocation7 + $0x178] sm:$0xff]
    %v2035 = vld [vmem:[#allocation7 + $0x180] sm:$0xff]
    %v2036 = vld [vmem:[#allocation7 + $0x188] sm:$0xff]
    %v2037 = vld [vmem:[#allocation7 + $0x190] sm:$0xff]
    %v2038 = vld [vmem:[#allocation7 + $0x198] sm:$0xff]
    %v2039 = vld [vmem:[#allocation7 + $0x1a0] sm:$0xff]
    %v2040 = vld [vmem:[#allocation7 + $0x1a8] sm:$0xff]
    %v2041 = vld [vmem:[#allocation7 + $0x1b0] sm:$0xff]
    %v2042 = vld [vmem:[#allocation7 + $0x1b8] sm:$0xff]
    %v2043 = vld [vmem:[#allocation7 + $0x1c0] sm:$0xff]
    %v2044 = vld [vmem:[#allocation7 + $0x1c8] sm:$0xff]
    %v2045 = vld [vmem:[#allocation7 + $0x1d0] sm:$0xff]
    %v2046 = vld [vmem:[#allocation7 + $0x1d8] sm:$0xff]
    %v2047 = vld [vmem:[#allocation7 + $0x1e0] sm:$0xff]
    %v2048 = vld [vmem:[#allocation7 + $0x1e8] sm:$0xff]
    %v2049 = vld [vmem:[#allocation7 + $0x1f0] sm:$0xff]
    %v2050 = vld [vmem:[#allocation7 + $0x1f8] sm:$0xff]
    %v2051 = vld [vmem:[#allocation7 + $0x200] sm:$0xff]
    %v2052 = vld [vmem:[#allocation7 + $0x208] sm:$0xff]
    %v2053 = vld [vmem:[#allocation7 + $0x210] sm:$0xff]
    %v2054 = vld [vmem:[#allocation7 + $0x218] sm:$0xff]
    %v2055 = vld [vmem:[#allocation7 + $0x220] sm:$0xff]
    %v2056 = vld [vmem:[#allocation7 + $0x228] sm:$0xff]
    %v2057 = vld [vmem:[#allocation7 + $0x230] sm:$0xff]
    %v2058 = vld [vmem:[#allocation7 + $0x238] sm:$0xff]
    %v2059 = vld [vmem:[#allocation7 + $0x240] sm:$0xff]
    %v2060 = vld [vmem:[#allocation7 + $0x248] sm:$0xff]
    %v2061 = vld [vmem:[#allocation7 + $0x250] sm:$0xff]
    %v2062 = vld [vmem:[#allocation7 + $0x258] sm:$0xff]
    %v2063 = vld [vmem:[#allocation7 + $0x260] sm:$0xff]
    %v2064 = vld [vmem:[#allocation7 + $0x268] sm:$0xff]
    %v2065 = vld [vmem:[#allocation7 + $0x270] sm:$0xff]
    %v2066 = vld [vmem:[#allocation7 + $0x278] sm:$0xff]
    %v2067 = vld [vmem:[#allocation7 + $0x280] sm:$0xff]
    %v2068 = vld [vmem:[#allocation7 + $0x288] sm:$0xff]
    %v2069 = vld [vmem:[#allocation7 + $0x290] sm:$0xff]
    %v2070 = vld [vmem:[#allocation7 + $0x298] sm:$0xff]
    %v2071 = vld [vmem:[#allocation7 + $0x2a0] sm:$0xff]
    %v2072 = vld [vmem:[#allocation7 + $0x2a8] sm:$0xff]
    %v2073 = vld [vmem:[#allocation7 + $0x2b0] sm:$0xff]
    %v2074 = vld [vmem:[#allocation7 + $0x2b8] sm:$0xff]
    %v2075 = vld [vmem:[#allocation7 + $0x2c0] sm:$0xff]
    %v2076 = vld [vmem:[#allocation7 + $0x2c8] sm:$0xff]
    %v2077 = vld [vmem:[#allocation7 + $0x2d0] sm:$0xff]
    %v2078 = vld [vmem:[#allocation7 + $0x2d8] sm:$0xff]
    %v2079 = vld [vmem:[#allocation7 + $0x2e0] sm:$0xff]
    %v2080 = vld [vmem:[#allocation7 + $0x2e8] sm:$0xff]
    %v2081 = vld [vmem:[#allocation7 + $0x2f0] sm:$0xff]
    %v2082 = vld [vmem:[#allocation7 + $0x2f8] sm:$0xff]
    %v2083 = vld [vmem:[#allocation7 + $0x300] sm:$0xff]
    %v2084 = vld [vmem:[#allocation7 + $0x308] sm:$0xff]
    %v2085 = vld [vmem:[#allocation7 + $0x310] sm:$0xff]
    %v2086 = vld [vmem:[#allocation7 + $0x318] sm:$0xff]
    %v2087 = vld [vmem:[#allocation7 + $0x320] sm:$0xff]
    %v2088 = vld [vmem:[#allocation7 + $0x328] sm:$0xff]
    %v2089 = vld [vmem:[#allocation7 + $0x330] sm:$0xff]
    %v2090 = vld [vmem:[#allocation7 + $0x338] sm:$0xff]
    %v2091 = vld [vmem:[#allocation7 + $0x340] sm:$0xff]
    %v2092 = vld [vmem:[#allocation7 + $0x348] sm:$0xff]
    %v2093 = vld [vmem:[#allocation7 + $0x350] sm:$0xff]
    %v2094 = vld [vmem:[#allocation7 + $0x358] sm:$0xff]
    %v2095 = vld [vmem:[#allocation7 + $0x360] sm:$0xff]
    %v2096 = vld [vmem:[#allocation7 + $0x368] sm:$0xff]
    %v2097 = vld [vmem:[#allocation7 + $0x370] sm:$0xff]
    %v2098 = vld [vmem:[#allocation7 + $0x378] sm:$0xff]
    %v2099 = vld [vmem:[#allocation7 + $0x380] sm:$0xff]
    %v2100 = vld [vmem:[#allocation7 + $0x388] sm:$0xff]
    %v2101 = vld [vmem:[#allocation7 + $0x390] sm:$0xff]
    %v2102 = vld [vmem:[#allocation7 + $0x398] sm:$0xff]
    %v2103 = vld [vmem:[#allocation7 + $0x3a0] sm:$0xff]
    %v2104 = vld [vmem:[#allocation7 + $0x3a8] sm:$0xff]
    %v2105 = vld [vmem:[#allocation7 + $0x3b0] sm:$0xff]
    %v2106 = vld [vmem:[#allocation7 + $0x3b8] sm:$0xff]
    %v2107 = vld [vmem:[#allocation7 + $0x3c0] sm:$0xff]
    %v2108 = vld [vmem:[#allocation7 + $0x3c8] sm:$0xff]
    %v2109 = vld [vmem:[#allocation7 + $0x3d0] sm:$0xff]
    %v2110 = vld [vmem:[#allocation7 + $0x3d8] sm:$0xff]
    %v2111 = vld [vmem:[#allocation7 + $0x3e0] sm:$0xff]
    %v2112 = vld [vmem:[#allocation7 + $0x3e8] sm:$0xff]
    %v2113 = vld [vmem:[#allocation7 + $0x3f0] sm:$0xff]
    %v2114 = vld [vmem:[#allocation7 + $0x3f8] sm:$0xff]
    %v2115 = vld [vmem:[#allocation7 + $0x400] sm:$0xff]
    %v2116 = vld [vmem:[#allocation7 + $0x408] sm:$0xff]
    %v2117 = vld [vmem:[#allocation7 + $0x410] sm:$0xff]
    %v2118 = vld [vmem:[#allocation7 + $0x418] sm:$0xff]
    %v2119 = vld [vmem:[#allocation7 + $0x420] sm:$0xff]
    %v2120 = vld [vmem:[#allocation7 + $0x428] sm:$0xff]
    %v2121 = vld [vmem:[#allocation7 + $0x430] sm:$0xff]
    %v2122 = vld [vmem:[#allocation7 + $0x438] sm:$0xff]
    %v2123 = vld [vmem:[#allocation7 + $0x440] sm:$0xff]
    %v2124 = vld [vmem:[#allocation7 + $0x448] sm:$0xff]
    %v2125 = vld [vmem:[#allocation7 + $0x450] sm:$0xff]
    %v2126 = vld [vmem:[#allocation7 + $0x458] sm:$0xff]
    %v2127 = vld [vmem:[#allocation7 + $0x460] sm:$0xff]
    %v2128 = vld [vmem:[#allocation7 + $0x468] sm:$0xff]
    %v2129 = vld [vmem:[#allocation7 + $0x470] sm:$0xff]
    %v2130 = vld [vmem:[#allocation7 + $0x478] sm:$0xff]
    %v2131 = vld [vmem:[#allocation7 + $0x480] sm:$0xff]
    %v2132 = vld [vmem:[#allocation7 + $0x488] sm:$0xff]
    %v2133 = vld [vmem:[#allocation7 + $0x490] sm:$0xff]
    %v2134 = vld [vmem:[#allocation7 + $0x498] sm:$0xff]
    %v2135 = vld [vmem:[#allocation7 + $0x4a0] sm:$0xff]
    %v2136 = vld [vmem:[#allocation7 + $0x4a8] sm:$0xff]
    %v2137 = vld [vmem:[#allocation7 + $0x4b0] sm:$0xff]
    %v2138 = vld [vmem:[#allocation7 + $0x4b8] sm:$0xff]
    %v2139 = vld [vmem:[#allocation7 + $0x4c0] sm:$0xff]
    %v2140 = vld [vmem:[#allocation7 + $0x4c8] sm:$0xff]
    %v2141 = vld [vmem:[#allocation7 + $0x4d0] sm:$0xff]
    %v2142 = vld [vmem:[#allocation7 + $0x4d8] sm:$0xff]
    %v2143 = vld [vmem:[#allocation7 + $0x4e0] sm:$0xff]
    %v2144 = vld [vmem:[#allocation7 + $0x4e8] sm:$0xff]
    %v2145 = vld [vmem:[#allocation7 + $0x4f0] sm:$0xff]
    %v2146 = vld [vmem:[#allocation7 + $0x4f8] sm:$0xff]
    %v2147 = vld [vmem:[#allocation7 + $0x500] sm:$0xff]
    %v2148 = vld [vmem:[#allocation7 + $0x508] sm:$0xff]
    %v2149 = vld [vmem:[#allocation7 + $0x510] sm:$0xff]
    %v2150 = vld [vmem:[#allocation7 + $0x518] sm:$0xff]
    %v2151 = vld [vmem:[#allocation7 + $0x520] sm:$0xff]
    %v2152 = vld [vmem:[#allocation7 + $0x528] sm:$0xff]
    %v2153 = vld [vmem:[#allocation7 + $0x530] sm:$0xff]
    %v2154 = vld [vmem:[#allocation7 + $0x538] sm:$0xff]
    %v2155 = vld [vmem:[#allocation7 + $0x540] sm:$0xff]
    %v2156 = vld [vmem:[#allocation7 + $0x548] sm:$0xff]
    %v2157 = vld [vmem:[#allocation7 + $0x550] sm:$0xff]
    %v2158 = vld [vmem:[#allocation7 + $0x558] sm:$0xff]
    %v2159 = vld [vmem:[#allocation7 + $0x560] sm:$0xff]
    %v2160 = vld [vmem:[#allocation7 + $0x568] sm:$0xff]
    %v2161 = vld [vmem:[#allocation7 + $0x570] sm:$0xff]
    %v2162 = vld [vmem:[#allocation7 + $0x578] sm:$0xff]
    %v2163 = vld [vmem:[#allocation7 + $0x580] sm:$0xff]
    %v2164 = vld [vmem:[#allocation7 + $0x588] sm:$0xff]
    %v2165 = vld [vmem:[#allocation7 + $0x590] sm:$0xff]
    %v2166 = vld [vmem:[#allocation7 + $0x598] sm:$0xff]
    %v2167 = vld [vmem:[#allocation7 + $0x5a0] sm:$0xff]
    %v2168 = vld [vmem:[#allocation7 + $0x5a8] sm:$0xff]
    %v2169 = vld [vmem:[#allocation7 + $0x5b0] sm:$0xff]
    %v2170 = vld [vmem:[#allocation7 + $0x5b8] sm:$0xff]
    %v2171 = vld [vmem:[#allocation7 + $0x5c0] sm:$0xff]
    %v2172 = vld [vmem:[#allocation7 + $0x5c8] sm:$0xff]
    %v2173 = vld [vmem:[#allocation7 + $0x5d0] sm:$0xff]
    %v2174 = vld [vmem:[#allocation7 + $0x5d8] sm:$0xff]
    %v2175 = vld [vmem:[#allocation7 + $0x5e0] sm:$0xff]
    %v2176 = vld [vmem:[#allocation7 + $0x5e8] sm:$0xff]
    %v2177 = vld [vmem:[#allocation7 + $0x5f0] sm:$0xff]
    %v2178 = vld [vmem:[#allocation7 + $0x5f8] sm:$0xff]
    %v2179 = vld [vmem:[#allocation8] sm:$0xff]
    %v2180 = vld [vmem:[#allocation8 + $0x8] sm:$0xff]
    %v2181 = vld [vmem:[#allocation8 + $0x10] sm:$0xff]
    %v2182 = vld [vmem:[#allocation8 + $0x18] sm:$0xff]
    %v2183 = vld [vmem:[#allocation8 + $0x20] sm:$0xff]
    %v2184 = vld [vmem:[#allocation8 + $0x28] sm:$0xff]
    %v2185 = vld [vmem:[#allocation8 + $0x30] sm:$0xff]
    %v2186 = vld [vmem:[#allocation8 + $0x38] sm:$0xff]
    %v2187 = vld [vmem:[#allocation8 + $0x40] sm:$0xff]
    %v2188 = vld [vmem:[#allocation8 + $0x48] sm:$0xff]
    %v2189 = vld [vmem:[#allocation8 + $0x50] sm:$0xff]
    %v2190 = vld [vmem:[#allocation8 + $0x58] sm:$0xff]
    %v2191 = vld [vmem:[#allocation8 + $0x60] sm:$0xff]
    %v2192 = vld [vmem:[#allocation8 + $0x68] sm:$0xff]
    %v2193 = vld [vmem:[#allocation8 + $0x70] sm:$0xff]
    %v2194 = vld [vmem:[#allocation8 + $0x78] sm:$0xff]
    %v2195 = vld [vmem:[#allocation8 + $0x80] sm:$0xff]
    %v2196 = vld [vmem:[#allocation8 + $0x88] sm:$0xff]
    %v2197 = vld [vmem:[#allocation8 + $0x90] sm:$0xff]
    %v2198 = vld [vmem:[#allocation8 + $0x98] sm:$0xff]
    %v2199 = vld [vmem:[#allocation8 + $0xa0] sm:$0xff]
    %v2200 = vld [vmem:[#allocation8 + $0xa8] sm:$0xff]
    %v2201 = vld [vmem:[#allocation8 + $0xb0] sm:$0xff]
    %v2202 = vld [vmem:[#allocation8 + $0xb8] sm:$0xff]
    %v2203 = vld [vmem:[#allocation8 + $0xc0] sm:$0xff]
    %v2204 = vld [vmem:[#allocation8 + $0xc8] sm:$0xff]
    %v2205 = vld [vmem:[#allocation8 + $0xd0] sm:$0xff]
    %v2206 = vld [vmem:[#allocation8 + $0xd8] sm:$0xff]
    %v2207 = vld [vmem:[#allocation8 + $0xe0] sm:$0xff]
    %v2208 = vld [vmem:[#allocation8 + $0xe8] sm:$0xff]
    %v2209 = vld [vmem:[#allocation8 + $0xf0] sm:$0xff]
    %v2210 = vld [vmem:[#allocation8 + $0xf8] sm:$0xff]
    %v2211 = vld [vmem:[#allocation8 + $0x100] sm:$0xff]
    %v2212 = vld [vmem:[#allocation8 + $0x108] sm:$0xff]
    %v2213 = vld [vmem:[#allocation8 + $0x110] sm:$0xff]
    %v2214 = vld [vmem:[#allocation8 + $0x118] sm:$0xff]
    %v2215 = vld [vmem:[#allocation8 + $0x120] sm:$0xff]
    %v2216 = vld [vmem:[#allocation8 + $0x128] sm:$0xff]
    %v2217 = vld [vmem:[#allocation8 + $0x130] sm:$0xff]
    %v2218 = vld [vmem:[#allocation8 + $0x138] sm:$0xff]
    %v2219 = vld [vmem:[#allocation8 + $0x140] sm:$0xff]
    %v2220 = vld [vmem:[#allocation8 + $0x148] sm:$0xff]
    %v2221 = vld [vmem:[#allocation8 + $0x150] sm:$0xff]
    %v2222 = vld [vmem:[#allocation8 + $0x158] sm:$0xff]
    %v2223 = vld [vmem:[#allocation8 + $0x160] sm:$0xff]
    %v2224 = vld [vmem:[#allocation8 + $0x168] sm:$0xff]
    %v2225 = vld [vmem:[#allocation8 + $0x170] sm:$0xff]
    %v2226 = vld [vmem:[#allocation8 + $0x178] sm:$0xff]
    %v2227 = vld [vmem:[#allocation8 + $0x180] sm:$0xff]
    %v2228 = vld [vmem:[#allocation8 + $0x188] sm:$0xff]
    %v2229 = vld [vmem:[#allocation8 + $0x190] sm:$0xff]
    %v2230 = vld [vmem:[#allocation8 + $0x198] sm:$0xff]
    %v2231 = vld [vmem:[#allocation8 + $0x1a0] sm:$0xff]
    %v2232 = vld [vmem:[#allocation8 + $0x1a8] sm:$0xff]
    %v2233 = vld [vmem:[#allocation8 + $0x1b0] sm:$0xff]
    %v2234 = vld [vmem:[#allocation8 + $0x1b8] sm:$0xff]
    %v2235 = vld [vmem:[#allocation8 + $0x1c0] sm:$0xff]
    %v2236 = vld [vmem:[#allocation8 + $0x1c8] sm:$0xff]
    %v2237 = vld [vmem:[#allocation8 + $0x1d0] sm:$0xff]
    %v2238 = vld [vmem:[#allocation8 + $0x1d8] sm:$0xff]
    %v2239 = vld [vmem:[#allocation8 + $0x1e0] sm:$0xff]
    %v2240 = vld [vmem:[#allocation8 + $0x1e8] sm:$0xff]
    %v2241 = vld [vmem:[#allocation8 + $0x1f0] sm:$0xff]
    %v2242 = vld [vmem:[#allocation8 + $0x1f8] sm:$0xff]
    %v2243 = vld [vmem:[#allocation8 + $0x200] sm:$0xff]
    %v2244 = vld [vmem:[#allocation8 + $0x208] sm:$0xff]
    %v2245 = vld [vmem:[#allocation8 + $0x210] sm:$0xff]
    %v2246 = vld [vmem:[#allocation8 + $0x218] sm:$0xff]
    %v2247 = vld [vmem:[#allocation8 + $0x220] sm:$0xff]
    %v2248 = vld [vmem:[#allocation8 + $0x228] sm:$0xff]
    %v2249 = vld [vmem:[#allocation8 + $0x230] sm:$0xff]
    %v2250 = vld [vmem:[#allocation8 + $0x238] sm:$0xff]
    %v2251 = vld [vmem:[#allocation8 + $0x240] sm:$0xff]
    %v2252 = vld [vmem:[#allocation8 + $0x248] sm:$0xff]
    %v2253 = vld [vmem:[#allocation8 + $0x250] sm:$0xff]
    %v2254 = vld [vmem:[#allocation8 + $0x258] sm:$0xff]
    %v2255 = vld [vmem:[#allocation8 + $0x260] sm:$0xff]
    %v2256 = vld [vmem:[#allocation8 + $0x268] sm:$0xff]
    %v2257 = vld [vmem:[#allocation8 + $0x270] sm:$0xff]
    %v2258 = vld [vmem:[#allocation8 + $0x278] sm:$0xff]
    %v2259 = vld [vmem:[#allocation8 + $0x280] sm:$0xff]
    %v2260 = vld [vmem:[#allocation8 + $0x288] sm:$0xff]
    %v2261 = vld [vmem:[#allocation8 + $0x290] sm:$0xff]
    %v2262 = vld [vmem:[#allocation8 + $0x298] sm:$0xff]
    %v2263 = vld [vmem:[#allocation8 + $0x2a0] sm:$0xff]
    %v2264 = vld [vmem:[#allocation8 + $0x2a8] sm:$0xff]
    %v2265 = vld [vmem:[#allocation8 + $0x2b0] sm:$0xff]
    %v2266 = vld [vmem:[#allocation8 + $0x2b8] sm:$0xff]
    %v2267 = vld [vmem:[#allocation8 + $0x2c0] sm:$0xff]
    %v2268 = vld [vmem:[#allocation8 + $0x2c8] sm:$0xff]
    %v2269 = vld [vmem:[#allocation8 + $0x2d0] sm:$0xff]
    %v2270 = vld [vmem:[#allocation8 + $0x2d8] sm:$0xff]
    %v2271 = vld [vmem:[#allocation8 + $0x2e0] sm:$0xff]
    %v2272 = vld [vmem:[#allocation8 + $0x2e8] sm:$0xff]
    %v2273 = vld [vmem:[#allocation8 + $0x2f0] sm:$0xff]
    %v2274 = vld [vmem:[#allocation8 + $0x2f8] sm:$0xff]
    %v2275 = vld [vmem:[#allocation8 + $0x300] sm:$0xff]
    %v2276 = vld [vmem:[#allocation8 + $0x308] sm:$0xff]
    %v2277 = vld [vmem:[#allocation8 + $0x310] sm:$0xff]
    %v2278 = vld [vmem:[#allocation8 + $0x318] sm:$0xff]
    %v2279 = vld [vmem:[#allocation8 + $0x320] sm:$0xff]
    %v2280 = vld [vmem:[#allocation8 + $0x328] sm:$0xff]
    %v2281 = vld [vmem:[#allocation8 + $0x330] sm:$0xff]
    %v2282 = vld [vmem:[#allocation8 + $0x338] sm:$0xff]
    %v2283 = vld [vmem:[#allocation8 + $0x340] sm:$0xff]
    %v2284 = vld [vmem:[#allocation8 + $0x348] sm:$0xff]
    %v2285 = vld [vmem:[#allocation8 + $0x350] sm:$0xff]
    %v2286 = vld [vmem:[#allocation8 + $0x358] sm:$0xff]
    %v2287 = vld [vmem:[#allocation8 + $0x360] sm:$0xff]
    %v2288 = vld [vmem:[#allocation8 + $0x368] sm:$0xff]
    %v2289 = vld [vmem:[#allocation8 + $0x370] sm:$0xff]
    %v2290 = vld [vmem:[#allocation8 + $0x378] sm:$0xff]
    %v2291 = vld [vmem:[#allocation8 + $0x380] sm:$0xff]
    %v2292 = vld [vmem:[#allocation8 + $0x388] sm:$0xff]
    %v2293 = vld [vmem:[#allocation8 + $0x390] sm:$0xff]
    %v2294 = vld [vmem:[#allocation8 + $0x398] sm:$0xff]
    %v2295 = vld [vmem:[#allocation8 + $0x3a0] sm:$0xff]
    %v2296 = vld [vmem:[#allocation8 + $0x3a8] sm:$0xff]
    %v2297 = vld [vmem:[#allocation8 + $0x3b0] sm:$0xff]
    %v2298 = vld [vmem:[#allocation8 + $0x3b8] sm:$0xff]
    %v2299 = vld [vmem:[#allocation8 + $0x3c0] sm:$0xff]
    %v2300 = vld [vmem:[#allocation8 + $0x3c8] sm:$0xff]
    %v2301 = vld [vmem:[#allocation8 + $0x3d0] sm:$0xff]
    %v2302 = vld [vmem:[#allocation8 + $0x3d8] sm:$0xff]
    %v2303 = vld [vmem:[#allocation8 + $0x3e0] sm:$0xff]
    %v2304 = vld [vmem:[#allocation8 + $0x3e8] sm:$0xff]
    %v2305 = vld [vmem:[#allocation8 + $0x3f0] sm:$0xff]
    %v2306 = vld [vmem:[#allocation8 + $0x3f8] sm:$0xff]
    %v2307 = vld [vmem:[#allocation8 + $0x400] sm:$0xff]
    %v2308 = vld [vmem:[#allocation8 + $0x408] sm:$0xff]
    %v2309 = vld [vmem:[#allocation8 + $0x410] sm:$0xff]
    %v2310 = vld [vmem:[#allocation8 + $0x418] sm:$0xff]
    %v2311 = vld [vmem:[#allocation8 + $0x420] sm:$0xff]
    %v2312 = vld [vmem:[#allocation8 + $0x428] sm:$0xff]
    %v2313 = vld [vmem:[#allocation8 + $0x430] sm:$0xff]
    %v2314 = vld [vmem:[#allocation8 + $0x438] sm:$0xff]
    %v2315 = vld [vmem:[#allocation8 + $0x440] sm:$0xff]
    %v2316 = vld [vmem:[#allocation8 + $0x448] sm:$0xff]
    %v2317 = vld [vmem:[#allocation8 + $0x450] sm:$0xff]
    %v2318 = vld [vmem:[#allocation8 + $0x458] sm:$0xff]
    %v2319 = vld [vmem:[#allocation8 + $0x460] sm:$0xff]
    %v2320 = vld [vmem:[#allocation8 + $0x468] sm:$0xff]
    %v2321 = vld [vmem:[#allocation8 + $0x470] sm:$0xff]
    %v2322 = vld [vmem:[#allocation8 + $0x478] sm:$0xff]
    %v2323 = vld [vmem:[#allocation8 + $0x480] sm:$0xff]
    %v2324 = vld [vmem:[#allocation8 + $0x488] sm:$0xff]
    %v2325 = vld [vmem:[#allocation8 + $0x490] sm:$0xff]
    %v2326 = vld [vmem:[#allocation8 + $0x498] sm:$0xff]
    %v2327 = vld [vmem:[#allocation8 + $0x4a0] sm:$0xff]
    %v2328 = vld [vmem:[#allocation8 + $0x4a8] sm:$0xff]
    %v2329 = vld [vmem:[#allocation8 + $0x4b0] sm:$0xff]
    %v2330 = vld [vmem:[#allocation8 + $0x4b8] sm:$0xff]
    %v2331 = vld [vmem:[#allocation8 + $0x4c0] sm:$0xff]
    %v2332 = vld [vmem:[#allocation8 + $0x4c8] sm:$0xff]
    %v2333 = vld [vmem:[#allocation8 + $0x4d0] sm:$0xff]
    %v2334 = vld [vmem:[#allocation8 + $0x4d8] sm:$0xff]
    %v2335 = vld [vmem:[#allocation8 + $0x4e0] sm:$0xff]
    %v2336 = vld [vmem:[#allocation8 + $0x4e8] sm:$0xff]
    %v2337 = vld [vmem:[#allocation8 + $0x4f0] sm:$0xff]
    %v2338 = vld [vmem:[#allocation8 + $0x4f8] sm:$0xff]
    %v2339 = vld [vmem:[#allocation8 + $0x500] sm:$0xff]
    %v2340 = vld [vmem:[#allocation8 + $0x508] sm:$0xff]
    %v2341 = vld [vmem:[#allocation8 + $0x510] sm:$0xff]
    %v2342 = vld [vmem:[#allocation8 + $0x518] sm:$0xff]
    %v2343 = vld [vmem:[#allocation8 + $0x520] sm:$0xff]
    %v2344 = vld [vmem:[#allocation8 + $0x528] sm:$0xff]
    %v2345 = vld [vmem:[#allocation8 + $0x530] sm:$0xff]
    %v2346 = vld [vmem:[#allocation8 + $0x538] sm:$0xff]
    %v2347 = vld [vmem:[#allocation8 + $0x540] sm:$0xff]
    %v2348 = vld [vmem:[#allocation8 + $0x548] sm:$0xff]
    %v2349 = vld [vmem:[#allocation8 + $0x550] sm:$0xff]
    %v2350 = vld [vmem:[#allocation8 + $0x558] sm:$0xff]
    %v2351 = vld [vmem:[#allocation8 + $0x560] sm:$0xff]
    %v2352 = vld [vmem:[#allocation8 + $0x568] sm:$0xff]
    %v2353 = vld [vmem:[#allocation8 + $0x570] sm:$0xff]
    %v2354 = vld [vmem:[#allocation8 + $0x578] sm:$0xff]
    %v2355 = vld [vmem:[#allocation8 + $0x580] sm:$0xff]
    %v2356 = vld [vmem:[#allocation8 + $0x588] sm:$0xff]
    %v2357 = vld [vmem:[#allocation8 + $0x590] sm:$0xff]
    %v2358 = vld [vmem:[#allocation8 + $0x598] sm:$0xff]
    %v2359 = vld [vmem:[#allocation8 + $0x5a0] sm:$0xff]
    %v2360 = vld [vmem:[#allocation8 + $0x5a8] sm:$0xff]
    %v2361 = vld [vmem:[#allocation8 + $0x5b0] sm:$0xff]
    %v2362 = vld [vmem:[#allocation8 + $0x5b8] sm:$0xff]
    %v2363 = vld [vmem:[#allocation8 + $0x5c0] sm:$0xff]
    %v2364 = vld [vmem:[#allocation8 + $0x5c8] sm:$0xff]
    %v2365 = vld [vmem:[#allocation8 + $0x5d0] sm:$0xff]
    %v2366 = vld [vmem:[#allocation8 + $0x5d8] sm:$0xff]
    %v2367 = vld [vmem:[#allocation8 + $0x5e0] sm:$0xff]
    %v2368 = vld [vmem:[#allocation8 + $0x5e8] sm:$0xff]
    %v2369 = vld [vmem:[#allocation8 + $0x5f0] sm:$0xff]
    %v2370 = vld [vmem:[#allocation8 + $0x5f8] sm:$0xff]
    %v2563 = vunpack.c.l.b16 %v2179
    %v2564 = vunpack.c.h.b16 %v2179
    %v2565 = vunpack.c.l.b16 %v2180
    %v2566 = vunpack.c.h.b16 %v2180
    %v2567 = vunpack.c.l.b16 %v2181
    %v2568 = vunpack.c.h.b16 %v2181
    %v2569 = vunpack.c.l.b16 %v2182
    %v2570 = vunpack.c.h.b16 %v2182
    %v2571 = vunpack.c.l.b16 %v2183
    %v2572 = vunpack.c.h.b16 %v2183
    %v2573 = vunpack.c.l.b16 %v2184
    %v2574 = vunpack.c.h.b16 %v2184
    %v2575 = vunpack.c.l.b16 %v2185
    %v2576 = vunpack.c.h.b16 %v2185
    %v2577 = vunpack.c.l.b16 %v2186
    %v2578 = vunpack.c.h.b16 %v2186
    %v2579 = vunpack.c.l.b16 %v2187
    %v2580 = vunpack.c.h.b16 %v2187
    %v2581 = vunpack.c.l.b16 %v2188
    %v2582 = vunpack.c.h.b16 %v2188
    %v2583 = vunpack.c.l.b16 %v2189
    %v2584 = vunpack.c.h.b16 %v2189
    %v2585 = vunpack.c.l.b16 %v2190
    %v2586 = vunpack.c.h.b16 %v2190
    %v2587 = vunpack.c.l.b16 %v2191
    %v2588 = vunpack.c.h.b16 %v2191
    %v2589 = vunpack.c.l.b16 %v2192
    %v2590 = vunpack.c.h.b16 %v2192
    %v2591 = vunpack.c.l.b16 %v2193
    %v2592 = vunpack.c.h.b16 %v2193
    %v2593 = vunpack.c.l.b16 %v2194
    %v2594 = vunpack.c.h.b16 %v2194
    %v2595 = vunpack.c.l.b16 %v2195
    %v2596 = vunpack.c.h.b16 %v2195
    %v2597 = vunpack.c.l.b16 %v2196
    %v2598 = vunpack.c.h.b16 %v2196
    %v2599 = vunpack.c.l.b16 %v2197
    %v2600 = vunpack.c.h.b16 %v2197
    %v2601 = vunpack.c.l.b16 %v2198
    %v2602 = vunpack.c.h.b16 %v2198
    %v2603 = vunpack.c.l.b16 %v2199
    %v2604 = vunpack.c.h.b16 %v2199
    %v2605 = vunpack.c.l.b16 %v2200
    %v2606 = vunpack.c.h.b16 %v2200
    %v2607 = vunpack.c.l.b16 %v2201
    %v2608 = vunpack.c.h.b16 %v2201
    %v2609 = vunpack.c.l.b16 %v2202
    %v2610 = vunpack.c.h.b16 %v2202
    %v2611 = vunpack.c.l.b16 %v2203
    %v2612 = vunpack.c.h.b16 %v2203
    %v2613 = vunpack.c.l.b16 %v2204
    %v2614 = vunpack.c.h.b16 %v2204
    %v2615 = vunpack.c.l.b16 %v2205
    %v2616 = vunpack.c.h.b16 %v2205
    %v2617 = vunpack.c.l.b16 %v2206
    %v2618 = vunpack.c.h.b16 %v2206
    %v2619 = vunpack.c.l.b16 %v2207
    %v2620 = vunpack.c.h.b16 %v2207
    %v2621 = vunpack.c.l.b16 %v2208
    %v2622 = vunpack.c.h.b16 %v2208
    %v2623 = vunpack.c.l.b16 %v2209
    %v2624 = vunpack.c.h.b16 %v2209
    %v2625 = vunpack.c.l.b16 %v2210
    %v2626 = vunpack.c.h.b16 %v2210
    %v2627 = vunpack.c.l.b16 %v2211
    %v2628 = vunpack.c.h.b16 %v2211
    %v2629 = vunpack.c.l.b16 %v2212
    %v2630 = vunpack.c.h.b16 %v2212
    %v2631 = vunpack.c.l.b16 %v2213
    %v2632 = vunpack.c.h.b16 %v2213
    %v2633 = vunpack.c.l.b16 %v2214
    %v2634 = vunpack.c.h.b16 %v2214
    %v2635 = vunpack.c.l.b16 %v2215
    %v2636 = vunpack.c.h.b16 %v2215
    %v2637 = vunpack.c.l.b16 %v2216
    %v2638 = vunpack.c.h.b16 %v2216
    %v2639 = vunpack.c.l.b16 %v2217
    %v2640 = vunpack.c.h.b16 %v2217
    %v2641 = vunpack.c.l.b16 %v2218
    %v2642 = vunpack.c.h.b16 %v2218
    %v2643 = vunpack.c.l.b16 %v2219
    %v2644 = vunpack.c.h.b16 %v2219
    %v2645 = vunpack.c.l.b16 %v2220
    %v2646 = vunpack.c.h.b16 %v2220
    %v2647 = vunpack.c.l.b16 %v2221
    %v2648 = vunpack.c.h.b16 %v2221
    %v2649 = vunpack.c.l.b16 %v2222
    %v2650 = vunpack.c.h.b16 %v2222
    %v2651 = vunpack.c.l.b16 %v2223
    %v2652 = vunpack.c.h.b16 %v2223
    %v2653 = vunpack.c.l.b16 %v2224
    %v2654 = vunpack.c.h.b16 %v2224
    %v2655 = vunpack.c.l.b16 %v2225
    %v2656 = vunpack.c.h.b16 %v2225
    %v2657 = vunpack.c.l.b16 %v2226
    %v2658 = vunpack.c.h.b16 %v2226
    %v2659 = vunpack.c.l.b16 %v2227
    %v2660 = vunpack.c.h.b16 %v2227
    %v2661 = vunpack.c.l.b16 %v2228
    %v2662 = vunpack.c.h.b16 %v2228
    %v2663 = vunpack.c.l.b16 %v2229
    %v2664 = vunpack.c.h.b16 %v2229
    %v2665 = vunpack.c.l.b16 %v2230
    %v2666 = vunpack.c.h.b16 %v2230
    %v2667 = vunpack.c.l.b16 %v2231
    %v2668 = vunpack.c.h.b16 %v2231
    %v2669 = vunpack.c.l.b16 %v2232
    %v2670 = vunpack.c.h.b16 %v2232
    %v2671 = vunpack.c.l.b16 %v2233
    %v2672 = vunpack.c.h.b16 %v2233
    %v2673 = vunpack.c.l.b16 %v2234
    %v2674 = vunpack.c.h.b16 %v2234
    %v2675 = vunpack.c.l.b16 %v2235
    %v2676 = vunpack.c.h.b16 %v2235
    %v2677 = vunpack.c.l.b16 %v2236
    %v2678 = vunpack.c.h.b16 %v2236
    %v2679 = vunpack.c.l.b16 %v2237
    %v2680 = vunpack.c.h.b16 %v2237
    %v2681 = vunpack.c.l.b16 %v2238
    %v2682 = vunpack.c.h.b16 %v2238
    %v2683 = vunpack.c.l.b16 %v2239
    %v2684 = vunpack.c.h.b16 %v2239
    %v2685 = vunpack.c.l.b16 %v2240
    %v2686 = vunpack.c.h.b16 %v2240
    %v2687 = vunpack.c.l.b16 %v2241
    %v2688 = vunpack.c.h.b16 %v2241
    %v2689 = vunpack.c.l.b16 %v2242
    %v2690 = vunpack.c.h.b16 %v2242
    %v2691 = vunpack.c.l.b16 %v2243
    %v2692 = vunpack.c.h.b16 %v2243
    %v2693 = vunpack.c.l.b16 %v2244
    %v2694 = vunpack.c.h.b16 %v2244
    %v2695 = vunpack.c.l.b16 %v2245
    %v2696 = vunpack.c.h.b16 %v2245
    %v2697 = vunpack.c.l.b16 %v2246
    %v2698 = vunpack.c.h.b16 %v2246
    %v2699 = vunpack.c.l.b16 %v2247
    %v2700 = vunpack.c.h.b16 %v2247
    %v2701 = vunpack.c.l.b16 %v2248
    %v2702 = vunpack.c.h.b16 %v2248
    %v2703 = vunpack.c.l.b16 %v2249
    %v2704 = vunpack.c.h.b16 %v2249
    %v2705 = vunpack.c.l.b16 %v2250
    %v2706 = vunpack.c.h.b16 %v2250
    %v2707 = vunpack.c.l.b16 %v2251
    %v2708 = vunpack.c.h.b16 %v2251
    %v2709 = vunpack.c.l.b16 %v2252
    %v2710 = vunpack.c.h.b16 %v2252
    %v2711 = vunpack.c.l.b16 %v2253
    %v2712 = vunpack.c.h.b16 %v2253
    %v2713 = vunpack.c.l.b16 %v2254
    %v2714 = vunpack.c.h.b16 %v2254
    %v2715 = vunpack.c.l.b16 %v2255
    %v2716 = vunpack.c.h.b16 %v2255
    %v2717 = vunpack.c.l.b16 %v2256
    %v2718 = vunpack.c.h.b16 %v2256
    %v2719 = vunpack.c.l.b16 %v2257
    %v2720 = vunpack.c.h.b16 %v2257
    %v2721 = vunpack.c.l.b16 %v2258
    %v2722 = vunpack.c.h.b16 %v2258
    %v2723 = vunpack.c.l.b16 %v2259
    %v2724 = vunpack.c.h.b16 %v2259
    %v2725 = vunpack.c.l.b16 %v2260
    %v2726 = vunpack.c.h.b16 %v2260
    %v2727 = vunpack.c.l.b16 %v2261
    %v2728 = vunpack.c.h.b16 %v2261
    %v2729 = vunpack.c.l.b16 %v2262
    %v2730 = vunpack.c.h.b16 %v2262
    %v2731 = vunpack.c.l.b16 %v2263
    %v2732 = vunpack.c.h.b16 %v2263
    %v2733 = vunpack.c.l.b16 %v2264
    %v2734 = vunpack.c.h.b16 %v2264
    %v2735 = vunpack.c.l.b16 %v2265
    %v2736 = vunpack.c.h.b16 %v2265
    %v2737 = vunpack.c.l.b16 %v2266
    %v2738 = vunpack.c.h.b16 %v2266
    %v2739 = vunpack.c.l.b16 %v2267
    %v2740 = vunpack.c.h.b16 %v2267
    %v2741 = vunpack.c.l.b16 %v2268
    %v2742 = vunpack.c.h.b16 %v2268
    %v2743 = vunpack.c.l.b16 %v2269
    %v2744 = vunpack.c.h.b16 %v2269
    %v2745 = vunpack.c.l.b16 %v2270
    %v2746 = vunpack.c.h.b16 %v2270
    %v2747 = vunpack.c.l.b16 %v2271
    %v2748 = vunpack.c.h.b16 %v2271
    %v2749 = vunpack.c.l.b16 %v2272
    %v2750 = vunpack.c.h.b16 %v2272
    %v2751 = vunpack.c.l.b16 %v2273
    %v2752 = vunpack.c.h.b16 %v2273
    %v2753 = vunpack.c.l.b16 %v2274
    %v2754 = vunpack.c.h.b16 %v2274
    %v2755 = vunpack.c.l.b16 %v2275
    %v2756 = vunpack.c.h.b16 %v2275
    %v2757 = vunpack.c.l.b16 %v2276
    %v2758 = vunpack.c.h.b16 %v2276
    %v2759 = vunpack.c.l.b16 %v2277
    %v2760 = vunpack.c.h.b16 %v2277
    %v2761 = vunpack.c.l.b16 %v2278
    %v2762 = vunpack.c.h.b16 %v2278
    %v2763 = vunpack.c.l.b16 %v2279
    %v2764 = vunpack.c.h.b16 %v2279
    %v2765 = vunpack.c.l.b16 %v2280
    %v2766 = vunpack.c.h.b16 %v2280
    %v2767 = vunpack.c.l.b16 %v2281
    %v2768 = vunpack.c.h.b16 %v2281
    %v2769 = vunpack.c.l.b16 %v2282
    %v2770 = vunpack.c.h.b16 %v2282
    %v2771 = vunpack.c.l.b16 %v2283
    %v2772 = vunpack.c.h.b16 %v2283
    %v2773 = vunpack.c.l.b16 %v2284
    %v2774 = vunpack.c.h.b16 %v2284
    %v2775 = vunpack.c.l.b16 %v2285
    %v2776 = vunpack.c.h.b16 %v2285
    %v2777 = vunpack.c.l.b16 %v2286
    %v2778 = vunpack.c.h.b16 %v2286
    %v2779 = vunpack.c.l.b16 %v2287
    %v2780 = vunpack.c.h.b16 %v2287
    %v2781 = vunpack.c.l.b16 %v2288
    %v2782 = vunpack.c.h.b16 %v2288
    %v2783 = vunpack.c.l.b16 %v2289
    %v2784 = vunpack.c.h.b16 %v2289
    %v2785 = vunpack.c.l.b16 %v2290
    %v2786 = vunpack.c.h.b16 %v2290
    %v2787 = vunpack.c.l.b16 %v2291
    %v2788 = vunpack.c.h.b16 %v2291
    %v2789 = vunpack.c.l.b16 %v2292
    %v2790 = vunpack.c.h.b16 %v2292
    %v2791 = vunpack.c.l.b16 %v2293
    %v2792 = vunpack.c.h.b16 %v2293
    %v2793 = vunpack.c.l.b16 %v2294
    %v2794 = vunpack.c.h.b16 %v2294
    %v2795 = vunpack.c.l.b16 %v2295
    %v2796 = vunpack.c.h.b16 %v2295
    %v2797 = vunpack.c.l.b16 %v2296
    %v2798 = vunpack.c.h.b16 %v2296
    %v2799 = vunpack.c.l.b16 %v2297
    %v2800 = vunpack.c.h.b16 %v2297
    %v2801 = vunpack.c.l.b16 %v2298
    %v2802 = vunpack.c.h.b16 %v2298
    %v2803 = vunpack.c.l.b16 %v2299
    %v2804 = vunpack.c.h.b16 %v2299
    %v2805 = vunpack.c.l.b16 %v2300
    %v2806 = vunpack.c.h.b16 %v2300
    %v2807 = vunpack.c.l.b16 %v2301
    %v2808 = vunpack.c.h.b16 %v2301
    %v2809 = vunpack.c.l.b16 %v2302
    %v2810 = vunpack.c.h.b16 %v2302
    %v2811 = vunpack.c.l.b16 %v2303
    %v2812 = vunpack.c.h.b16 %v2303
    %v2813 = vunpack.c.l.b16 %v2304
    %v2814 = vunpack.c.h.b16 %v2304
    %v2815 = vunpack.c.l.b16 %v2305
    %v2816 = vunpack.c.h.b16 %v2305
    %v2817 = vunpack.c.l.b16 %v2306
    %v2818 = vunpack.c.h.b16 %v2306
    %v2819 = vunpack.c.l.b16 %v2307
    %v2820 = vunpack.c.h.b16 %v2307
    %v2821 = vunpack.c.l.b16 %v2308
    %v2822 = vunpack.c.h.b16 %v2308
    %v2823 = vunpack.c.l.b16 %v2309
    %v2824 = vunpack.c.h.b16 %v2309
    %v2825 = vunpack.c.l.b16 %v2310
    %v2826 = vunpack.c.h.b16 %v2310
    %v2827 = vunpack.c.l.b16 %v2311
    %v2828 = vunpack.c.h.b16 %v2311
    %v2829 = vunpack.c.l.b16 %v2312
    %v2830 = vunpack.c.h.b16 %v2312
    %v2831 = vunpack.c.l.b16 %v2313
    %v2832 = vunpack.c.h.b16 %v2313
    %v2833 = vunpack.c.l.b16 %v2314
    %v2834 = vunpack.c.h.b16 %v2314
    %v2835 = vunpack.c.l.b16 %v2315
    %v2836 = vunpack.c.h.b16 %v2315
    %v2837 = vunpack.c.l.b16 %v2316
    %v2838 = vunpack.c.h.b16 %v2316
    %v2839 = vunpack.c.l.b16 %v2317
    %v2840 = vunpack.c.h.b16 %v2317
    %v2841 = vunpack.c.l.b16 %v2318
    %v2842 = vunpack.c.h.b16 %v2318
    %v2843 = vunpack.c.l.b16 %v2319
    %v2844 = vunpack.c.h.b16 %v2319
    %v2845 = vunpack.c.l.b16 %v2320
    %v2846 = vunpack.c.h.b16 %v2320
    %v2847 = vunpack.c.l.b16 %v2321
    %v2848 = vunpack.c.h.b16 %v2321
    %v2849 = vunpack.c.l.b16 %v2322
    %v2850 = vunpack.c.h.b16 %v2322
    %v2851 = vunpack.c.l.b16 %v2323
    %v2852 = vunpack.c.h.b16 %v2323
    %v2853 = vunpack.c.l.b16 %v2324
    %v2854 = vunpack.c.h.b16 %v2324
    %v2855 = vunpack.c.l.b16 %v2325
    %v2856 = vunpack.c.h.b16 %v2325
    %v2857 = vunpack.c.l.b16 %v2326
    %v2858 = vunpack.c.h.b16 %v2326
    %v2859 = vunpack.c.l.b16 %v2327
    %v2860 = vunpack.c.h.b16 %v2327
    %v2861 = vunpack.c.l.b16 %v2328
    %v2862 = vunpack.c.h.b16 %v2328
    %v2863 = vunpack.c.l.b16 %v2329
    %v2864 = vunpack.c.h.b16 %v2329
    %v2865 = vunpack.c.l.b16 %v2330
    %v2866 = vunpack.c.h.b16 %v2330
    %v2867 = vunpack.c.l.b16 %v2331
    %v2868 = vunpack.c.h.b16 %v2331
    %v2869 = vunpack.c.l.b16 %v2332
    %v2870 = vunpack.c.h.b16 %v2332
    %v2871 = vunpack.c.l.b16 %v2333
    %v2872 = vunpack.c.h.b16 %v2333
    %v2873 = vunpack.c.l.b16 %v2334
    %v2874 = vunpack.c.h.b16 %v2334
    %v2875 = vunpack.c.l.b16 %v2335
    %v2876 = vunpack.c.h.b16 %v2335
    %v2877 = vunpack.c.l.b16 %v2336
    %v2878 = vunpack.c.h.b16 %v2336
    %v2879 = vunpack.c.l.b16 %v2337
    %v2880 = vunpack.c.h.b16 %v2337
    %v2881 = vunpack.c.l.b16 %v2338
    %v2882 = vunpack.c.h.b16 %v2338
    %v2883 = vunpack.c.l.b16 %v2339
    %v2884 = vunpack.c.h.b16 %v2339
    %v2885 = vunpack.c.l.b16 %v2340
    %v2886 = vunpack.c.h.b16 %v2340
    %v2887 = vunpack.c.l.b16 %v2341
    %v2888 = vunpack.c.h.b16 %v2341
    %v2889 = vunpack.c.l.b16 %v2342
    %v2890 = vunpack.c.h.b16 %v2342
    %v2891 = vunpack.c.l.b16 %v2343
    %v2892 = vunpack.c.h.b16 %v2343
    %v2893 = vunpack.c.l.b16 %v2344
    %v2894 = vunpack.c.h.b16 %v2344
    %v2895 = vunpack.c.l.b16 %v2345
    %v2896 = vunpack.c.h.b16 %v2345
    %v2897 = vunpack.c.l.b16 %v2346
    %v2898 = vunpack.c.h.b16 %v2346
    %v2899 = vunpack.c.l.b16 %v2347
    %v2900 = vunpack.c.h.b16 %v2347
    %v2901 = vunpack.c.l.b16 %v2348
    %v2902 = vunpack.c.h.b16 %v2348
    %v2903 = vunpack.c.l.b16 %v2349
    %v2904 = vunpack.c.h.b16 %v2349
    %v2905 = vunpack.c.l.b16 %v2350
    %v2906 = vunpack.c.h.b16 %v2350
    %v2907 = vunpack.c.l.b16 %v2351
    %v2908 = vunpack.c.h.b16 %v2351
    %v2909 = vunpack.c.l.b16 %v2352
    %v2910 = vunpack.c.h.b16 %v2352
    %v2911 = vunpack.c.l.b16 %v2353
    %v2912 = vunpack.c.h.b16 %v2353
    %v2913 = vunpack.c.l.b16 %v2354
    %v2914 = vunpack.c.h.b16 %v2354
    %v2915 = vunpack.c.l.b16 %v2355
    %v2916 = vunpack.c.h.b16 %v2355
    %v2917 = vunpack.c.l.b16 %v2356
    %v2918 = vunpack.c.h.b16 %v2356
    %v2919 = vunpack.c.l.b16 %v2357
    %v2920 = vunpack.c.h.b16 %v2357
    %v2921 = vunpack.c.l.b16 %v2358
    %v2922 = vunpack.c.h.b16 %v2358
    %v2923 = vunpack.c.l.b16 %v2359
    %v2924 = vunpack.c.h.b16 %v2359
    %v2925 = vunpack.c.l.b16 %v2360
    %v2926 = vunpack.c.h.b16 %v2360
    %v2927 = vunpack.c.l.b16 %v2361
    %v2928 = vunpack.c.h.b16 %v2361
    %v2929 = vunpack.c.l.b16 %v2362
    %v2930 = vunpack.c.h.b16 %v2362
    %v2931 = vunpack.c.l.b16 %v2363
    %v2932 = vunpack.c.h.b16 %v2363
    %v2933 = vunpack.c.l.b16 %v2364
    %v2934 = vunpack.c.h.b16 %v2364
    %v2935 = vunpack.c.l.b16 %v2365
    %v2936 = vunpack.c.h.b16 %v2365
    %v2937 = vunpack.c.l.b16 %v2366
    %v2938 = vunpack.c.h.b16 %v2366
    %v2939 = vunpack.c.l.b16 %v2367
    %v2940 = vunpack.c.h.b16 %v2367
    %v2941 = vunpack.c.l.b16 %v2368
    %v2942 = vunpack.c.h.b16 %v2368
    %v2943 = vunpack.c.l.b16 %v2369
    %v2944 = vunpack.c.h.b16 %v2369
    %v2945 = vunpack.c.l.b16 %v2370
    %v2946 = vunpack.c.h.b16 %v2370
    %v2947 = vpack.c.b16 %v2567, %v2563
    %v2948 = vpack.c.b16 %v2568, %v2564
    %v2949 = vpack.c.b16 %v2569, %v2565
    %v2950 = vpack.c.b16 %v2570, %v2566
    %v2951 = vpack.c.b16 %v2575, %v2571
    %v2952 = vpack.c.b16 %v2576, %v2572
    %v2953 = vpack.c.b16 %v2577, %v2573
    %v2954 = vpack.c.b16 %v2578, %v2574
    %v2955 = vpack.c.b16 %v2583, %v2579
    %v2956 = vpack.c.b16 %v2584, %v2580
    %v2957 = vpack.c.b16 %v2585, %v2581
    %v2958 = vpack.c.b16 %v2586, %v2582
    %v2959 = vpack.c.b16 %v2591, %v2587
    %v2960 = vpack.c.b16 %v2592, %v2588
    %v2961 = vpack.c.b16 %v2593, %v2589
    %v2962 = vpack.c.b16 %v2594, %v2590
    %v2963 = vpack.c.b16 %v2599, %v2595
    %v2964 = vpack.c.b16 %v2600, %v2596
    %v2965 = vpack.c.b16 %v2601, %v2597
    %v2966 = vpack.c.b16 %v2602, %v2598
    %v2967 = vpack.c.b16 %v2607, %v2603
    %v2968 = vpack.c.b16 %v2608, %v2604
    %v2969 = vpack.c.b16 %v2609, %v2605
    %v2970 = vpack.c.b16 %v2610, %v2606
    %v2971 = vpack.c.b16 %v2615, %v2611
    %v2972 = vpack.c.b16 %v2616, %v2612
    %v2973 = vpack.c.b16 %v2617, %v2613
    %v2974 = vpack.c.b16 %v2618, %v2614
    %v2975 = vpack.c.b16 %v2623, %v2619
    %v2976 = vpack.c.b16 %v2624, %v2620
    %v2977 = vpack.c.b16 %v2625, %v2621
    %v2978 = vpack.c.b16 %v2626, %v2622
    %v2979 = vpack.c.b16 %v2631, %v2627
    %v2980 = vpack.c.b16 %v2632, %v2628
    %v2981 = vpack.c.b16 %v2633, %v2629
    %v2982 = vpack.c.b16 %v2634, %v2630
    %v2983 = vpack.c.b16 %v2639, %v2635
    %v2984 = vpack.c.b16 %v2640, %v2636
    %v2985 = vpack.c.b16 %v2641, %v2637
    %v2986 = vpack.c.b16 %v2642, %v2638
    %v2987 = vpack.c.b16 %v2647, %v2643
    %v2988 = vpack.c.b16 %v2648, %v2644
    %v2989 = vpack.c.b16 %v2649, %v2645
    %v2990 = vpack.c.b16 %v2650, %v2646
    %v2991 = vpack.c.b16 %v2655, %v2651
    %v2992 = vpack.c.b16 %v2656, %v2652
    %v2993 = vpack.c.b16 %v2657, %v2653
    %v2994 = vpack.c.b16 %v2658, %v2654
    %v2995 = vpack.c.b16 %v2663, %v2659
    %v2996 = vpack.c.b16 %v2664, %v2660
    %v2997 = vpack.c.b16 %v2665, %v2661
    %v2998 = vpack.c.b16 %v2666, %v2662
    %v2999 = vpack.c.b16 %v2671, %v2667
    %v3000 = vpack.c.b16 %v2672, %v2668
    %v3001 = vpack.c.b16 %v2673, %v2669
    %v3002 = vpack.c.b16 %v2674, %v2670
    %v3003 = vpack.c.b16 %v2679, %v2675
    %v3004 = vpack.c.b16 %v2680, %v2676
    %v3005 = vpack.c.b16 %v2681, %v2677
    %v3006 = vpack.c.b16 %v2682, %v2678
    %v3007 = vpack.c.b16 %v2687, %v2683
    %v3008 = vpack.c.b16 %v2688, %v2684
    %v3009 = vpack.c.b16 %v2689, %v2685
    %v3010 = vpack.c.b16 %v2690, %v2686
    %v3011 = vpack.c.b16 %v2695, %v2691
    %v3012 = vpack.c.b16 %v2696, %v2692
    %v3013 = vpack.c.b16 %v2697, %v2693
    %v3014 = vpack.c.b16 %v2698, %v2694
    %v3015 = vpack.c.b16 %v2703, %v2699
    %v3016 = vpack.c.b16 %v2704, %v2700
    %v3017 = vpack.c.b16 %v2705, %v2701
    %v3018 = vpack.c.b16 %v2706, %v2702
    %v3019 = vpack.c.b16 %v2711, %v2707
    %v3020 = vpack.c.b16 %v2712, %v2708
    %v3021 = vpack.c.b16 %v2713, %v2709
    %v3022 = vpack.c.b16 %v2714, %v2710
    %v3023 = vpack.c.b16 %v2719, %v2715
    %v3024 = vpack.c.b16 %v2720, %v2716
    %v3025 = vpack.c.b16 %v2721, %v2717
    %v3026 = vpack.c.b16 %v2722, %v2718
    %v3027 = vpack.c.b16 %v2727, %v2723
    %v3028 = vpack.c.b16 %v2728, %v2724
    %v3029 = vpack.c.b16 %v2729, %v2725
    %v3030 = vpack.c.b16 %v2730, %v2726
    %v3031 = vpack.c.b16 %v2735, %v2731
    %v3032 = vpack.c.b16 %v2736, %v2732
    %v3033 = vpack.c.b16 %v2737, %v2733
    %v3034 = vpack.c.b16 %v2738, %v2734
    %v3035 = vpack.c.b16 %v2743, %v2739
    %v3036 = vpack.c.b16 %v2744, %v2740
    %v3037 = vpack.c.b16 %v2745, %v2741
    %v3038 = vpack.c.b16 %v2746, %v2742
    %v3039 = vpack.c.b16 %v2751, %v2747
    %v3040 = vpack.c.b16 %v2752, %v2748
    %v3041 = vpack.c.b16 %v2753, %v2749
    %v3042 = vpack.c.b16 %v2754, %v2750
    %v3043 = vpack.c.b16 %v2759, %v2755
    %v3044 = vpack.c.b16 %v2760, %v2756
    %v3045 = vpack.c.b16 %v2761, %v2757
    %v3046 = vpack.c.b16 %v2762, %v2758
    %v3047 = vpack.c.b16 %v2767, %v2763
    %v3048 = vpack.c.b16 %v2768, %v2764
    %v3049 = vpack.c.b16 %v2769, %v2765
    %v3050 = vpack.c.b16 %v2770, %v2766
    %v3051 = vpack.c.b16 %v2775, %v2771
    %v3052 = vpack.c.b16 %v2776, %v2772
    %v3053 = vpack.c.b16 %v2777, %v2773
    %v3054 = vpack.c.b16 %v2778, %v2774
    %v3055 = vpack.c.b16 %v2783, %v2779
    %v3056 = vpack.c.b16 %v2784, %v2780
    %v3057 = vpack.c.b16 %v2785, %v2781
    %v3058 = vpack.c.b16 %v2786, %v2782
    %v3059 = vpack.c.b16 %v2791, %v2787
    %v3060 = vpack.c.b16 %v2792, %v2788
    %v3061 = vpack.c.b16 %v2793, %v2789
    %v3062 = vpack.c.b16 %v2794, %v2790
    %v3063 = vpack.c.b16 %v2799, %v2795
    %v3064 = vpack.c.b16 %v2800, %v2796
    %v3065 = vpack.c.b16 %v2801, %v2797
    %v3066 = vpack.c.b16 %v2802, %v2798
    %v3067 = vpack.c.b16 %v2807, %v2803
    %v3068 = vpack.c.b16 %v2808, %v2804
    %v3069 = vpack.c.b16 %v2809, %v2805
    %v3070 = vpack.c.b16 %v2810, %v2806
    %v3071 = vpack.c.b16 %v2815, %v2811
    %v3072 = vpack.c.b16 %v2816, %v2812
    %v3073 = vpack.c.b16 %v2817, %v2813
    %v3074 = vpack.c.b16 %v2818, %v2814
    %v3075 = vpack.c.b16 %v2823, %v2819
    %v3076 = vpack.c.b16 %v2824, %v2820
    %v3077 = vpack.c.b16 %v2825, %v2821
    %v3078 = vpack.c.b16 %v2826, %v2822
    %v3079 = vpack.c.b16 %v2831, %v2827
    %v3080 = vpack.c.b16 %v2832, %v2828
    %v3081 = vpack.c.b16 %v2833, %v2829
    %v3082 = vpack.c.b16 %v2834, %v2830
    %v3083 = vpack.c.b16 %v2839, %v2835
    %v3084 = vpack.c.b16 %v2840, %v2836
    %v3085 = vpack.c.b16 %v2841, %v2837
    %v3086 = vpack.c.b16 %v2842, %v2838
    %v3087 = vpack.c.b16 %v2847, %v2843
    %v3088 = vpack.c.b16 %v2848, %v2844
    %v3089 = vpack.c.b16 %v2849, %v2845
    %v3090 = vpack.c.b16 %v2850, %v2846
    %v3091 = vpack.c.b16 %v2855, %v2851
    %v3092 = vpack.c.b16 %v2856, %v2852
    %v3093 = vpack.c.b16 %v2857, %v2853
    %v3094 = vpack.c.b16 %v2858, %v2854
    %v3095 = vpack.c.b16 %v2863, %v2859
    %v3096 = vpack.c.b16 %v2864, %v2860
    %v3097 = vpack.c.b16 %v2865, %v2861
    %v3098 = vpack.c.b16 %v2866, %v2862
    %v3099 = vpack.c.b16 %v2871, %v2867
    %v3100 = vpack.c.b16 %v2872, %v2868
    %v3101 = vpack.c.b16 %v2873, %v2869
    %v3102 = vpack.c.b16 %v2874, %v2870
    %v3103 = vpack.c.b16 %v2879, %v2875
    %v3104 = vpack.c.b16 %v2880, %v2876
    %v3105 = vpack.c.b16 %v2881, %v2877
    %v3106 = vpack.c.b16 %v2882, %v2878
    %v3107 = vpack.c.b16 %v2887, %v2883
    %v3108 = vpack.c.b16 %v2888, %v2884
    %v3109 = vpack.c.b16 %v2889, %v2885
    %v3110 = vpack.c.b16 %v2890, %v2886
    %v3111 = vpack.c.b16 %v2895, %v2891
    %v3112 = vpack.c.b16 %v2896, %v2892
    %v3113 = vpack.c.b16 %v2897, %v2893
    %v3114 = vpack.c.b16 %v2898, %v2894
    %v3115 = vpack.c.b16 %v2903, %v2899
    %v3116 = vpack.c.b16 %v2904, %v2900
    %v3117 = vpack.c.b16 %v2905, %v2901
    %v3118 = vpack.c.b16 %v2906, %v2902
    %v3119 = vpack.c.b16 %v2911, %v2907
    %v3120 = vpack.c.b16 %v2912, %v2908
    %v3121 = vpack.c.b16 %v2913, %v2909
    %v3122 = vpack.c.b16 %v2914, %v2910
    %v3123 = vpack.c.b16 %v2919, %v2915
    %v3124 = vpack.c.b16 %v2920, %v2916
    %v3125 = vpack.c.b16 %v2921, %v2917
    %v3126 = vpack.c.b16 %v2922, %v2918
    %v3127 = vpack.c.b16 %v2927, %v2923
    %v3128 = vpack.c.b16 %v2928, %v2924
    %v3129 = vpack.c.b16 %v2929, %v2925
    %v3130 = vpack.c.b16 %v2930, %v2926
    %v3131 = vpack.c.b16 %v2935, %v2931
    %v3132 = vpack.c.b16 %v2936, %v2932
    %v3133 = vpack.c.b16 %v2937, %v2933
    %v3134 = vpack.c.b16 %v2938, %v2934
    %v3135 = vpack.c.b16 %v2943, %v2939
    %v3136 = vpack.c.b16 %v2944, %v2940
    %v3137 = vpack.c.b16 %v2945, %v2941
    %v3138 = vpack.c.b16 %v2946, %v2942
    %3331 = vmatprep.subr.bf16.mxu0 %v2976
    %3332 = vmatpush1.bf16.msra.mxu0 %v2975
    %3333 = vmatprep.subr.bf16.mxu0 %v2972
    %3334 = vmatpush1.bf16.msra.mxu0 %v2971
    %3335 = vmatprep.subr.bf16.mxu0 %v2968
    %3336 = vmatpush1.bf16.msra.mxu0 %v2967
    %3337 = vmatprep.subr.bf16.mxu0 %v2964
    %3338 = vmatpush1.bf16.msra.mxu0 %v2963
    %3339 = vmatprep.subr.bf16.mxu0 %v2960
    %3340 = vmatpush1.bf16.msra.mxu0 %v2959
    %3341 = vmatprep.subr.bf16.mxu0 %v2956
    %3342 = vmatpush1.bf16.msra.mxu0 %v2955
    %3343 = vmatprep.subr.bf16.mxu0 %v2952
    %3344 = vmatpush1.bf16.msra.mxu0 %v2951
    %3345 = vmatprep.subr.bf16.mxu0 %v2948
    %3346 = vmatpush1.bf16.msra.mxu0 %v2947
    %3347 = vmatprep.subr.bf16.mxu0 %v3008
    %3348 = vmatpush2.bf16.msra.mxu0 %v3007
    %3349 = vmatprep.subr.bf16.mxu0 %v3004
    %3350 = vmatpush2.bf16.msra.mxu0 %v3003
    %3351 = vmatprep.subr.bf16.mxu0 %v3000
    %3352 = vmatpush2.bf16.msra.mxu0 %v2999
    %3353 = vmatprep.subr.bf16.mxu0 %v2996
    %3354 = vmatpush2.bf16.msra.mxu0 %v2995
    %3355 = vmatprep.subr.bf16.mxu0 %v2992
    %3356 = vmatpush2.bf16.msra.mxu0 %v2991
    %3357 = vmatprep.subr.bf16.mxu0 %v2988
    %3358 = vmatpush2.bf16.msra.mxu0 %v2987
    %3359 = vmatprep.subr.bf16.mxu0 %v2984
    %3360 = vmatpush2.bf16.msra.mxu0 %v2983
    %3361 = vmatprep.subr.bf16.mxu0 %v2980
    %3362 = vmatpush2.bf16.msra.mxu0 %v2979
    %3363 = vmatprep.mubr.bf16.mxu0 %v1982
    %3364 = vmatmul.mubr.bf16.gmra.mxu0 %v1981
    %v3365 = vpop.f32.mrf.mxu0
    %v3366 = vadd.f32 0.0, %v3365
    %v3367 = vpop.f32.mrf.mxu0
    %v3368 = vadd.f32 0.0, %v3367
    %v3369 = vpop.f32.mrf.mxu0
    %v3370 = vpop.f32.mrf.mxu0
    %3371 = vdwg.mxu0
    %3372 = vmatprep.subr.bf16.mxu0 %v3040
    %3373 = vmatpush1.bf16.msra.mxu0 %v3039
    %3374 = vmatprep.subr.bf16.mxu0 %v3036
    %3375 = vmatpush1.bf16.msra.mxu0 %v3035
    %3376 = vmatprep.subr.bf16.mxu0 %v3032
    %3377 = vmatpush1.bf16.msra.mxu0 %v3031
    %3378 = vmatprep.subr.bf16.mxu0 %v3028
    %3379 = vmatpush1.bf16.msra.mxu0 %v3027
    %3380 = vmatprep.subr.bf16.mxu0 %v3024
    %3381 = vmatpush1.bf16.msra.mxu0 %v3023
    %3382 = vmatprep.subr.bf16.mxu0 %v3020
    %3383 = vmatpush1.bf16.msra.mxu0 %v3019
    %3384 = vmatprep.subr.bf16.mxu0 %v3016
    %3385 = vmatpush1.bf16.msra.mxu0 %v3015
    %3386 = vmatprep.subr.bf16.mxu0 %v3012
    %3387 = vmatpush1.bf16.msra.mxu0 %v3011
    %3388 = vmatprep.subr.bf16.mxu0 %v3072
    %3389 = vmatpush2.bf16.msra.mxu0 %v3071
    %3390 = vmatprep.subr.bf16.mxu0 %v3068
    %3391 = vmatpush2.bf16.msra.mxu0 %v3067
    %3392 = vmatprep.subr.bf16.mxu0 %v3064
    %3393 = vmatpush2.bf16.msra.mxu0 %v3063
    %3394 = vmatprep.subr.bf16.mxu0 %v3060
    %3395 = vmatpush2.bf16.msra.mxu0 %v3059
    %3396 = vmatprep.subr.bf16.mxu0 %v3056
    %3397 = vmatpush2.bf16.msra.mxu0 %v3055
    %3398 = vmatprep.subr.bf16.mxu0 %v3052
    %3399 = vmatpush2.bf16.msra.mxu0 %v3051
    %3400 = vmatprep.subr.bf16.mxu0 %v3048
    %3401 = vmatpush2.bf16.msra.mxu0 %v3047
    %3402 = vmatprep.subr.bf16.mxu0 %v3044
    %3403 = vmatpush2.bf16.msra.mxu0 %v3043
    %3404 = vmatprep.mubr.bf16.mxu0 %v1984
    %3405 = vmatmul.mubr.bf16.gmra.mxu0 %v1983
    %v3406 = vpop.f32.mrf.mxu0
    %v3407 = vadd.f32 %v3366, %v3406
    %v3408 = vpop.f32.mrf.mxu0
    %v3409 = vadd.f32 %v3368, %v3408
    %v3410 = vpop.f32.mrf.mxu0
    %v3411 = vpop.f32.mrf.mxu0
    %3412 = vdwg.mxu0
    %3413 = vmatprep.subr.bf16.mxu0 %v3104
    %3414 = vmatpush1.bf16.msra.mxu0 %v3103
    %3415 = vmatprep.subr.bf16.mxu0 %v3100
    %3416 = vmatpush1.bf16.msra.mxu0 %v3099
    %3417 = vmatprep.subr.bf16.mxu0 %v3096
    %3418 = vmatpush1.bf16.msra.mxu0 %v3095
    %3419 = vmatprep.subr.bf16.mxu0 %v3092
    %3420 = vmatpush1.bf16.msra.mxu0 %v3091
    %3421 = vmatprep.subr.bf16.mxu0 %v3088
    %3422 = vmatpush1.bf16.msra.mxu0 %v3087
    %3423 = vmatprep.subr.bf16.mxu0 %v3084
    %3424 = vmatpush1.bf16.msra.mxu0 %v3083
    %3425 = vmatprep.subr.bf16.mxu0 %v3080
    %3426 = vmatpush1.bf16.msra.mxu0 %v3079
    %3427 = vmatprep.subr.bf16.mxu0 %v3076
    %3428 = vmatpush1.bf16.msra.mxu0 %v3075
    %3429 = vmatprep.subr.bf16.mxu0 %v3136
    %3430 = vmatpush2.bf16.msra.mxu0 %v3135
    %3431 = vmatprep.subr.bf16.mxu0 %v3132
    %3432 = vmatpush2.bf16.msra.mxu0 %v3131
    %3433 = vmatprep.subr.bf16.mxu0 %v3128
    %3434 = vmatpush2.bf16.msra.mxu0 %v3127
    %3435 = vmatprep.subr.bf16.mxu0 %v3124
    %3436 = vmatpush2.bf16.msra.mxu0 %v3123
    %3437 = vmatprep.subr.bf16.mxu0 %v3120
    %3438 = vmatpush2.bf16.msra.mxu0 %v3119
    %3439 = vmatprep.subr.bf16.mxu0 %v3116
    %3440 = vmatpush2.bf16.msra.mxu0 %v3115
    %3441 = vmatprep.subr.bf16.mxu0 %v3112
    %3442 = vmatpush2.bf16.msra.mxu0 %v3111
    %3443 = vmatprep.subr.bf16.mxu0 %v3108
    %3444 = vmatpush2.bf16.msra.mxu0 %v3107
    %3445 = vmatprep.mubr.bf16.mxu0 %v1986
    %3446 = vmatmul.mubr.bf16.gmra.mxu0 %v1985
    %v3447 = vpop.f32.mrf.mxu0
    %v3448 = vadd.f32 %v3407, %v3447
    %v3449 = vpop.f32.mrf.mxu0
    %v3450 = vadd.f32 %v3409, %v3449
    %v3451 = vpop.f32.mrf.mxu0
    %v3452 = vpop.f32.mrf.mxu0
    %3453 = vdwg.mxu0
    %3454 = vmatprep.subr.bf16.mxu0 %v2978
    %3455 = vmatpush1.bf16.msra.mxu0 %v2977
    %3456 = vmatprep.subr.bf16.mxu0 %v2974
    %3457 = vmatpush1.bf16.msra.mxu0 %v2973
    %3458 = vmatprep.subr.bf16.mxu0 %v2970
    %3459 = vmatpush1.bf16.msra.mxu0 %v2969
    %3460 = vmatprep.subr.bf16.mxu0 %v2966
    %3461 = vmatpush1.bf16.msra.mxu0 %v2965
    %3462 = vmatprep.subr.bf16.mxu0 %v2962
    %3463 = vmatpush1.bf16.msra.mxu0 %v2961
    %3464 = vmatprep.subr.bf16.mxu0 %v2958
    %3465 = vmatpush1.bf16.msra.mxu0 %v2957
    %3466 = vmatprep.subr.bf16.mxu0 %v2954
    %3467 = vmatpush1.bf16.msra.mxu0 %v2953
    %3468 = vmatprep.subr.bf16.mxu0 %v2950
    %3469 = vmatpush1.bf16.msra.mxu0 %v2949
    %3470 = vmatprep.subr.bf16.mxu0 %v3010
    %3471 = vmatpush2.bf16.msra.mxu0 %v3009
    %3472 = vmatprep.subr.bf16.mxu0 %v3006
    %3473 = vmatpush2.bf16.msra.mxu0 %v3005
    %3474 = vmatprep.subr.bf16.mxu0 %v3002
    %3475 = vmatpush2.bf16.msra.mxu0 %v3001
    %3476 = vmatprep.subr.bf16.mxu0 %v2998
    %3477 = vmatpush2.bf16.msra.mxu0 %v2997
    %3478 = vmatprep.subr.bf16.mxu0 %v2994
    %3479 = vmatpush2.bf16.msra.mxu0 %v2993
    %3480 = vmatprep.subr.bf16.mxu0 %v2990
    %3481 = vmatpush2.bf16.msra.mxu0 %v2989
    %3482 = vmatprep.subr.bf16.mxu0 %v2986
    %3483 = vmatpush2.bf16.msra.mxu0 %v2985
    %3484 = vmatprep.subr.bf16.mxu0 %v2982
    %3485 = vmatpush2.bf16.msra.mxu0 %v2981
    %3486 = vmatprep.mubr.bf16.mxu0 %v1982
    %3487 = vmatmul.mubr.bf16.gmra.mxu0 %v1981
    %v3488 = vpop.f32.mrf.mxu0
    %v3489 = vadd.f32 0.0, %v3488
    %v3490 = vpop.f32.mrf.mxu0
    %v3491 = vadd.f32 0.0, %v3490
    %v3492 = vpop.f32.mrf.mxu0
    %v3493 = vpop.f32.mrf.mxu0
    %3494 = vdwg.mxu0
    %3495 = vmatprep.subr.bf16.mxu0 %v3042
    %3496 = vmatpush1.bf16.msra.mxu0 %v3041
    %3497 = vmatprep.subr.bf16.mxu0 %v3038
    %3498 = vmatpush1.bf16.msra.mxu0 %v3037
    %3499 = vmatprep.subr.bf16.mxu0 %v3034
    %3500 = vmatpush1.bf16.msra.mxu0 %v3033
    %3501 = vmatprep.subr.bf16.mxu0 %v3030
    %3502 = vmatpush1.bf16.msra.mxu0 %v3029
    %3503 = vmatprep.subr.bf16.mxu0 %v3026
    %3504 = vmatpush1.bf16.msra.mxu0 %v3025
    %3505 = vmatprep.subr.bf16.mxu0 %v3022
    %3506 = vmatpush1.bf16.msra.mxu0 %v3021
    %3507 = vmatprep.subr.bf16.mxu0 %v3018
    %3508 = vmatpush1.bf16.msra.mxu0 %v3017
    %3509 = vmatprep.subr.bf16.mxu0 %v3014
    %3510 = vmatpush1.bf16.msra.mxu0 %v3013
    %3511 = vmatprep.subr.bf16.mxu0 %v3074
    %3512 = vmatpush2.bf16.msra.mxu0 %v3073
    %3513 = vmatprep.subr.bf16.mxu0 %v3070
    %3514 = vmatpush2.bf16.msra.mxu0 %v3069
    %3515 = vmatprep.subr.bf16.mxu0 %v3066
    %3516 = vmatpush2.bf16.msra.mxu0 %v3065
    %3517 = vmatprep.subr.bf16.mxu0 %v3062
    %3518 = vmatpush2.bf16.msra.mxu0 %v3061
    %3519 = vmatprep.subr.bf16.mxu0 %v3058
    %3520 = vmatpush2.bf16.msra.mxu0 %v3057
    %3521 = vmatprep.subr.bf16.mxu0 %v3054
    %3522 = vmatpush2.bf16.msra.mxu0 %v3053
    %3523 = vmatprep.subr.bf16.mxu0 %v3050
    %3524 = vmatpush2.bf16.msra.mxu0 %v3049
    %3525 = vmatprep.subr.bf16.mxu0 %v3046
    %3526 = vmatpush2.bf16.msra.mxu0 %v3045
    %3527 = vmatprep.mubr.bf16.mxu0 %v1984
    %3528 = vmatmul.mubr.bf16.gmra.mxu0 %v1983
    %v3529 = vpop.f32.mrf.mxu0
    %v3530 = vadd.f32 %v3489, %v3529
    %v3531 = vpop.f32.mrf.mxu0
    %v3532 = vadd.f32 %v3491, %v3531
    %v3533 = vpop.f32.mrf.mxu0
    %v3534 = vpop.f32.mrf.mxu0
    %3535 = vdwg.mxu0
    %3536 = vmatprep.subr.bf16.mxu0 %v3106
    %3537 = vmatpush1.bf16.msra.mxu0 %v3105
    %3538 = vmatprep.subr.bf16.mxu0 %v3102
    %3539 = vmatpush1.bf16.msra.mxu0 %v3101
    %3540 = vmatprep.subr.bf16.mxu0 %v3098
    %3541 = vmatpush1.bf16.msra.mxu0 %v3097
    %3542 = vmatprep.subr.bf16.mxu0 %v3094
    %3543 = vmatpush1.bf16.msra.mxu0 %v3093
    %3544 = vmatprep.subr.bf16.mxu0 %v3090
    %3545 = vmatpush1.bf16.msra.mxu0 %v3089
    %3546 = vmatprep.subr.bf16.mxu0 %v3086
    %3547 = vmatpush1.bf16.msra.mxu0 %v3085
    %3548 = vmatprep.subr.bf16.mxu0 %v3082
    %3549 = vmatpush1.bf16.msra.mxu0 %v3081
    %3550 = vmatprep.subr.bf16.mxu0 %v3078
    %3551 = vmatpush1.bf16.msra.mxu0 %v3077
    %3552 = vmatprep.subr.bf16.mxu0 %v3138
    %3553 = vmatpush2.bf16.msra.mxu0 %v3137
    %3554 = vmatprep.subr.bf16.mxu0 %v3134
    %3555 = vmatpush2.bf16.msra.mxu0 %v3133
    %3556 = vmatprep.subr.bf16.mxu0 %v3130
    %3557 = vmatpush2.bf16.msra.mxu0 %v3129
    %3558 = vmatprep.subr.bf16.mxu0 %v3126
    %3559 = vmatpush2.bf16.msra.mxu0 %v3125
    %3560 = vmatprep.subr.bf16.mxu0 %v3122
    %3561 = vmatpush2.bf16.msra.mxu0 %v3121
    %3562 = vmatprep.subr.bf16.mxu0 %v3118
    %3563 = vmatpush2.bf16.msra.mxu0 %v3117
    %3564 = vmatprep.subr.bf16.mxu0 %v3114
    %3565 = vmatpush2.bf16.msra.mxu0 %v3113
    %3566 = vmatprep.subr.bf16.mxu0 %v3110
    %3567 = vmatpush2.bf16.msra.mxu0 %v3109
    %3568 = vmatprep.mubr.bf16.mxu0 %v1986
    %3569 = vmatmul.mubr.bf16.gmra.mxu0 %v1985
    %v3570 = vpop.f32.mrf.mxu0
    %v3571 = vadd.f32 %v3530, %v3570
    %v3572 = vpop.f32.mrf.mxu0
    %v3573 = vadd.f32 %v3532, %v3572
    %v3574 = vpop.f32.mrf.mxu0
    %v3575 = vpop.f32.mrf.mxu0
    %3576 = vdwg.mxu0
    %v3769 = vunpack.c.l.b16 %v1987
    %v3770 = vunpack.c.h.b16 %v1987
    %v3771 = vunpack.c.l.b16 %v1988
    %v3772 = vunpack.c.h.b16 %v1988
    %v3773 = vunpack.c.l.b16 %v1989
    %v3774 = vunpack.c.h.b16 %v1989
    %v3775 = vunpack.c.l.b16 %v1990
    %v3776 = vunpack.c.h.b16 %v1990
    %v3777 = vunpack.c.l.b16 %v1991
    %v3778 = vunpack.c.h.b16 %v1991
    %v3779 = vunpack.c.l.b16 %v1992
    %v3780 = vunpack.c.h.b16 %v1992
    %v3781 = vunpack.c.l.b16 %v1993
    %v3782 = vunpack.c.h.b16 %v1993
    %v3783 = vunpack.c.l.b16 %v1994
    %v3784 = vunpack.c.h.b16 %v1994
    %v3785 = vunpack.c.l.b16 %v1995
    %v3786 = vunpack.c.h.b16 %v1995
    %v3787 = vunpack.c.l.b16 %v1996
    %v3788 = vunpack.c.h.b16 %v1996
    %v3789 = vunpack.c.l.b16 %v1997
    %v3790 = vunpack.c.h.b16 %v1997
    %v3791 = vunpack.c.l.b16 %v1998
    %v3792 = vunpack.c.h.b16 %v1998
    %v3793 = vunpack.c.l.b16 %v1999
    %v3794 = vunpack.c.h.b16 %v1999
    %v3795 = vunpack.c.l.b16 %v2000
    %v3796 = vunpack.c.h.b16 %v2000
    %v3797 = vunpack.c.l.b16 %v2001
    %v3798 = vunpack.c.h.b16 %v2001
    %v3799 = vunpack.c.l.b16 %v2002
    %v3800 = vunpack.c.h.b16 %v2002
    %v3801 = vunpack.c.l.b16 %v2003
    %v3802 = vunpack.c.h.b16 %v2003
    %v3803 = vunpack.c.l.b16 %v2004
    %v3804 = vunpack.c.h.b16 %v2004
    %v3805 = vunpack.c.l.b16 %v2005
    %v3806 = vunpack.c.h.b16 %v2005
    %v3807 = vunpack.c.l.b16 %v2006
    %v3808 = vunpack.c.h.b16 %v2006
    %v3809 = vunpack.c.l.b16 %v2007
    %v3810 = vunpack.c.h.b16 %v2007
    %v3811 = vunpack.c.l.b16 %v2008
    %v3812 = vunpack.c.h.b16 %v2008
    %v3813 = vunpack.c.l.b16 %v2009
    %v3814 = vunpack.c.h.b16 %v2009
    %v3815 = vunpack.c.l.b16 %v2010
    %v3816 = vunpack.c.h.b16 %v2010
    %v3817 = vunpack.c.l.b16 %v2011
    %v3818 = vunpack.c.h.b16 %v2011
    %v3819 = vunpack.c.l.b16 %v2012
    %v3820 = vunpack.c.h.b16 %v2012
    %v3821 = vunpack.c.l.b16 %v2013
    %v3822 = vunpack.c.h.b16 %v2013
    %v3823 = vunpack.c.l.b16 %v2014
    %v3824 = vunpack.c.h.b16 %v2014
    %v3825 = vunpack.c.l.b16 %v2015
    %v3826 = vunpack.c.h.b16 %v2015
    %v3827 = vunpack.c.l.b16 %v2016
    %v3828 = vunpack.c.h.b16 %v2016
    %v3829 = vunpack.c.l.b16 %v2017
    %v3830 = vunpack.c.h.b16 %v2017
    %v3831 = vunpack.c.l.b16 %v2018
    %v3832 = vunpack.c.h.b16 %v2018
    %v3833 = vunpack.c.l.b16 %v2019
    %v3834 = vunpack.c.h.b16 %v2019
    %v3835 = vunpack.c.l.b16 %v2020
    %v3836 = vunpack.c.h.b16 %v2020
    %v3837 = vunpack.c.l.b16 %v2021
    %v3838 = vunpack.c.h.b16 %v2021
    %v3839 = vunpack.c.l.b16 %v2022
    %v3840 = vunpack.c.h.b16 %v2022
    %v3841 = vunpack.c.l.b16 %v2023
    %v3842 = vunpack.c.h.b16 %v2023
    %v3843 = vunpack.c.l.b16 %v2024
    %v3844 = vunpack.c.h.b16 %v2024
    %v3845 = vunpack.c.l.b16 %v2025
    %v3846 = vunpack.c.h.b16 %v2025
    %v3847 = vunpack.c.l.b16 %v2026
    %v3848 = vunpack.c.h.b16 %v2026
    %v3849 = vunpack.c.l.b16 %v2027
    %v3850 = vunpack.c.h.b16 %v2027
    %v3851 = vunpack.c.l.b16 %v2028
    %v3852 = vunpack.c.h.b16 %v2028
    %v3853 = vunpack.c.l.b16 %v2029
    %v3854 = vunpack.c.h.b16 %v2029
    %v3855 = vunpack.c.l.b16 %v2030
    %v3856 = vunpack.c.h.b16 %v2030
    %v3857 = vunpack.c.l.b16 %v2031
    %v3858 = vunpack.c.h.b16 %v2031
    %v3859 = vunpack.c.l.b16 %v2032
    %v3860 = vunpack.c.h.b16 %v2032
    %v3861 = vunpack.c.l.b16 %v2033
    %v3862 = vunpack.c.h.b16 %v2033
    %v3863 = vunpack.c.l.b16 %v2034
    %v3864 = vunpack.c.h.b16 %v2034
    %v3865 = vunpack.c.l.b16 %v2035
    %v3866 = vunpack.c.h.b16 %v2035
    %v3867 = vunpack.c.l.b16 %v2036
    %v3868 = vunpack.c.h.b16 %v2036
    %v3869 = vunpack.c.l.b16 %v2037
    %v3870 = vunpack.c.h.b16 %v2037
    %v3871 = vunpack.c.l.b16 %v2038
    %v3872 = vunpack.c.h.b16 %v2038
    %v3873 = vunpack.c.l.b16 %v2039
    %v3874 = vunpack.c.h.b16 %v2039
    %v3875 = vunpack.c.l.b16 %v2040
    %v3876 = vunpack.c.h.b16 %v2040
    %v3877 = vunpack.c.l.b16 %v2041
    %v3878 = vunpack.c.h.b16 %v2041
    %v3879 = vunpack.c.l.b16 %v2042
    %v3880 = vunpack.c.h.b16 %v2042
    %v3881 = vunpack.c.l.b16 %v2043
    %v3882 = vunpack.c.h.b16 %v2043
    %v3883 = vunpack.c.l.b16 %v2044
    %v3884 = vunpack.c.h.b16 %v2044
    %v3885 = vunpack.c.l.b16 %v2045
    %v3886 = vunpack.c.h.b16 %v2045
    %v3887 = vunpack.c.l.b16 %v2046
    %v3888 = vunpack.c.h.b16 %v2046
    %v3889 = vunpack.c.l.b16 %v2047
    %v3890 = vunpack.c.h.b16 %v2047
    %v3891 = vunpack.c.l.b16 %v2048
    %v3892 = vunpack.c.h.b16 %v2048
    %v3893 = vunpack.c.l.b16 %v2049
    %v3894 = vunpack.c.h.b16 %v2049
    %v3895 = vunpack.c.l.b16 %v2050
    %v3896 = vunpack.c.h.b16 %v2050
    %v3897 = vunpack.c.l.b16 %v2051
    %v3898 = vunpack.c.h.b16 %v2051
    %v3899 = vunpack.c.l.b16 %v2052
    %v3900 = vunpack.c.h.b16 %v2052
    %v3901 = vunpack.c.l.b16 %v2053
    %v3902 = vunpack.c.h.b16 %v2053
    %v3903 = vunpack.c.l.b16 %v2054
    %v3904 = vunpack.c.h.b16 %v2054
    %v3905 = vunpack.c.l.b16 %v2055
    %v3906 = vunpack.c.h.b16 %v2055
    %v3907 = vunpack.c.l.b16 %v2056
    %v3908 = vunpack.c.h.b16 %v2056
    %v3909 = vunpack.c.l.b16 %v2057
    %v3910 = vunpack.c.h.b16 %v2057
    %v3911 = vunpack.c.l.b16 %v2058
    %v3912 = vunpack.c.h.b16 %v2058
    %v3913 = vunpack.c.l.b16 %v2059
    %v3914 = vunpack.c.h.b16 %v2059
    %v3915 = vunpack.c.l.b16 %v2060
    %v3916 = vunpack.c.h.b16 %v2060
    %v3917 = vunpack.c.l.b16 %v2061
    %v3918 = vunpack.c.h.b16 %v2061
    %v3919 = vunpack.c.l.b16 %v2062
    %v3920 = vunpack.c.h.b16 %v2062
    %v3921 = vunpack.c.l.b16 %v2063
    %v3922 = vunpack.c.h.b16 %v2063
    %v3923 = vunpack.c.l.b16 %v2064
    %v3924 = vunpack.c.h.b16 %v2064
    %v3925 = vunpack.c.l.b16 %v2065
    %v3926 = vunpack.c.h.b16 %v2065
    %v3927 = vunpack.c.l.b16 %v2066
    %v3928 = vunpack.c.h.b16 %v2066
    %v3929 = vunpack.c.l.b16 %v2067
    %v3930 = vunpack.c.h.b16 %v2067
    %v3931 = vunpack.c.l.b16 %v2068
    %v3932 = vunpack.c.h.b16 %v2068
    %v3933 = vunpack.c.l.b16 %v2069
    %v3934 = vunpack.c.h.b16 %v2069
    %v3935 = vunpack.c.l.b16 %v2070
    %v3936 = vunpack.c.h.b16 %v2070
    %v3937 = vunpack.c.l.b16 %v2071
    %v3938 = vunpack.c.h.b16 %v2071
    %v3939 = vunpack.c.l.b16 %v2072
    %v3940 = vunpack.c.h.b16 %v2072
    %v3941 = vunpack.c.l.b16 %v2073
    %v3942 = vunpack.c.h.b16 %v2073
    %v3943 = vunpack.c.l.b16 %v2074
    %v3944 = vunpack.c.h.b16 %v2074
    %v3945 = vunpack.c.l.b16 %v2075
    %v3946 = vunpack.c.h.b16 %v2075
    %v3947 = vunpack.c.l.b16 %v2076
    %v3948 = vunpack.c.h.b16 %v2076
    %v3949 = vunpack.c.l.b16 %v2077
    %v3950 = vunpack.c.h.b16 %v2077
    %v3951 = vunpack.c.l.b16 %v2078
    %v3952 = vunpack.c.h.b16 %v2078
    %v3953 = vunpack.c.l.b16 %v2079
    %v3954 = vunpack.c.h.b16 %v2079
    %v3955 = vunpack.c.l.b16 %v2080
    %v3956 = vunpack.c.h.b16 %v2080
    %v3957 = vunpack.c.l.b16 %v2081
    %v3958 = vunpack.c.h.b16 %v2081
    %v3959 = vunpack.c.l.b16 %v2082
    %v3960 = vunpack.c.h.b16 %v2082
    %v3961 = vunpack.c.l.b16 %v2083
    %v3962 = vunpack.c.h.b16 %v2083
    %v3963 = vunpack.c.l.b16 %v2084
    %v3964 = vunpack.c.h.b16 %v2084
    %v3965 = vunpack.c.l.b16 %v2085
    %v3966 = vunpack.c.h.b16 %v2085
    %v3967 = vunpack.c.l.b16 %v2086
    %v3968 = vunpack.c.h.b16 %v2086
    %v3969 = vunpack.c.l.b16 %v2087
    %v3970 = vunpack.c.h.b16 %v2087
    %v3971 = vunpack.c.l.b16 %v2088
    %v3972 = vunpack.c.h.b16 %v2088
    %v3973 = vunpack.c.l.b16 %v2089
    %v3974 = vunpack.c.h.b16 %v2089
    %v3975 = vunpack.c.l.b16 %v2090
    %v3976 = vunpack.c.h.b16 %v2090
    %v3977 = vunpack.c.l.b16 %v2091
    %v3978 = vunpack.c.h.b16 %v2091
    %v3979 = vunpack.c.l.b16 %v2092
    %v3980 = vunpack.c.h.b16 %v2092
    %v3981 = vunpack.c.l.b16 %v2093
    %v3982 = vunpack.c.h.b16 %v2093
    %v3983 = vunpack.c.l.b16 %v2094
    %v3984 = vunpack.c.h.b16 %v2094
    %v3985 = vunpack.c.l.b16 %v2095
    %v3986 = vunpack.c.h.b16 %v2095
    %v3987 = vunpack.c.l.b16 %v2096
    %v3988 = vunpack.c.h.b16 %v2096
    %v3989 = vunpack.c.l.b16 %v2097
    %v3990 = vunpack.c.h.b16 %v2097
    %v3991 = vunpack.c.l.b16 %v2098
    %v3992 = vunpack.c.h.b16 %v2098
    %v3993 = vunpack.c.l.b16 %v2099
    %v3994 = vunpack.c.h.b16 %v2099
    %v3995 = vunpack.c.l.b16 %v2100
    %v3996 = vunpack.c.h.b16 %v2100
    %v3997 = vunpack.c.l.b16 %v2101
    %v3998 = vunpack.c.h.b16 %v2101
    %v3999 = vunpack.c.l.b16 %v2102
    %v4000 = vunpack.c.h.b16 %v2102
    %v4001 = vunpack.c.l.b16 %v2103
    %v4002 = vunpack.c.h.b16 %v2103
    %v4003 = vunpack.c.l.b16 %v2104
    %v4004 = vunpack.c.h.b16 %v2104
    %v4005 = vunpack.c.l.b16 %v2105
    %v4006 = vunpack.c.h.b16 %v2105
    %v4007 = vunpack.c.l.b16 %v2106
    %v4008 = vunpack.c.h.b16 %v2106
    %v4009 = vunpack.c.l.b16 %v2107
    %v4010 = vunpack.c.h.b16 %v2107
    %v4011 = vunpack.c.l.b16 %v2108
    %v4012 = vunpack.c.h.b16 %v2108
    %v4013 = vunpack.c.l.b16 %v2109
    %v4014 = vunpack.c.h.b16 %v2109
    %v4015 = vunpack.c.l.b16 %v2110
    %v4016 = vunpack.c.h.b16 %v2110
    %v4017 = vunpack.c.l.b16 %v2111
    %v4018 = vunpack.c.h.b16 %v2111
    %v4019 = vunpack.c.l.b16 %v2112
    %v4020 = vunpack.c.h.b16 %v2112
    %v4021 = vunpack.c.l.b16 %v2113
    %v4022 = vunpack.c.h.b16 %v2113
    %v4023 = vunpack.c.l.b16 %v2114
    %v4024 = vunpack.c.h.b16 %v2114
    %v4025 = vunpack.c.l.b16 %v2115
    %v4026 = vunpack.c.h.b16 %v2115
    %v4027 = vunpack.c.l.b16 %v2116
    %v4028 = vunpack.c.h.b16 %v2116
    %v4029 = vunpack.c.l.b16 %v2117
    %v4030 = vunpack.c.h.b16 %v2117
    %v4031 = vunpack.c.l.b16 %v2118
    %v4032 = vunpack.c.h.b16 %v2118
    %v4033 = vunpack.c.l.b16 %v2119
    %v4034 = vunpack.c.h.b16 %v2119
    %v4035 = vunpack.c.l.b16 %v2120
    %v4036 = vunpack.c.h.b16 %v2120
    %v4037 = vunpack.c.l.b16 %v2121
    %v4038 = vunpack.c.h.b16 %v2121
    %v4039 = vunpack.c.l.b16 %v2122
    %v4040 = vunpack.c.h.b16 %v2122
    %v4041 = vunpack.c.l.b16 %v2123
    %v4042 = vunpack.c.h.b16 %v2123
    %v4043 = vunpack.c.l.b16 %v2124
    %v4044 = vunpack.c.h.b16 %v2124
    %v4045 = vunpack.c.l.b16 %v2125
    %v4046 = vunpack.c.h.b16 %v2125
    %v4047 = vunpack.c.l.b16 %v2126
    %v4048 = vunpack.c.h.b16 %v2126
    %v4049 = vunpack.c.l.b16 %v2127
    %v4050 = vunpack.c.h.b16 %v2127
    %v4051 = vunpack.c.l.b16 %v2128
    %v4052 = vunpack.c.h.b16 %v2128
    %v4053 = vunpack.c.l.b16 %v2129
    %v4054 = vunpack.c.h.b16 %v2129
    %v4055 = vunpack.c.l.b16 %v2130
    %v4056 = vunpack.c.h.b16 %v2130
    %v4057 = vunpack.c.l.b16 %v2131
    %v4058 = vunpack.c.h.b16 %v2131
    %v4059 = vunpack.c.l.b16 %v2132
    %v4060 = vunpack.c.h.b16 %v2132
    %v4061 = vunpack.c.l.b16 %v2133
    %v4062 = vunpack.c.h.b16 %v2133
    %v4063 = vunpack.c.l.b16 %v2134
    %v4064 = vunpack.c.h.b16 %v2134
    %v4065 = vunpack.c.l.b16 %v2135
    %v4066 = vunpack.c.h.b16 %v2135
    %v4067 = vunpack.c.l.b16 %v2136
    %v4068 = vunpack.c.h.b16 %v2136
    %v4069 = vunpack.c.l.b16 %v2137
    %v4070 = vunpack.c.h.b16 %v2137
    %v4071 = vunpack.c.l.b16 %v2138
    %v4072 = vunpack.c.h.b16 %v2138
    %v4073 = vunpack.c.l.b16 %v2139
    %v4074 = vunpack.c.h.b16 %v2139
    %v4075 = vunpack.c.l.b16 %v2140
    %v4076 = vunpack.c.h.b16 %v2140
    %v4077 = vunpack.c.l.b16 %v2141
    %v4078 = vunpack.c.h.b16 %v2141
    %v4079 = vunpack.c.l.b16 %v2142
    %v4080 = vunpack.c.h.b16 %v2142
    %v4081 = vunpack.c.l.b16 %v2143
    %v4082 = vunpack.c.h.b16 %v2143
    %v4083 = vunpack.c.l.b16 %v2144
    %v4084 = vunpack.c.h.b16 %v2144
    %v4085 = vunpack.c.l.b16 %v2145
    %v4086 = vunpack.c.h.b16 %v2145
    %v4087 = vunpack.c.l.b16 %v2146
    %v4088 = vunpack.c.h.b16 %v2146
    %v4089 = vunpack.c.l.b16 %v2147
    %v4090 = vunpack.c.h.b16 %v2147
    %v4091 = vunpack.c.l.b16 %v2148
    %v4092 = vunpack.c.h.b16 %v2148
    %v4093 = vunpack.c.l.b16 %v2149
    %v4094 = vunpack.c.h.b16 %v2149
    %v4095 = vunpack.c.l.b16 %v2150
    %v4096 = vunpack.c.h.b16 %v2150
    %v4097 = vunpack.c.l.b16 %v2151
    %v4098 = vunpack.c.h.b16 %v2151
    %v4099 = vunpack.c.l.b16 %v2152
    %v4100 = vunpack.c.h.b16 %v2152
    %v4101 = vunpack.c.l.b16 %v2153
    %v4102 = vunpack.c.h.b16 %v2153
    %v4103 = vunpack.c.l.b16 %v2154
    %v4104 = vunpack.c.h.b16 %v2154
    %v4105 = vunpack.c.l.b16 %v2155
    %v4106 = vunpack.c.h.b16 %v2155
    %v4107 = vunpack.c.l.b16 %v2156
    %v4108 = vunpack.c.h.b16 %v2156
    %v4109 = vunpack.c.l.b16 %v2157
    %v4110 = vunpack.c.h.b16 %v2157
    %v4111 = vunpack.c.l.b16 %v2158
    %v4112 = vunpack.c.h.b16 %v2158
    %v4113 = vunpack.c.l.b16 %v2159
    %v4114 = vunpack.c.h.b16 %v2159
    %v4115 = vunpack.c.l.b16 %v2160
    %v4116 = vunpack.c.h.b16 %v2160
    %v4117 = vunpack.c.l.b16 %v2161
    %v4118 = vunpack.c.h.b16 %v2161
    %v4119 = vunpack.c.l.b16 %v2162
    %v4120 = vunpack.c.h.b16 %v2162
    %v4121 = vunpack.c.l.b16 %v2163
    %v4122 = vunpack.c.h.b16 %v2163
    %v4123 = vunpack.c.l.b16 %v2164
    %v4124 = vunpack.c.h.b16 %v2164
    %v4125 = vunpack.c.l.b16 %v2165
    %v4126 = vunpack.c.h.b16 %v2165
    %v4127 = vunpack.c.l.b16 %v2166
    %v4128 = vunpack.c.h.b16 %v2166
    %v4129 = vunpack.c.l.b16 %v2167
    %v4130 = vunpack.c.h.b16 %v2167
    %v4131 = vunpack.c.l.b16 %v2168
    %v4132 = vunpack.c.h.b16 %v2168
    %v4133 = vunpack.c.l.b16 %v2169
    %v4134 = vunpack.c.h.b16 %v2169
    %v4135 = vunpack.c.l.b16 %v2170
    %v4136 = vunpack.c.h.b16 %v2170
    %v4137 = vunpack.c.l.b16 %v2171
    %v4138 = vunpack.c.h.b16 %v2171
    %v4139 = vunpack.c.l.b16 %v2172
    %v4140 = vunpack.c.h.b16 %v2172
    %v4141 = vunpack.c.l.b16 %v2173
    %v4142 = vunpack.c.h.b16 %v2173
    %v4143 = vunpack.c.l.b16 %v2174
    %v4144 = vunpack.c.h.b16 %v2174
    %v4145 = vunpack.c.l.b16 %v2175
    %v4146 = vunpack.c.h.b16 %v2175
    %v4147 = vunpack.c.l.b16 %v2176
    %v4148 = vunpack.c.h.b16 %v2176
    %v4149 = vunpack.c.l.b16 %v2177
    %v4150 = vunpack.c.h.b16 %v2177
    %v4151 = vunpack.c.l.b16 %v2178
    %v4152 = vunpack.c.h.b16 %v2178
    %v4153 = vpack.c.b16 %v3773, %v3769
    %v4154 = vpack.c.b16 %v3774, %v3770
    %v4155 = vpack.c.b16 %v3775, %v3771
    %v4156 = vpack.c.b16 %v3776, %v3772
    %v4157 = vpack.c.b16 %v3781, %v3777
    %v4158 = vpack.c.b16 %v3782, %v3778
    %v4159 = vpack.c.b16 %v3783, %v3779
    %v4160 = vpack.c.b16 %v3784, %v3780
    %v4161 = vpack.c.b16 %v3789, %v3785
    %v4162 = vpack.c.b16 %v3790, %v3786
    %v4163 = vpack.c.b16 %v3791, %v3787
    %v4164 = vpack.c.b16 %v3792, %v3788
    %v4165 = vpack.c.b16 %v3797, %v3793
    %v4166 = vpack.c.b16 %v3798, %v3794
    %v4167 = vpack.c.b16 %v3799, %v3795
    %v4168 = vpack.c.b16 %v3800, %v3796
    %v4169 = vpack.c.b16 %v3805, %v3801
    %v4170 = vpack.c.b16 %v3806, %v3802
    %v4171 = vpack.c.b16 %v3807, %v3803
    %v4172 = vpack.c.b16 %v3808, %v3804
    %v4173 = vpack.c.b16 %v3813, %v3809
    %v4174 = vpack.c.b16 %v3814, %v3810
    %v4175 = vpack.c.b16 %v3815, %v3811
    %v4176 = vpack.c.b16 %v3816, %v3812
    %v4177 = vpack.c.b16 %v3821, %v3817
    %v4178 = vpack.c.b16 %v3822, %v3818
    %v4179 = vpack.c.b16 %v3823, %v3819
    %v4180 = vpack.c.b16 %v3824, %v3820
    %v4181 = vpack.c.b16 %v3829, %v3825
    %v4182 = vpack.c.b16 %v3830, %v3826
    %v4183 = vpack.c.b16 %v3831, %v3827
    %v4184 = vpack.c.b16 %v3832, %v3828
    %v4185 = vpack.c.b16 %v3837, %v3833
    %v4186 = vpack.c.b16 %v3838, %v3834
    %v4187 = vpack.c.b16 %v3839, %v3835
    %v4188 = vpack.c.b16 %v3840, %v3836
    %v4189 = vpack.c.b16 %v3845, %v3841
    %v4190 = vpack.c.b16 %v3846, %v3842
    %v4191 = vpack.c.b16 %v3847, %v3843
    %v4192 = vpack.c.b16 %v3848, %v3844
    %v4193 = vpack.c.b16 %v3853, %v3849
    %v4194 = vpack.c.b16 %v3854, %v3850
    %v4195 = vpack.c.b16 %v3855, %v3851
    %v4196 = vpack.c.b16 %v3856, %v3852
    %v4197 = vpack.c.b16 %v3861, %v3857
    %v4198 = vpack.c.b16 %v3862, %v3858
    %v4199 = vpack.c.b16 %v3863, %v3859
    %v4200 = vpack.c.b16 %v3864, %v3860
    %v4201 = vpack.c.b16 %v3869, %v3865
    %v4202 = vpack.c.b16 %v3870, %v3866
    %v4203 = vpack.c.b16 %v3871, %v3867
    %v4204 = vpack.c.b16 %v3872, %v3868
    %v4205 = vpack.c.b16 %v3877, %v3873
    %v4206 = vpack.c.b16 %v3878, %v3874
    %v4207 = vpack.c.b16 %v3879, %v3875
    %v4208 = vpack.c.b16 %v3880, %v3876
    %v4209 = vpack.c.b16 %v3885, %v3881
    %v4210 = vpack.c.b16 %v3886, %v3882
    %v4211 = vpack.c.b16 %v3887, %v3883
    %v4212 = vpack.c.b16 %v3888, %v3884
    %v4213 = vpack.c.b16 %v3893, %v3889
    %v4214 = vpack.c.b16 %v3894, %v3890
    %v4215 = vpack.c.b16 %v3895, %v3891
    %v4216 = vpack.c.b16 %v3896, %v3892
    %v4217 = vpack.c.b16 %v3901, %v3897
    %v4218 = vpack.c.b16 %v3902, %v3898
    %v4219 = vpack.c.b16 %v3903, %v3899
    %v4220 = vpack.c.b16 %v3904, %v3900
    %v4221 = vpack.c.b16 %v3909, %v3905
    %v4222 = vpack.c.b16 %v3910, %v3906
    %v4223 = vpack.c.b16 %v3911, %v3907
    %v4224 = vpack.c.b16 %v3912, %v3908
    %v4225 = vpack.c.b16 %v3917, %v3913
    %v4226 = vpack.c.b16 %v3918, %v3914
    %v4227 = vpack.c.b16 %v3919, %v3915
    %v4228 = vpack.c.b16 %v3920, %v3916
    %v4229 = vpack.c.b16 %v3925, %v3921
    %v4230 = vpack.c.b16 %v3926, %v3922
    %v4231 = vpack.c.b16 %v3927, %v3923
    %v4232 = vpack.c.b16 %v3928, %v3924
    %v4233 = vpack.c.b16 %v3933, %v3929
    %v4234 = vpack.c.b16 %v3934, %v3930
    %v4235 = vpack.c.b16 %v3935, %v3931
    %v4236 = vpack.c.b16 %v3936, %v3932
    %v4237 = vpack.c.b16 %v3941, %v3937
    %v4238 = vpack.c.b16 %v3942, %v3938
    %v4239 = vpack.c.b16 %v3943, %v3939
    %v4240 = vpack.c.b16 %v3944, %v3940
    %v4241 = vpack.c.b16 %v3949, %v3945
    %v4242 = vpack.c.b16 %v3950, %v3946
    %v4243 = vpack.c.b16 %v3951, %v3947
    %v4244 = vpack.c.b16 %v3952, %v3948
    %v4245 = vpack.c.b16 %v3957, %v3953
    %v4246 = vpack.c.b16 %v3958, %v3954
    %v4247 = vpack.c.b16 %v3959, %v3955
    %v4248 = vpack.c.b16 %v3960, %v3956
    %v4249 = vpack.c.b16 %v3965, %v3961
    %v4250 = vpack.c.b16 %v3966, %v3962
    %v4251 = vpack.c.b16 %v3967, %v3963
    %v4252 = vpack.c.b16 %v3968, %v3964
    %v4253 = vpack.c.b16 %v3973, %v3969
    %v4254 = vpack.c.b16 %v3974, %v3970
    %v4255 = vpack.c.b16 %v3975, %v3971
    %v4256 = vpack.c.b16 %v3976, %v3972
    %v4257 = vpack.c.b16 %v3981, %v3977
    %v4258 = vpack.c.b16 %v3982, %v3978
    %v4259 = vpack.c.b16 %v3983, %v3979
    %v4260 = vpack.c.b16 %v3984, %v3980
    %v4261 = vpack.c.b16 %v3989, %v3985
    %v4262 = vpack.c.b16 %v3990, %v3986
    %v4263 = vpack.c.b16 %v3991, %v3987
    %v4264 = vpack.c.b16 %v3992, %v3988
    %v4265 = vpack.c.b16 %v3997, %v3993
    %v4266 = vpack.c.b16 %v3998, %v3994
    %v4267 = vpack.c.b16 %v3999, %v3995
    %v4268 = vpack.c.b16 %v4000, %v3996
    %v4269 = vpack.c.b16 %v4005, %v4001
    %v4270 = vpack.c.b16 %v4006, %v4002
    %v4271 = vpack.c.b16 %v4007, %v4003
    %v4272 = vpack.c.b16 %v4008, %v4004
    %v4273 = vpack.c.b16 %v4013, %v4009
    %v4274 = vpack.c.b16 %v4014, %v4010
    %v4275 = vpack.c.b16 %v4015, %v4011
    %v4276 = vpack.c.b16 %v4016, %v4012
    %v4277 = vpack.c.b16 %v4021, %v4017
    %v4278 = vpack.c.b16 %v4022, %v4018
    %v4279 = vpack.c.b16 %v4023, %v4019
    %v4280 = vpack.c.b16 %v4024, %v4020
    %v4281 = vpack.c.b16 %v4029, %v4025
    %v4282 = vpack.c.b16 %v4030, %v4026
    %v4283 = vpack.c.b16 %v4031, %v4027
    %v4284 = vpack.c.b16 %v4032, %v4028
    %v4285 = vpack.c.b16 %v4037, %v4033
    %v4286 = vpack.c.b16 %v4038, %v4034
    %v4287 = vpack.c.b16 %v4039, %v4035
    %v4288 = vpack.c.b16 %v4040, %v4036
    %v4289 = vpack.c.b16 %v4045, %v4041
    %v4290 = vpack.c.b16 %v4046, %v4042
    %v4291 = vpack.c.b16 %v4047, %v4043
    %v4292 = vpack.c.b16 %v4048, %v4044
    %v4293 = vpack.c.b16 %v4053, %v4049
    %v4294 = vpack.c.b16 %v4054, %v4050
    %v4295 = vpack.c.b16 %v4055, %v4051
    %v4296 = vpack.c.b16 %v4056, %v4052
    %v4297 = vpack.c.b16 %v4061, %v4057
    %v4298 = vpack.c.b16 %v4062, %v4058
    %v4299 = vpack.c.b16 %v4063, %v4059
    %v4300 = vpack.c.b16 %v4064, %v4060
    %v4301 = vpack.c.b16 %v4069, %v4065
    %v4302 = vpack.c.b16 %v4070, %v4066
    %v4303 = vpack.c.b16 %v4071, %v4067
    %v4304 = vpack.c.b16 %v4072, %v4068
    %v4305 = vpack.c.b16 %v4077, %v4073
    %v4306 = vpack.c.b16 %v4078, %v4074
    %v4307 = vpack.c.b16 %v4079, %v4075
    %v4308 = vpack.c.b16 %v4080, %v4076
    %v4309 = vpack.c.b16 %v4085, %v4081
    %v4310 = vpack.c.b16 %v4086, %v4082
    %v4311 = vpack.c.b16 %v4087, %v4083
    %v4312 = vpack.c.b16 %v4088, %v4084
    %v4313 = vpack.c.b16 %v4093, %v4089
    %v4314 = vpack.c.b16 %v4094, %v4090
    %v4315 = vpack.c.b16 %v4095, %v4091
    %v4316 = vpack.c.b16 %v4096, %v4092
    %v4317 = vpack.c.b16 %v4101, %v4097
    %v4318 = vpack.c.b16 %v4102, %v4098
    %v4319 = vpack.c.b16 %v4103, %v4099
    %v4320 = vpack.c.b16 %v4104, %v4100
    %v4321 = vpack.c.b16 %v4109, %v4105
    %v4322 = vpack.c.b16 %v4110, %v4106
    %v4323 = vpack.c.b16 %v4111, %v4107
    %v4324 = vpack.c.b16 %v4112, %v4108
    %v4325 = vpack.c.b16 %v4117, %v4113
    %v4326 = vpack.c.b16 %v4118, %v4114
    %v4327 = vpack.c.b16 %v4119, %v4115
    %v4328 = vpack.c.b16 %v4120, %v4116
    %v4329 = vpack.c.b16 %v4125, %v4121
    %v4330 = vpack.c.b16 %v4126, %v4122
    %v4331 = vpack.c.b16 %v4127, %v4123
    %v4332 = vpack.c.b16 %v4128, %v4124
    %v4333 = vpack.c.b16 %v4133, %v4129
    %v4334 = vpack.c.b16 %v4134, %v4130
    %v4335 = vpack.c.b16 %v4135, %v4131
    %v4336 = vpack.c.b16 %v4136, %v4132
    %v4337 = vpack.c.b16 %v4141, %v4137
    %v4338 = vpack.c.b16 %v4142, %v4138
    %v4339 = vpack.c.b16 %v4143, %v4139
    %v4340 = vpack.c.b16 %v4144, %v4140
    %v4341 = vpack.c.b16 %v4149, %v4145
    %v4342 = vpack.c.b16 %v4150, %v4146
    %v4343 = vpack.c.b16 %v4151, %v4147
    %v4344 = vpack.c.b16 %v4152, %v4148
    %4537 = vmatprep.subr.bf16.mxu0 %v4182
    %4538 = vmatpush1.bf16.msra.mxu0 %v4181
    %4539 = vmatprep.subr.bf16.mxu0 %v4178
    %4540 = vmatpush1.bf16.msra.mxu0 %v4177
    %4541 = vmatprep.subr.bf16.mxu0 %v4174
    %4542 = vmatpush1.bf16.msra.mxu0 %v4173
    %4543 = vmatprep.subr.bf16.mxu0 %v4170
    %4544 = vmatpush1.bf16.msra.mxu0 %v4169
    %4545 = vmatprep.subr.bf16.mxu0 %v4166
    %4546 = vmatpush1.bf16.msra.mxu0 %v4165
    %4547 = vmatprep.subr.bf16.mxu0 %v4162
    %4548 = vmatpush1.bf16.msra.mxu0 %v4161
    %4549 = vmatprep.subr.bf16.mxu0 %v4158
    %4550 = vmatpush1.bf16.msra.mxu0 %v4157
    %4551 = vmatprep.subr.bf16.mxu0 %v4154
    %4552 = vmatpush1.bf16.msra.mxu0 %v4153
    %4553 = vmatprep.subr.bf16.mxu0 %v4214
    %4554 = vmatpush2.bf16.msra.mxu0 %v4213
    %4555 = vmatprep.subr.bf16.mxu0 %v4210
    %4556 = vmatpush2.bf16.msra.mxu0 %v4209
    %4557 = vmatprep.subr.bf16.mxu0 %v4206
    %4558 = vmatpush2.bf16.msra.mxu0 %v4205
    %4559 = vmatprep.subr.bf16.mxu0 %v4202
    %4560 = vmatpush2.bf16.msra.mxu0 %v4201
    %4561 = vmatprep.subr.bf16.mxu0 %v4198
    %4562 = vmatpush2.bf16.msra.mxu0 %v4197
    %4563 = vmatprep.subr.bf16.mxu0 %v4194
    %4564 = vmatpush2.bf16.msra.mxu0 %v4193
    %4565 = vmatprep.subr.bf16.mxu0 %v4190
    %4566 = vmatpush2.bf16.msra.mxu0 %v4189
    %4567 = vmatprep.subr.bf16.mxu0 %v4186
    %4568 = vmatpush2.bf16.msra.mxu0 %v4185
    %4569 = vmatprep.mubr.bf16.mxu0 %v1976
    %4570 = vmatmul.mubr.bf16.gmra.mxu0 %v1975
    %v4571 = vpop.f32.mrf.mxu0
    %v4572 = vadd.f32 %v3448, %v4571
    %v4573 = vpop.f32.mrf.mxu0
    %v4574 = vadd.f32 %v3450, %v4573
    %v4575 = vpop.f32.mrf.mxu0
    %v4576 = vpop.f32.mrf.mxu0
    %4577 = vdwg.mxu0
    %4578 = vmatprep.subr.bf16.mxu0 %v4246
    %4579 = vmatpush1.bf16.msra.mxu0 %v4245
    %4580 = vmatprep.subr.bf16.mxu0 %v4242
    %4581 = vmatpush1.bf16.msra.mxu0 %v4241
    %4582 = vmatprep.subr.bf16.mxu0 %v4238
    %4583 = vmatpush1.bf16.msra.mxu0 %v4237
    %4584 = vmatprep.subr.bf16.mxu0 %v4234
    %4585 = vmatpush1.bf16.msra.mxu0 %v4233
    %4586 = vmatprep.subr.bf16.mxu0 %v4230
    %4587 = vmatpush1.bf16.msra.mxu0 %v4229
    %4588 = vmatprep.subr.bf16.mxu0 %v4226
    %4589 = vmatpush1.bf16.msra.mxu0 %v4225
    %4590 = vmatprep.subr.bf16.mxu0 %v4222
    %4591 = vmatpush1.bf16.msra.mxu0 %v4221
    %4592 = vmatprep.subr.bf16.mxu0 %v4218
    %4593 = vmatpush1.bf16.msra.mxu0 %v4217
    %4594 = vmatprep.subr.bf16.mxu0 %v4278
    %4595 = vmatpush2.bf16.msra.mxu0 %v4277
    %4596 = vmatprep.subr.bf16.mxu0 %v4274
    %4597 = vmatpush2.bf16.msra.mxu0 %v4273
    %4598 = vmatprep.subr.bf16.mxu0 %v4270
    %4599 = vmatpush2.bf16.msra.mxu0 %v4269
    %4600 = vmatprep.subr.bf16.mxu0 %v4266
    %4601 = vmatpush2.bf16.msra.mxu0 %v4265
    %4602 = vmatprep.subr.bf16.mxu0 %v4262
    %4603 = vmatpush2.bf16.msra.mxu0 %v4261
    %4604 = vmatprep.subr.bf16.mxu0 %v4258
    %4605 = vmatpush2.bf16.msra.mxu0 %v4257
    %4606 = vmatprep.subr.bf16.mxu0 %v4254
    %4607 = vmatpush2.bf16.msra.mxu0 %v4253
    %4608 = vmatprep.subr.bf16.mxu0 %v4250
    %4609 = vmatpush2.bf16.msra.mxu0 %v4249
    %4610 = vmatprep.mubr.bf16.mxu0 %v1978
    %4611 = vmatmul.mubr.bf16.gmra.mxu0 %v1977
    %v4612 = vpop.f32.mrf.mxu0
    %v4613 = vadd.f32 %v4572, %v4612
    %v4614 = vpop.f32.mrf.mxu0
    %v4615 = vadd.f32 %v4574, %v4614
    %v4616 = vpop.f32.mrf.mxu0
    %v4617 = vpop.f32.mrf.mxu0
    %4618 = vdwg.mxu0
    %4619 = vmatprep.subr.bf16.mxu0 %v4310
    %4620 = vmatpush1.bf16.msra.mxu0 %v4309
    %4621 = vmatprep.subr.bf16.mxu0 %v4306
    %4622 = vmatpush1.bf16.msra.mxu0 %v4305
    %4623 = vmatprep.subr.bf16.mxu0 %v4302
    %4624 = vmatpush1.bf16.msra.mxu0 %v4301
    %4625 = vmatprep.subr.bf16.mxu0 %v4298
    %4626 = vmatpush1.bf16.msra.mxu0 %v4297
    %4627 = vmatprep.subr.bf16.mxu0 %v4294
    %4628 = vmatpush1.bf16.msra.mxu0 %v4293
    %4629 = vmatprep.subr.bf16.mxu0 %v4290
    %4630 = vmatpush1.bf16.msra.mxu0 %v4289
    %4631 = vmatprep.subr.bf16.mxu0 %v4286
    %4632 = vmatpush1.bf16.msra.mxu0 %v4285
    %4633 = vmatprep.subr.bf16.mxu0 %v4282
    %4634 = vmatpush1.bf16.msra.mxu0 %v4281
    %4635 = vmatprep.subr.bf16.mxu0 %v4342
    %4636 = vmatpush2.bf16.msra.mxu0 %v4341
    %4637 = vmatprep.subr.bf16.mxu0 %v4338
    %4638 = vmatpush2.bf16.msra.mxu0 %v4337
    %4639 = vmatprep.subr.bf16.mxu0 %v4334
    %4640 = vmatpush2.bf16.msra.mxu0 %v4333
    %4641 = vmatprep.subr.bf16.mxu0 %v4330
    %4642 = vmatpush2.bf16.msra.mxu0 %v4329
    %4643 = vmatprep.subr.bf16.mxu0 %v4326
    %4644 = vmatpush2.bf16.msra.mxu0 %v4325
    %4645 = vmatprep.subr.bf16.mxu0 %v4322
    %4646 = vmatpush2.bf16.msra.mxu0 %v4321
    %4647 = vmatprep.subr.bf16.mxu0 %v4318
    %4648 = vmatpush2.bf16.msra.mxu0 %v4317
    %4649 = vmatprep.subr.bf16.mxu0 %v4314
    %4650 = vmatpush2.bf16.msra.mxu0 %v4313
    %4651 = vmatprep.mubr.bf16.mxu0 %v1980
    %4652 = vmatmul.mubr.bf16.gmra.mxu0 %v1979
    %v4653 = vpop.f32.mrf.mxu0
    %v4654 = vadd.f32 %v4613, %v4653
    %v4655 = vpop.f32.mrf.mxu0
    %v4656 = vadd.f32 %v4615, %v4655
    %v4657 = vpop.f32.mrf.mxu0
    %v4658 = vpop.f32.mrf.mxu0
    %4659 = vdwg.mxu0
    %4660 = vmatprep.subr.bf16.mxu0 %v4184
    %4661 = vmatpush1.bf16.msra.mxu0 %v4183
    %4662 = vmatprep.subr.bf16.mxu0 %v4180
    %4663 = vmatpush1.bf16.msra.mxu0 %v4179
    %4664 = vmatprep.subr.bf16.mxu0 %v4176
    %4665 = vmatpush1.bf16.msra.mxu0 %v4175
    %4666 = vmatprep.subr.bf16.mxu0 %v4172
    %4667 = vmatpush1.bf16.msra.mxu0 %v4171
    %4668 = vmatprep.subr.bf16.mxu0 %v4168
    %4669 = vmatpush1.bf16.msra.mxu0 %v4167
    %4670 = vmatprep.subr.bf16.mxu0 %v4164
    %4671 = vmatpush1.bf16.msra.mxu0 %v4163
    %4672 = vmatprep.subr.bf16.mxu0 %v4160
    %4673 = vmatpush1.bf16.msra.mxu0 %v4159
    %4674 = vmatprep.subr.bf16.mxu0 %v4156
    %4675 = vmatpush1.bf16.msra.mxu0 %v4155
    %4676 = vmatprep.subr.bf16.mxu0 %v4216
    %4677 = vmatpush2.bf16.msra.mxu0 %v4215
    %4678 = vmatprep.subr.bf16.mxu0 %v4212
    %4679 = vmatpush2.bf16.msra.mxu0 %v4211
    %4680 = vmatprep.subr.bf16.mxu0 %v4208
    %4681 = vmatpush2.bf16.msra.mxu0 %v4207
    %4682 = vmatprep.subr.bf16.mxu0 %v4204
    %4683 = vmatpush2.bf16.msra.mxu0 %v4203
    %4684 = vmatprep.subr.bf16.mxu0 %v4200
    %4685 = vmatpush2.bf16.msra.mxu0 %v4199
    %4686 = vmatprep.subr.bf16.mxu0 %v4196
    %4687 = vmatpush2.bf16.msra.mxu0 %v4195
    %4688 = vmatprep.subr.bf16.mxu0 %v4192
    %4689 = vmatpush2.bf16.msra.mxu0 %v4191
    %4690 = vmatprep.subr.bf16.mxu0 %v4188
    %4691 = vmatpush2.bf16.msra.mxu0 %v4187
    %4692 = vmatprep.mubr.bf16.mxu0 %v1976
    %4693 = vmatmul.mubr.bf16.gmra.mxu0 %v1975
    %v4694 = vpop.f32.mrf.mxu0
    %v4695 = vadd.f32 %v3571, %v4694
    %v4696 = vpop.f32.mrf.mxu0
    %v4697 = vadd.f32 %v3573, %v4696
    %v4698 = vpop.f32.mrf.mxu0
    %v4699 = vpop.f32.mrf.mxu0
    %4700 = vdwg.mxu0
    %4701 = vmatprep.subr.bf16.mxu0 %v4248
    %4702 = vmatpush1.bf16.msra.mxu0 %v4247
    %4703 = vmatprep.subr.bf16.mxu0 %v4244
    %4704 = vmatpush1.bf16.msra.mxu0 %v4243
    %4705 = vmatprep.subr.bf16.mxu0 %v4240
    %4706 = vmatpush1.bf16.msra.mxu0 %v4239
    %4707 = vmatprep.subr.bf16.mxu0 %v4236
    %4708 = vmatpush1.bf16.msra.mxu0 %v4235
    %4709 = vmatprep.subr.bf16.mxu0 %v4232
    %4710 = vmatpush1.bf16.msra.mxu0 %v4231
    %4711 = vmatprep.subr.bf16.mxu0 %v4228
    %4712 = vmatpush1.bf16.msra.mxu0 %v4227
    %4713 = vmatprep.subr.bf16.mxu0 %v4224
    %4714 = vmatpush1.bf16.msra.mxu0 %v4223
    %4715 = vmatprep.subr.bf16.mxu0 %v4220
    %4716 = vmatpush1.bf16.msra.mxu0 %v4219
    %4717 = vmatprep.subr.bf16.mxu0 %v4280
    %4718 = vmatpush2.bf16.msra.mxu0 %v4279
    %4719 = vmatprep.subr.bf16.mxu0 %v4276
    %4720 = vmatpush2.bf16.msra.mxu0 %v4275
    %4721 = vmatprep.subr.bf16.mxu0 %v4272
    %4722 = vmatpush2.bf16.msra.mxu0 %v4271
    %4723 = vmatprep.subr.bf16.mxu0 %v4268
    %4724 = vmatpush2.bf16.msra.mxu0 %v4267
    %4725 = vmatprep.subr.bf16.mxu0 %v4264
    %4726 = vmatpush2.bf16.msra.mxu0 %v4263
    %4727 = vmatprep.subr.bf16.mxu0 %v4260
    %4728 = vmatpush2.bf16.msra.mxu0 %v4259
    %4729 = vmatprep.subr.bf16.mxu0 %v4256
    %4730 = vmatpush2.bf16.msra.mxu0 %v4255
    %4731 = vmatprep.subr.bf16.mxu0 %v4252
    %4732 = vmatpush2.bf16.msra.mxu0 %v4251
    %4733 = vmatprep.mubr.bf16.mxu0 %v1978
    %4734 = vmatmul.mubr.bf16.gmra.mxu0 %v1977
    %v4735 = vpop.f32.mrf.mxu0
    %v4736 = vadd.f32 %v4695, %v4735
    %v4737 = vpop.f32.mrf.mxu0
    %v4738 = vadd.f32 %v4697, %v4737
    %v4739 = vpop.f32.mrf.mxu0
    %v4740 = vpop.f32.mrf.mxu0
    %4741 = vdwg.mxu0
    %4742 = vmatprep.subr.bf16.mxu0 %v4312
    %4743 = vmatpush1.bf16.msra.mxu0 %v4311
    %4744 = vmatprep.subr.bf16.mxu0 %v4308
    %4745 = vmatpush1.bf16.msra.mxu0 %v4307
    %4746 = vmatprep.subr.bf16.mxu0 %v4304
    %4747 = vmatpush1.bf16.msra.mxu0 %v4303
    %4748 = vmatprep.subr.bf16.mxu0 %v4300
    %4749 = vmatpush1.bf16.msra.mxu0 %v4299
    %4750 = vmatprep.subr.bf16.mxu0 %v4296
    %4751 = vmatpush1.bf16.msra.mxu0 %v4295
    %4752 = vmatprep.subr.bf16.mxu0 %v4292
    %4753 = vmatpush1.bf16.msra.mxu0 %v4291
    %4754 = vmatprep.subr.bf16.mxu0 %v4288
    %4755 = vmatpush1.bf16.msra.mxu0 %v4287
    %4756 = vmatprep.subr.bf16.mxu0 %v4284
    %4757 = vmatpush1.bf16.msra.mxu0 %v4283
    %4758 = vmatprep.subr.bf16.mxu0 %v4344
    %4759 = vmatpush2.bf16.msra.mxu0 %v4343
    %4760 = vmatprep.subr.bf16.mxu0 %v4340
    %4761 = vmatpush2.bf16.msra.mxu0 %v4339
    %4762 = vmatprep.subr.bf16.mxu0 %v4336
    %4763 = vmatpush2.bf16.msra.mxu0 %v4335
    %4764 = vmatprep.subr.bf16.mxu0 %v4332
    %4765 = vmatpush2.bf16.msra.mxu0 %v4331
    %4766 = vmatprep.subr.bf16.mxu0 %v4328
    %4767 = vmatpush2.bf16.msra.mxu0 %v4327
    %4768 = vmatprep.subr.bf16.mxu0 %v4324
    %4769 = vmatpush2.bf16.msra.mxu0 %v4323
    %4770 = vmatprep.subr.bf16.mxu0 %v4320
    %4771 = vmatpush2.bf16.msra.mxu0 %v4319
    %4772 = vmatprep.subr.bf16.mxu0 %v4316
    %4773 = vmatpush2.bf16.msra.mxu0 %v4315
    %4774 = vmatprep.mubr.bf16.mxu0 %v1980
    %4775 = vmatmul.mubr.bf16.gmra.mxu0 %v1979
    %v4776 = vpop.f32.mrf.mxu0
    %v4777 = vadd.f32 %v4736, %v4776
    %v4778 = vpop.f32.mrf.mxu0
    %v4779 = vadd.f32 %v4738, %v4778
    %v4780 = vpop.f32.mrf.mxu0
    %v4781 = vpop.f32.mrf.mxu0
    %4782 = vdwg.mxu0
    %v4783 = vld [vmem:[%s4] sm:$0xf]
    %v4785 = vlaneseq
    %v4786 = vshrl.u32 %v4785, 7
    %v4787 = vsub.s32 0, %v4786
    %v4788 = vrot.slane %v4783, %v4787
    %v4789 = vlaneseq
    %v4790 = vshrl.u32 %v4789, 7
    %v4791 = vsub.s32 1, %v4790
    %v4792 = vrot.slane %v4783, %v4791
    %v4793 = vlaneseq
    %v4794 = vshrl.u32 %v4793, 7
    %v4795 = vsub.s32 2, %v4794
    %v4796 = vrot.slane %v4783, %v4795
    %v4797 = vlaneseq
    %v4798 = vshrl.u32 %v4797, 7
    %v4799 = vsub.s32 3, %v4798
    %v4800 = vrot.slane %v4783, %v4799
    %v4805 = vadd.f32 %v4654, %v4788
    %v4806 = vadd.f32 %v4656, %v4792
    %v4807 = vadd.f32 %v4777, %v4796
    %v4808 = vadd.f32 %v4779, %v4800
    %v4809 = vmax.f32 %v4805, 0.0
    %v4810 = vmax.f32 %v4806, 0.0
    %v4811 = vmax.f32 %v4807, 0.0
    %v4812 = vmax.f32 %v4808, 0.0
    %v4813 = vpack.c.bf16 %v4809, %v4809
    %v4814 = vpack.c.bf16 %v4810, %v4810
    %v4815 = vpack.c.bf16 %v4811, %v4811
    %v4816 = vpack.c.bf16 %v4812, %v4812
    %v4817 = vld [vmem:[#allocation10] sm:$0xf]
    %v4818 = vld [vmem:[#allocation10 + $0x4] sm:$0xf]
    %v4819 = vld [vmem:[#allocation10 + $0x8] sm:$0xf]
    %v4820 = vld [vmem:[#allocation10 + $0xc] sm:$0xf]
    %v4821 = vld [vmem:[#allocation10 + $0x10] sm:$0xf]
    %v4822 = vld [vmem:[#allocation10 + $0x14] sm:$0xf]
    %v4823 = vld [vmem:[#allocation10 + $0x18] sm:$0xf]
    %v4824 = vld [vmem:[#allocation10 + $0x1c] sm:$0xf]
    %v4825 = vld [vmem:[#allocation10 + $0x20] sm:$0xf]
    %v4826 = vld [vmem:[#allocation10 + $0x24] sm:$0xf]
    %v4827 = vld [vmem:[#allocation10 + $0x28] sm:$0xf]
    %v4828 = vld [vmem:[#allocation10 + $0x2c] sm:$0xf]
    %v4829 = vld [vmem:[#allocation10 + $0x30] sm:$0xf]
    %v4830 = vld [vmem:[#allocation10 + $0x34] sm:$0xf]
    %v4831 = vld [vmem:[#allocation10 + $0x38] sm:$0xf]
    %v4832 = vld [vmem:[#allocation10 + $0x3c] sm:$0xf]
    %v4833 = vld [vmem:[#allocation10 + $0x40] sm:$0xf]
    %v4834 = vld [vmem:[#allocation10 + $0x44] sm:$0xf]
    %v4835 = vld [vmem:[#allocation10 + $0x48] sm:$0xf]
    %v4836 = vld [vmem:[#allocation10 + $0x4c] sm:$0xf]
    %v4837 = vld [vmem:[#allocation10 + $0x50] sm:$0xf]
    %v4838 = vld [vmem:[#allocation10 + $0x54] sm:$0xf]
    %v4839 = vld [vmem:[#allocation10 + $0x58] sm:$0xf]
    %v4840 = vld [vmem:[#allocation10 + $0x5c] sm:$0xf]
    %v4841 = vld [vmem:[#allocation10 + $0x60] sm:$0xf]
    %v4842 = vld [vmem:[#allocation10 + $0x64] sm:$0xf]
    %v4843 = vld [vmem:[#allocation10 + $0x68] sm:$0xf]
    %v4844 = vld [vmem:[#allocation10 + $0x6c] sm:$0xf]
    %v4845 = vld [vmem:[#allocation10 + $0x70] sm:$0xf]
    %v4846 = vld [vmem:[#allocation10 + $0x74] sm:$0xf]
    %v4847 = vld [vmem:[#allocation10 + $0x78] sm:$0xf]
    %v4848 = vld [vmem:[#allocation10 + $0x7c] sm:$0xf]
    %v4849 = vld [vmem:[#allocation10 + $0x80] sm:$0xf]
    %v4850 = vld [vmem:[#allocation10 + $0x84] sm:$0xf]
    %v4851 = vld [vmem:[#allocation10 + $0x88] sm:$0xf]
    %v4852 = vld [vmem:[#allocation10 + $0x8c] sm:$0xf]
    %v4853 = vld [vmem:[#allocation10 + $0x90] sm:$0xf]
    %v4854 = vld [vmem:[#allocation10 + $0x94] sm:$0xf]
    %v4855 = vld [vmem:[#allocation10 + $0x98] sm:$0xf]
    %v4856 = vld [vmem:[#allocation10 + $0x9c] sm:$0xf]
    %v4857 = vld [vmem:[#allocation10 + $0xa0] sm:$0xf]
    %v4858 = vld [vmem:[#allocation10 + $0xa4] sm:$0xf]
    %v4859 = vld [vmem:[#allocation10 + $0xa8] sm:$0xf]
    %v4860 = vld [vmem:[#allocation10 + $0xac] sm:$0xf]
    %v4861 = vld [vmem:[#allocation10 + $0xb0] sm:$0xf]
    %v4862 = vld [vmem:[#allocation10 + $0xb4] sm:$0xf]
    %v4863 = vld [vmem:[#allocation10 + $0xb8] sm:$0xf]
    %v4864 = vld [vmem:[#allocation10 + $0xbc] sm:$0xf]
    %v4865 = vld [vmem:[#allocation10 + $0xc0] sm:$0xf]
    %v4866 = vld [vmem:[#allocation10 + $0xc4] sm:$0xf]
    %v4867 = vld [vmem:[#allocation10 + $0xc8] sm:$0xf]
    %v4868 = vld [vmem:[#allocation10 + $0xcc] sm:$0xf]
    %v4869 = vld [vmem:[#allocation10 + $0xd0] sm:$0xf]
    %v4870 = vld [vmem:[#allocation10 + $0xd4] sm:$0xf]
    %v4871 = vld [vmem:[#allocation10 + $0xd8] sm:$0xf]
    %v4872 = vld [vmem:[#allocation10 + $0xdc] sm:$0xf]
    %v4873 = vld [vmem:[#allocation10 + $0xe0] sm:$0xf]
    %v4874 = vld [vmem:[#allocation10 + $0xe4] sm:$0xf]
    %v4875 = vld [vmem:[#allocation10 + $0xe8] sm:$0xf]
    %v4876 = vld [vmem:[#allocation10 + $0xec] sm:$0xf]
    %v4877 = vld [vmem:[#allocation10 + $0xf0] sm:$0xf]
    %v4878 = vld [vmem:[#allocation10 + $0xf4] sm:$0xf]
    %v4879 = vld [vmem:[#allocation10 + $0xf8] sm:$0xf]
    %v4880 = vld [vmem:[#allocation10 + $0xfc] sm:$0xf]
    %v4881 = vld [vmem:[%s6] sm:$0x1]
    %v4883 = vlaneseq
    %v4884 = vshrl.u32 %v4883, 7
    %v4885 = vsub.s32 0, %v4884
    %v4886 = vrot.slane %v4881, %v4885
    %v4952 = vunpack.c.l.b16 %v4817
    %v4953 = vunpack.c.l.b16 %v4818
    %v4954 = vunpack.c.l.b16 %v4819
    %v4955 = vunpack.c.l.b16 %v4820
    %v4956 = vunpack.c.l.b16 %v4821
    %v4957 = vunpack.c.l.b16 %v4822
    %v4958 = vunpack.c.l.b16 %v4823
    %v4959 = vunpack.c.l.b16 %v4824
    %v4960 = vunpack.c.l.b16 %v4825
    %v4961 = vunpack.c.l.b16 %v4826
    %v4962 = vunpack.c.l.b16 %v4827
    %v4963 = vunpack.c.l.b16 %v4828
    %v4964 = vunpack.c.l.b16 %v4829
    %v4965 = vunpack.c.l.b16 %v4830
    %v4966 = vunpack.c.l.b16 %v4831
    %v4967 = vunpack.c.l.b16 %v4832
    %v4968 = vunpack.c.l.b16 %v4833
    %v4969 = vunpack.c.l.b16 %v4834
    %v4970 = vunpack.c.l.b16 %v4835
    %v4971 = vunpack.c.l.b16 %v4836
    %v4972 = vunpack.c.l.b16 %v4837
    %v4973 = vunpack.c.l.b16 %v4838
    %v4974 = vunpack.c.l.b16 %v4839
    %v4975 = vunpack.c.l.b16 %v4840
    %v4976 = vunpack.c.l.b16 %v4841
    %v4977 = vunpack.c.l.b16 %v4842
    %v4978 = vunpack.c.l.b16 %v4843
    %v4979 = vunpack.c.l.b16 %v4844
    %v4980 = vunpack.c.l.b16 %v4845
    %v4981 = vunpack.c.l.b16 %v4846
    %v4982 = vunpack.c.l.b16 %v4847
    %v4983 = vunpack.c.l.b16 %v4848
    %v4984 = vunpack.c.l.b16 %v4849
    %v4985 = vunpack.c.l.b16 %v4850
    %v4986 = vunpack.c.l.b16 %v4851
    %v4987 = vunpack.c.l.b16 %v4852
    %v4988 = vunpack.c.l.b16 %v4853
    %v4989 = vunpack.c.l.b16 %v4854
    %v4990 = vunpack.c.l.b16 %v4855
    %v4991 = vunpack.c.l.b16 %v4856
    %v4992 = vunpack.c.l.b16 %v4857
    %v4993 = vunpack.c.l.b16 %v4858
    %v4994 = vunpack.c.l.b16 %v4859
    %v4995 = vunpack.c.l.b16 %v4860
    %v4996 = vunpack.c.l.b16 %v4861
    %v4997 = vunpack.c.l.b16 %v4862
    %v4998 = vunpack.c.l.b16 %v4863
    %v4999 = vunpack.c.l.b16 %v4864
    %v5000 = vunpack.c.l.b16 %v4865
    %v5001 = vunpack.c.l.b16 %v4866
    %v5002 = vunpack.c.l.b16 %v4867
    %v5003 = vunpack.c.l.b16 %v4868
    %v5004 = vunpack.c.l.b16 %v4869
    %v5005 = vunpack.c.l.b16 %v4870
    %v5006 = vunpack.c.l.b16 %v4871
    %v5007 = vunpack.c.l.b16 %v4872
    %v5008 = vunpack.c.l.b16 %v4873
    %v5009 = vunpack.c.l.b16 %v4874
    %v5010 = vunpack.c.l.b16 %v4875
    %v5011 = vunpack.c.l.b16 %v4876
    %v5012 = vunpack.c.l.b16 %v4877
    %v5013 = vunpack.c.l.b16 %v4878
    %v5014 = vunpack.c.l.b16 %v4879
    %v5015 = vunpack.c.l.b16 %v4880
    %v5016 = vpack.c.b16 %v4953, %v4952
    %v5017 = vpack.c.b16 %v4955, %v4954
    %v5018 = vpack.c.b16 %v4957, %v4956
    %v5019 = vpack.c.b16 %v4959, %v4958
    %v5020 = vpack.c.b16 %v4961, %v4960
    %v5021 = vpack.c.b16 %v4963, %v4962
    %v5022 = vpack.c.b16 %v4965, %v4964
    %v5023 = vpack.c.b16 %v4967, %v4966
    %v5024 = vpack.c.b16 %v4969, %v4968
    %v5025 = vpack.c.b16 %v4971, %v4970
    %v5026 = vpack.c.b16 %v4973, %v4972
    %v5027 = vpack.c.b16 %v4975, %v4974
    %v5028 = vpack.c.b16 %v4977, %v4976
    %v5029 = vpack.c.b16 %v4979, %v4978
    %v5030 = vpack.c.b16 %v4981, %v4980
    %v5031 = vpack.c.b16 %v4983, %v4982
    %v5032 = vpack.c.b16 %v4985, %v4984
    %v5033 = vpack.c.b16 %v4987, %v4986
    %v5034 = vpack.c.b16 %v4989, %v4988
    %v5035 = vpack.c.b16 %v4991, %v4990
    %v5036 = vpack.c.b16 %v4993, %v4992
    %v5037 = vpack.c.b16 %v4995, %v4994
    %v5038 = vpack.c.b16 %v4997, %v4996
    %v5039 = vpack.c.b16 %v4999, %v4998
    %v5040 = vpack.c.b16 %v5001, %v5000
    %v5041 = vpack.c.b16 %v5003, %v5002
    %v5042 = vpack.c.b16 %v5005, %v5004
    %v5043 = vpack.c.b16 %v5007, %v5006
    %v5044 = vpack.c.b16 %v5009, %v5008
    %v5045 = vpack.c.b16 %v5011, %v5010
    %v5046 = vpack.c.b16 %v5013, %v5012
    %v5047 = vpack.c.b16 %v5015, %v5014
    %5080 = vmatprep.subr.bf16.mxu0 0
    %5081 = vmatpush1.bf16.msra.mxu0 %v5023
    %5082 = vmatprep.subr.bf16.mxu0 0
    %5083 = vmatpush1.bf16.msra.mxu0 %v5022
    %5084 = vmatprep.subr.bf16.mxu0 0
    %5085 = vmatpush1.bf16.msra.mxu0 %v5021
    %5086 = vmatprep.subr.bf16.mxu0 0
    %5087 = vmatpush1.bf16.msra.mxu0 %v5020
    %5088 = vmatprep.subr.bf16.mxu0 0
    %5089 = vmatpush1.bf16.msra.mxu0 %v5019
    %5090 = vmatprep.subr.bf16.mxu0 0
    %5091 = vmatpush1.bf16.msra.mxu0 %v5018
    %5092 = vmatprep.subr.bf16.mxu0 0
    %5093 = vmatpush1.bf16.msra.mxu0 %v5017
    %5094 = vmatprep.subr.bf16.mxu0 0
    %5095 = vmatpush1.bf16.msra.mxu0 %v5016
    %5096 = vmatprep.subr.bf16.mxu0 0
    %5097 = vmatpush2.bf16.msra.mxu0 %v5031
    %5098 = vmatprep.subr.bf16.mxu0 0
    %5099 = vmatpush2.bf16.msra.mxu0 %v5030
    %5100 = vmatprep.subr.bf16.mxu0 0
    %5101 = vmatpush2.bf16.msra.mxu0 %v5029
    %5102 = vmatprep.subr.bf16.mxu0 0
    %5103 = vmatpush2.bf16.msra.mxu0 %v5028
    %5104 = vmatprep.subr.bf16.mxu0 0
    %5105 = vmatpush2.bf16.msra.mxu0 %v5027
    %5106 = vmatprep.subr.bf16.mxu0 0
    %5107 = vmatpush2.bf16.msra.mxu0 %v5026
    %5108 = vmatprep.subr.bf16.mxu0 0
    %5109 = vmatpush2.bf16.msra.mxu0 %v5025
    %5110 = vmatprep.subr.bf16.mxu0 0
    %5111 = vmatpush2.bf16.msra.mxu0 %v5024
    %5112 = vmatprep.mubr.bf16.mxu0 %v4814
    %5113 = vmatmul.mubr.bf16.gmra.mxu0 %v4813
    %v5114 = vpop.f32.mrf.mxu0
    %v5115 = vadd.f32 %v4886, %v5114
    %v5116 = vpop.f32.mrf.mxu0
    %v5117 = vpop.f32.mrf.mxu0
    %v5118 = vpop.f32.mrf.mxu0
    %5119 = vdwg.mxu0
    %5120 = vmatprep.subr.bf16.mxu0 0
    %5121 = vmatpush1.bf16.msra.mxu0 %v5039
    %5122 = vmatprep.subr.bf16.mxu0 0
    %5123 = vmatpush1.bf16.msra.mxu0 %v5038
    %5124 = vmatprep.subr.bf16.mxu0 0
    %5125 = vmatpush1.bf16.msra.mxu0 %v5037
    %5126 = vmatprep.subr.bf16.mxu0 0
    %5127 = vmatpush1.bf16.msra.mxu0 %v5036
    %5128 = vmatprep.subr.bf16.mxu0 0
    %5129 = vmatpush1.bf16.msra.mxu0 %v5035
    %5130 = vmatprep.subr.bf16.mxu0 0
    %5131 = vmatpush1.bf16.msra.mxu0 %v5034
    %5132 = vmatprep.subr.bf16.mxu0 0
    %5133 = vmatpush1.bf16.msra.mxu0 %v5033
    %5134 = vmatprep.subr.bf16.mxu0 0
    %5135 = vmatpush1.bf16.msra.mxu0 %v5032
    %5136 = vmatprep.subr.bf16.mxu0 0
    %5137 = vmatpush2.bf16.msra.mxu0 %v5047
    %5138 = vmatprep.subr.bf16.mxu0 0
    %5139 = vmatpush2.bf16.msra.mxu0 %v5046
    %5140 = vmatprep.subr.bf16.mxu0 0
    %5141 = vmatpush2.bf16.msra.mxu0 %v5045
    %5142 = vmatprep.subr.bf16.mxu0 0
    %5143 = vmatpush2.bf16.msra.mxu0 %v5044
    %5144 = vmatprep.subr.bf16.mxu0 0
    %5145 = vmatpush2.bf16.msra.mxu0 %v5043
    %5146 = vmatprep.subr.bf16.mxu0 0
    %5147 = vmatpush2.bf16.msra.mxu0 %v5042
    %5148 = vmatprep.subr.bf16.mxu0 0
    %5149 = vmatpush2.bf16.msra.mxu0 %v5041
    %5150 = vmatprep.subr.bf16.mxu0 0
    %5151 = vmatpush2.bf16.msra.mxu0 %v5040
    %5152 = vmatprep.mubr.bf16.mxu0 %v4816
    %5153 = vmatmul.mubr.bf16.gmra.mxu0 %v4815
    %v5154 = vpop.f32.mrf.mxu0
    %v5155 = vadd.f32 %v5115, %v5154
    %v5156 = vpop.f32.mrf.mxu0
    %v5157 = vpop.f32.mrf.mxu0
    %v5158 = vpop.f32.mrf.mxu0
    %5159 = vdwg.mxu0
    %v5160 = vmax.f32 %v5155, 0.0
    %v5161 = vpack.c.bf16 %v5160, %v5160
    %v5162 = vld [vmem:[#allocation11] sm:$0xf]
    %v5163 = vld [vmem:[#allocation11 + $0x4] sm:$0xf]
    %v5164 = vld [vmem:[#allocation11 + $0x8] sm:$0xf]
    %v5165 = vld [vmem:[#allocation11 + $0xc] sm:$0xf]
    %v5166 = vld [vmem:[#allocation11 + $0x10] sm:$0xf]
    %v5167 = vld [vmem:[#allocation11 + $0x14] sm:$0xf]
    %v5168 = vld [vmem:[#allocation11 + $0x18] sm:$0xf]
    %v5169 = vld [vmem:[#allocation11 + $0x1c] sm:$0xf]
    %v5170 = vld [vmem:[#allocation11 + $0x20] sm:$0xf]
    %v5171 = vld [vmem:[#allocation11 + $0x24] sm:$0xf]
    %v5172 = vld [vmem:[#allocation11 + $0x28] sm:$0xf]
    %v5173 = vld [vmem:[#allocation11 + $0x2c] sm:$0xf]
    %v5174 = vld [vmem:[#allocation11 + $0x30] sm:$0xf]
    %v5175 = vld [vmem:[#allocation11 + $0x34] sm:$0xf]
    %v5176 = vld [vmem:[#allocation11 + $0x38] sm:$0xf]
    %v5177 = vld [vmem:[#allocation11 + $0x3c] sm:$0xf]
    %v5178 = vld [vmem:[%s8] sm:$0x1]
    %v5180 = vlaneseq
    %v5181 = vshrl.u32 %v5180, 7
    %v5182 = vsub.s32 0, %v5181
    %v5183 = vrot.slane %v5178, %v5182
    %v5201 = vunpack.c.l.b16 %v5162
    %v5202 = vunpack.c.l.b16 %v5163
    %v5203 = vunpack.c.l.b16 %v5164
    %v5204 = vunpack.c.l.b16 %v5165
    %v5205 = vunpack.c.l.b16 %v5166
    %v5206 = vunpack.c.l.b16 %v5167
    %v5207 = vunpack.c.l.b16 %v5168
    %v5208 = vunpack.c.l.b16 %v5169
    %v5209 = vunpack.c.l.b16 %v5170
    %v5210 = vunpack.c.l.b16 %v5171
    %v5211 = vunpack.c.l.b16 %v5172
    %v5212 = vunpack.c.l.b16 %v5173
    %v5213 = vunpack.c.l.b16 %v5174
    %v5214 = vunpack.c.l.b16 %v5175
    %v5215 = vunpack.c.l.b16 %v5176
    %v5216 = vunpack.c.l.b16 %v5177
    %v5217 = vpack.c.b16 %v5202, %v5201
    %v5218 = vpack.c.b16 %v5204, %v5203
    %v5219 = vpack.c.b16 %v5206, %v5205
    %v5220 = vpack.c.b16 %v5208, %v5207
    %v5221 = vpack.c.b16 %v5210, %v5209
    %v5222 = vpack.c.b16 %v5212, %v5211
    %v5223 = vpack.c.b16 %v5214, %v5213
    %v5224 = vpack.c.b16 %v5216, %v5215
    %5233 = vmatprep.subr.bf16.mxu0 0
    %5234 = vmatpush1.bf16.msra.mxu0 %v5224
    %5235 = vmatprep.subr.bf16.mxu0 0
    %5236 = vmatpush1.bf16.msra.mxu0 %v5223
    %5237 = vmatprep.subr.bf16.mxu0 0
    %5238 = vmatpush1.bf16.msra.mxu0 %v5222
    %5239 = vmatprep.subr.bf16.mxu0 0
    %5240 = vmatpush1.bf16.msra.mxu0 %v5221
    %5241 = vmatprep.subr.bf16.mxu0 0
    %5242 = vmatpush1.bf16.msra.mxu0 %v5220
    %5243 = vmatprep.subr.bf16.mxu0 0
    %5244 = vmatpush1.bf16.msra.mxu0 %v5219
    %5245 = vmatprep.subr.bf16.mxu0 0
    %5246 = vmatpush1.bf16.msra.mxu0 %v5218
    %5247 = vmatprep.subr.bf16.mxu0 0
    %5248 = vmatpush1.bf16.msra.mxu0 %v5217
    %5249 = vmatprep.subr.bf16.mxu0 0
    %5250 = vmatpush2.bf16.msra.mxu0 0
    %5251 = vmatprep.subr.bf16.mxu0 0
    %5252 = vmatpush2.bf16.msra.mxu0 0
    %5253 = vmatprep.subr.bf16.mxu0 0
    %5254 = vmatpush2.bf16.msra.mxu0 0
    %5255 = vmatprep.subr.bf16.mxu0 0
    %5256 = vmatpush2.bf16.msra.mxu0 0
    %5257 = vmatprep.subr.bf16.mxu0 0
    %5258 = vmatpush2.bf16.msra.mxu0 0
    %5259 = vmatprep.subr.bf16.mxu0 0
    %5260 = vmatpush2.bf16.msra.mxu0 0
    %5261 = vmatprep.subr.bf16.mxu0 0
    %5262 = vmatpush2.bf16.msra.mxu0 0
    %5263 = vmatprep.subr.bf16.mxu0 0
    %5264 = vmatpush2.bf16.msra.mxu0 0
    %5265 = vmatprep.mubr.bf16.mxu0 0
    %5266 = vmatmul.mubr.bf16.gmra.mxu0 %v5161
    %v5267 = vpop.f32.mrf.mxu0
    %v5268 = vadd.f32 %v5183, %v5267
    %v5269 = vpop.f32.mrf.mxu0
    %v5270 = vpop.f32.mrf.mxu0
    %v5271 = vpop.f32.mrf.mxu0
    %5272 = vdwg.mxu0
    %5273 = vst [vmem:[#allocation13] sm:$0xff] %v5268
    // Predicated region
    $region62: #{tpu_custom_call.1} parent=1 // pred_check
      _
    $region63: #{tpu_custom_call.1} parent=1 // pred_check_branch
      %5275 = sbr.rel (0) target = $region65
    $region64: #{tpu_custom_call.1} parent=1 // pred_region
      %s5277 = ssub.s32 128, 128
      %5278 = vsyncadd [#allocation4], %s5277
      %s5280 = sshll.u32 [#allocation13], 4
      %s5281 = int_to_ptr.vmem [resolvable:$true] %s5280
      %5283 = dma.vmem_to_hbm [thread:$0]  %s5281, 128, %s9, [#allocation4]
    $region65: #{tpu_custom_call.1} parent=1 // pred_fallthru
      _
    // Predicated region
    $region66: #{tpu_custom_call.1} parent=1 // pred_check
      _
    $region67: #{tpu_custom_call.1} parent=1 // pred_check_branch
      %5285 = sbr.rel (0) target = $region69
    $region68: #{tpu_custom_call.1} parent=1 // pred_region
      %5286 = dma.done [#allocation4], 128
    $region69: #{tpu_custom_call.1} parent=1 // pred_fallthru
      _
    %5287 = vsyncpa [#allocation3], 1
    %5288 = vsyncpa [#allocation6], 1
    %5289 = vsyncpa [#allocation9], 1
    %5290 = vsyncpa [#allocation12], 1
    %5291 = vsyncpa [#allocation4], 1

</llo_original>
